<compile_context>
chip_gen: v7x
topology: tpu7x:2x2x1
jax: 0.10.0
libtpu: 0.0.40
codegen_flags: <defaults>
</compile_context>

<pallas_src>
import jax
import jax.numpy as jnp
from jax.experimental import pallas as pl
from jax.experimental.pallas import tpu as pltpu

hidden_dim = 32
input_dim = 4
num_layers = 2
output_dim = 1

_SUBLANES = 8     # pad batch to a multiple of this
_OUT_PAD = 128    # lane-dense padded width of the FC output


def _lstm_kernel(x_ref,        # (S*Bp, D)      time-major flattened input
                 wih0_ref,     # (D, 4H)        W_ih_l0^T
                 whh0_ref,     # (H, 4H)        W_hh_l0^T
                 b0_ref,       # (1, 4H)        b_ih_l0 + b_hh_l0
                 w1_ref,       # (2H, 4H)       [W_ih_l1^T ; W_hh_l1^T]
                 b1_ref,       # (1, 4H)        b_ih_l1 + b_hh_l1
                 wfc_ref,      # (H, OUT_PAD)   W_fc^T zero-padded on lanes
                 bfc_ref,      # (1, OUT_PAD)
                 out_ref,      # (S*Bp, OUT_PAD)
                 gx_ref,       # scratch (S*Bp, 4H)  precomputed layer-0 x-gates
                 h2all_ref,    # scratch (S*Bp, H)   all layer-1 hidden states
                 h12_ref):     # scratch (Bp, 2H)    [h1 | h2] recurrent state
    H = whh0_ref.shape[0]
    Bp = h12_ref.shape[0]
    S = x_ref.shape[0] // Bp

    # Layer-0 input contribution for EVERY time step in one matmul (K = input_dim).
    gx_ref[...] = (jnp.dot(x_ref[...], wih0_ref[...],
                           preferred_element_type=jnp.float32) + b0_ref[...])

    # Zero initial hidden state for both layers (PyTorch h0 = c0 = 0).
    h12_ref[...] = jnp.zeros_like(h12_ref)
    zeros = jnp.zeros((Bp, H), jnp.float32)

    def gates_to_hc(g, c_prev):
        i = jax.nn.sigmoid(g[:, 0 * H:1 * H])
        f = jax.nn.sigmoid(g[:, 1 * H:2 * H])
        gg = jnp.tanh(g[:, 2 * H:3 * H])
        o = jax.nn.sigmoid(g[:, 3 * H:4 * H])
        c_new = f * c_prev + i * gg
        h_new = o * jnp.tanh(c_new)
        return h_new, c_new

    def step(t, carry):
        c1, c2 = carry
        row = pl.multiple_of(t * Bp, Bp)   # sublane-aligned row block for step t

        # Layer 0: only the h-recurrent matmul is on the critical path.
        g1 = (gx_ref[pl.ds(row, Bp), :]
              + jnp.dot(h12_ref[:, 0:H], whh0_ref[...],
                        preferred_element_type=jnp.float32))
        h1_new, c1_new = gates_to_hc(g1, c1)
        h12_ref[:, 0:H] = h1_new           # h12 now holds [h1_t | h2_{t-1}]

        # Layer 1: single fused dot  [h1_t, h2_{t-1}] @ [W_ih1^T ; W_hh1^T]  (K = 2H).
        g2 = (jnp.dot(h12_ref[...], w1_ref[...],
                      preferred_element_type=jnp.float32) + b1_ref[...])
        h2_new, c2_new = gates_to_hc(g2, c2)
        h12_ref[:, H:2 * H] = h2_new

        h2all_ref[pl.ds(row, Bp), :] = h2_new
        return c1_new, c2_new

    jax.lax.fori_loop(0, S, step, (zeros, zeros), unroll=True)

    # Deferred FC head: ONE matmul over every (step, batch) row, single lane-dense store.
    out_ref[...] = (jnp.dot(h2all_ref[...], wfc_ref[...],
                            preferred_element_type=jnp.float32) + bfc_ref[...])


@jax.jit
def lstm_forward_pallas(x, params):
    """x: (batch, seq, input_dim) float32 -> (batch, seq, output_dim) float32."""
    (w_ih0, w_hh0, b_ih0, b_hh0,
     w_ih1, w_hh1, b_ih1, b_hh1,
     w_fc, b_fc) = params

    B, S, D = x.shape
    H = hidden_dim
    Bp = ((B + _SUBLANES - 1) // _SUBLANES) * _SUBLANES

    # Pad batch to a full sublane tile and flatten time-major: row = t*Bp + b.
    x_pad = jnp.zeros((Bp, S, D), jnp.float32).at[:B].set(x.astype(jnp.float32))
    x_tm = jnp.transpose(x_pad, (1, 0, 2)).reshape(S * Bp, D)

    # One-time weight packing (free at runtime relative to the kernel).
    wih0_t = w_ih0.T                                          # (D, 4H)
    whh0_t = w_hh0.T                                          # (H, 4H)
    b0 = (b_ih0 + b_hh0)[None, :]                             # (1, 4H)
    w1s = jnp.concatenate([w_ih1.T, w_hh1.T], axis=0)         # (2H, 4H)
    b1 = (b_ih1 + b_hh1)[None, :]                             # (1, 4H)
    wfc_pad = jnp.zeros((H, _OUT_PAD), jnp.float32).at[:, :output_dim].set(w_fc.T)
    bfc_pad = jnp.zeros((1, _OUT_PAD), jnp.float32).at[:, :output_dim].set(b_fc[None, :])

    vmem = pl.BlockSpec(memory_space=pltpu.MemorySpace.VMEM)
    out_flat = pl.pallas_call(
        _lstm_kernel,
        out_shape=jax.ShapeDtypeStruct((S * Bp, _OUT_PAD), jnp.float32),
        in_specs=[pl.BlockSpec(memory_space=pltpu.MemorySpace.VMEM) for _ in range(8)],
        out_specs=vmem,
        scratch_shapes=[
            pltpu.VMEM((S * Bp, 4 * H), jnp.float32),   # gx: layer-0 input gates, all steps
            pltpu.VMEM((S * Bp, H), jnp.float32),       # h2 history for the deferred FC
            pltpu.VMEM((Bp, 2 * H), jnp.float32),       # [h1 | h2] recurrent state
        ],
    )(x_tm, wih0_t, whh0_t, b0, w1s, b1, wfc_pad, bfc_pad)

    # Unpack: column 0 is the real FC output; drop batch padding; back to (B, S, 1).
    y = out_flat[:, :output_dim].reshape(S, Bp, output_dim)[:, :B, :]
    return jnp.transpose(y, (1, 0, 2))


def init_params(key):
    """Deterministic params matching nn.LSTM / nn.Linear shapes (PyTorch-style init)."""
    H, D = hidden_dim, input_dim
    k = 1.0 / jnp.sqrt(jnp.float32(H))
    keys = jax.random.split(key, 10)
    u = lambda kk, shape: jax.random.uniform(kk, shape, jnp.float32, -k, k)

    w_ih0 = u(keys[0], (4 * H, D))
    w_hh0 = u(keys[1], (4 * H, H))
    b_ih0 = u(keys[2], (4 * H,))
    b_hh0 = u(keys[3], (4 * H,))
    w_ih1 = u(keys[4], (4 * H, H))
    w_hh1 = u(keys[5], (4 * H, H))
    b_ih1 = u(keys[6], (4 * H,))
    b_hh1 = u(keys[7], (4 * H,))
    w_fc = u(keys[8], (output_dim, H))
    b_fc = u(keys[9], (output_dim,))

    return (w_ih0, w_hh0, b_ih0, b_hh0,
            w_ih1, w_hh1, b_ih1, b_hh1,
            w_fc, b_fc)


def lstm_forward_ref(x, params):
    """Pure-JAX reference (lax.scan) for correctness checking."""
    (w_ih0, w_hh0, b_ih0, b_hh0,
     w_ih1, w_hh1, b_ih1, b_hh1,
     w_fc, b_fc) = params
    B = x.shape[0]
    H = hidden_dim

    def cell(x_in, h, c, w_ih, w_hh, b_ih, b_hh):
        g = x_in @ w_ih.T + h @ w_hh.T + b_ih + b_hh
        i = jax.nn.sigmoid(g[:, 0 * H:1 * H])
        f = jax.nn.sigmoid(g[:, 1 * H:2 * H])
        gg = jnp.tanh(g[:, 2 * H:3 * H])
        o = jax.nn.sigmoid(g[:, 3 * H:4 * H])
        c_new = f * c + i * gg
        h_new = o * jnp.tanh(c_new)
        return h_new, c_new

    def step(carry, x_t):
        h1, c1, h2, c2 = carry
        h1, c1 = cell(x_t, h1, c1, w_ih0, w_hh0, b_ih0, b_hh0)
        h2, c2 = cell(h1, h2, c2, w_ih1, w_hh1, b_ih1, b_hh1)
        y = h2 @ w_fc.T + b_fc
        return (h1, c1, h2, c2), y

    z = jnp.zeros((B, H), jnp.float32)
    _, ys = jax.lax.scan(step, (z, z, z, z), jnp.transpose(x, (1, 0, 2)))
    return jnp.transpose(ys, (1, 0, 2))


if __name__ == "__main__":
    key = jax.random.PRNGKey(0)
    k_param, k_x = jax.random.split(key)

    batch, seq = 2, 8
    x = jax.random.normal(k_x, (batch, seq, input_dim), jnp.float32)
    params = init_params(k_param)

    out = jax.block_until_ready(lstm_forward_pallas(x, params))
    ref = jax.block_until_ready(lstm_forward_ref(x, params))

    assert out.shape == (batch, seq, output_dim), out.shape
    assert jnp.allclose(out, ref, rtol=1e-4, atol=1e-4), float(jnp.max(jnp.abs(out - ref)))

    print("KERNEL_OK")
</pallas_src>

<mosaic_0001>
module attributes {stable_mosaic.version = 11 : i64} {
  func.func @_lstm_kernel(%arg0: memref<64x4xf32, #tpu.memory_space<vmem>>, %arg1: memref<4x128xf32, #tpu.memory_space<vmem>>, %arg2: memref<32x128xf32, #tpu.memory_space<vmem>>, %arg3: memref<1x128xf32, #tpu.memory_space<vmem>>, %arg4: memref<64x128xf32, #tpu.memory_space<vmem>>, %arg5: memref<1x128xf32, #tpu.memory_space<vmem>>, %arg6: memref<32x128xf32, #tpu.memory_space<vmem>>, %arg7: memref<1x128xf32, #tpu.memory_space<vmem>>, %arg8: memref<64x128xf32, #tpu.memory_space<vmem>>, %arg9: memref<64x128xf32, #tpu.memory_space<vmem>>, %arg10: memref<64x32xf32, #tpu.memory_space<vmem>>, %arg11: memref<8x64xf32, #tpu.memory_space<vmem>>) attributes {dimension_semantics = [], scalar_prefetch = 0 : i64, scratch_operands = 3 : i64, tpu.core_type = #tpu.core_type<tc>} {
    %c0 = arith.constant 0 : index
    %c0_0 = arith.constant 0 : index
    %0 = vector.load %arg0[%c0, %c0_0] : memref<64x4xf32, #tpu.memory_space<vmem>>, vector<64x4xf32>
    %c0_1 = arith.constant 0 : index
    %c0_2 = arith.constant 0 : index
    %1 = vector.load %arg1[%c0_1, %c0_2] : memref<4x128xf32, #tpu.memory_space<vmem>>, vector<4x128xf32>
    %cst = arith.constant dense<0.000000e+00> : vector<64x128xf32>
    %2 = tpu.matmul %0, %1, %cst {dimension_numbers = #tpu.dot_dimension_numbers<[1], [0], [0], [1], [0, 0, 1, 1], [], []>} : vector<64x4xf32>, vector<4x128xf32>, vector<64x128xf32> -> vector<64x128xf32>
    %c0_3 = arith.constant 0 : index
    %c0_4 = arith.constant 0 : index
    %3 = vector.load %arg3[%c0_3, %c0_4] : memref<1x128xf32, #tpu.memory_space<vmem>>, vector<1x128xf32>
    %4 = vector.broadcast %3 : vector<1x128xf32> to vector<64x128xf32>
    %5 = arith.addf %2, %4 : vector<64x128xf32>
    %c0_5 = arith.constant 0 : index
    %c0_6 = arith.constant 0 : index
    %6 = vector.load %arg9[%c0_5, %c0_6] : memref<64x128xf32, #tpu.memory_space<vmem>>, vector<64x128xf32>
    tpu.vector_store %arg9[%c0_5, %c0_6], %5 {strides = array<i32>} : memref<64x128xf32, #tpu.memory_space<vmem>>, vector<64x128xf32>,
    %cst_7 = arith.constant 0.000000e+00 : f32
    %7 = vector.broadcast %cst_7 : f32 to vector<8x64xf32>
    %c0_8 = arith.constant 0 : index
    %c0_9 = arith.constant 0 : index
    %8 = vector.load %arg11[%c0_8, %c0_9] : memref<8x64xf32, #tpu.memory_space<vmem>>, vector<8x64xf32>
    tpu.vector_store %arg11[%c0_8, %c0_9], %7 {strides = array<i32>} : memref<8x64xf32, #tpu.memory_space<vmem>>, vector<8x64xf32>,
    %cst_10 = arith.constant 0.000000e+00 : f32
    %9 = vector.broadcast %cst_10 : f32 to vector<8x32xf32>
    %c0_i32 = arith.constant 0 : i32
    %c8_i32 = arith.constant 8 : i32
    %10 = arith.muli %c0_i32, %c8_i32 : i32
    %11 = tpu.assume_multiple %10, 8 : i32
    %12 = arith.index_cast %11 : i32 to index
    %c0_11 = arith.constant 0 : index
    %13 = vector.load %arg9[%12, %c0_11] : memref<64x128xf32, #tpu.memory_space<vmem>>, vector<8x128xf32>
    %c0_12 = arith.constant 0 : index
    %c0_13 = arith.constant 0 : index
    %14 = vector.load %arg11[%c0_12, %c0_13] : memref<8x64xf32, #tpu.memory_space<vmem>>, vector<8x32xf32>
    %c0_14 = arith.constant 0 : index
    %c0_15 = arith.constant 0 : index
    %15 = vector.load %arg2[%c0_14, %c0_15] : memref<32x128xf32, #tpu.memory_space<vmem>>, vector<32x128xf32>
    %cst_16 = arith.constant dense<0.000000e+00> : vector<8x128xf32>
    %16 = tpu.matmul %14, %15, %cst_16 {dimension_numbers = #tpu.dot_dimension_numbers<[1], [0], [0], [1], [0, 0, 1, 1], [], []>} : vector<8x32xf32>, vector<32x128xf32>, vector<8x128xf32> -> vector<8x128xf32>
    %17 = arith.addf %13, %16 : vector<8x128xf32>
    %18 = vector.extract_strided_slice %17 {offsets = [0, 0], sizes = [8, 32], strides = [1, 1]} : vector<8x128xf32> to vector<8x32xf32>
    %19 = arith.negf %18 : vector<8x32xf32>
    %20 = math.exp %19 : vector<8x32xf32>
    %cst_17 = arith.constant 1.000000e+00 : f32
    %21 = vector.broadcast %cst_17 : f32 to vector<8x32xf32>
    %22 = arith.addf %21, %20 : vector<8x32xf32>
    %23 = arith.divf %21, %22 : vector<8x32xf32>
    %24 = vector.extract_strided_slice %17 {offsets = [0, 32], sizes = [8, 32], strides = [1, 1]} : vector<8x128xf32> to vector<8x32xf32>
    %25 = arith.negf %24 : vector<8x32xf32>
    %26 = math.exp %25 : vector<8x32xf32>
    %cst_18 = arith.constant 1.000000e+00 : f32
    %27 = vector.broadcast %cst_18 : f32 to vector<8x32xf32>
    %28 = arith.addf %27, %26 : vector<8x32xf32>
    %29 = arith.divf %27, %28 : vector<8x32xf32>
    %30 = vector.extract_strided_slice %17 {offsets = [0, 64], sizes = [8, 32], strides = [1, 1]} : vector<8x128xf32> to vector<8x32xf32>
    %31 = math.tanh %30 : vector<8x32xf32>
    %32 = vector.extract_strided_slice %17 {offsets = [0, 96], sizes = [8, 32], strides = [1, 1]} : vector<8x128xf32> to vector<8x32xf32>
    %33 = arith.negf %32 : vector<8x32xf32>
    %34 = math.exp %33 : vector<8x32xf32>
    %cst_19 = arith.constant 1.000000e+00 : f32
    %35 = vector.broadcast %cst_19 : f32 to vector<8x32xf32>
    %36 = arith.addf %35, %34 : vector<8x32xf32>
    %37 = arith.divf %35, %36 : vector<8x32xf32>
    %38 = arith.mulf %29, %9 : vector<8x32xf32>
    %39 = arith.mulf %23, %31 : vector<8x32xf32>
    %40 = arith.addf %38, %39 : vector<8x32xf32>
    %41 = math.tanh %40 : vector<8x32xf32>
    %42 = arith.mulf %37, %41 : vector<8x32xf32>
    %c0_20 = arith.constant 0 : index
    %c0_21 = arith.constant 0 : index
    %43 = vector.load %arg11[%c0_20, %c0_21] : memref<8x64xf32, #tpu.memory_space<vmem>>, vector<8x32xf32>
    tpu.vector_store %arg11[%c0_20, %c0_21], %42 {strides = array<i32>} : memref<8x64xf32, #tpu.memory_space<vmem>>, vector<8x32xf32>,
    %c0_22 = arith.constant 0 : index
    %c0_23 = arith.constant 0 : index
    %44 = vector.load %arg11[%c0_22, %c0_23] : memref<8x64xf32, #tpu.memory_space<vmem>>, vector<8x64xf32>
    %c0_24 = arith.constant 0 : index
    %c0_25 = arith.constant 0 : index
    %45 = vector.load %arg4[%c0_24, %c0_25] : memref<64x128xf32, #tpu.memory_space<vmem>>, vector<64x128xf32>
    %cst_26 = arith.constant dense<0.000000e+00> : vector<8x128xf32>
    %46 = tpu.matmul %44, %45, %cst_26 {dimension_numbers = #tpu.dot_dimension_numbers<[1], [0], [0], [1], [0, 0, 1, 1], [], []>} : vector<8x64xf32>, vector<64x128xf32>, vector<8x128xf32> -> vector<8x128xf32>
    %c0_27 = arith.constant 0 : index
    %c0_28 = arith.constant 0 : index
    %47 = vector.load %arg5[%c0_27, %c0_28] : memref<1x128xf32, #tpu.memory_space<vmem>>, vector<1x128xf32>
    %48 = vector.broadcast %47 : vector<1x128xf32> to vector<8x128xf32>
    %49 = arith.addf %46, %48 : vector<8x128xf32>
    %50 = vector.extract_strided_slice %49 {offsets = [0, 0], sizes = [8, 32], strides = [1, 1]} : vector<8x128xf32> to vector<8x32xf32>
    %51 = arith.negf %50 : vector<8x32xf32>
    %52 = math.exp %51 : vector<8x32xf32>
    %cst_29 = arith.constant 1.000000e+00 : f32
    %53 = vector.broadcast %cst_29 : f32 to vector<8x32xf32>
    %54 = arith.addf %53, %52 : vector<8x32xf32>
    %55 = arith.divf %53, %54 : vector<8x32xf32>
    %56 = vector.extract_strided_slice %49 {offsets = [0, 32], sizes = [8, 32], strides = [1, 1]} : vector<8x128xf32> to vector<8x32xf32>
    %57 = arith.negf %56 : vector<8x32xf32>
    %58 = math.exp %57 : vector<8x32xf32>
    %cst_30 = arith.constant 1.000000e+00 : f32
    %59 = vector.broadcast %cst_30 : f32 to vector<8x32xf32>
    %60 = arith.addf %59, %58 : vector<8x32xf32>
    %61 = arith.divf %59, %60 : vector<8x32xf32>
    %62 = vector.extract_strided_slice %49 {offsets = [0, 64], sizes = [8, 32], strides = [1, 1]} : vector<8x128xf32> to vector<8x32xf32>
    %63 = math.tanh %62 : vector<8x32xf32>
    %64 = vector.extract_strided_slice %49 {offsets = [0, 96], sizes = [8, 32], strides = [1, 1]} : vector<8x128xf32> to vector<8x32xf32>
    %65 = arith.negf %64 : vector<8x32xf32>
    %66 = math.exp %65 : vector<8x32xf32>
    %cst_31 = arith.constant 1.000000e+00 : f32
    %67 = vector.broadcast %cst_31 : f32 to vector<8x32xf32>
    %68 = arith.addf %67, %66 : vector<8x32xf32>
    %69 = arith.divf %67, %68 : vector<8x32xf32>
    %70 = arith.mulf %61, %9 : vector<8x32xf32>
    %71 = arith.mulf %55, %63 : vector<8x32xf32>
    %72 = arith.addf %70, %71 : vector<8x32xf32>
    %73 = math.tanh %72 : vector<8x32xf32>
    %74 = arith.mulf %69, %73 : vector<8x32xf32>
    %c0_32 = arith.constant 0 : index
    %c32 = arith.constant 32 : index
    %75 = vector.load %arg11[%c0_32, %c32] : memref<8x64xf32, #tpu.memory_space<vmem>>, vector<8x32xf32>
    tpu.vector_store %arg11[%c0_32, %c32], %74 {strides = array<i32>} : memref<8x64xf32, #tpu.memory_space<vmem>>, vector<8x32xf32>,
    %76 = arith.index_cast %11 : i32 to index
    %c0_33 = arith.constant 0 : index
    %77 = vector.load %arg10[%76, %c0_33] : memref<64x32xf32, #tpu.memory_space<vmem>>, vector<8x32xf32>
    tpu.vector_store %arg10[%76, %c0_33], %74 {strides = array<i32>} : memref<64x32xf32, #tpu.memory_space<vmem>>, vector<8x32xf32>,
    %c1_i32 = arith.constant 1 : i32
    %c8_i32_34 = arith.constant 8 : i32
    %78 = arith.muli %c1_i32, %c8_i32_34 : i32
    %79 = tpu.assume_multiple %78, 8 : i32
    %80 = arith.index_cast %79 : i32 to index
    %c0_35 = arith.constant 0 : index
    %81 = vector.load %arg9[%80, %c0_35] : memref<64x128xf32, #tpu.memory_space<vmem>>, vector<8x128xf32>
    %c0_36 = arith.constant 0 : index
    %c0_37 = arith.constant 0 : index
    %82 = vector.load %arg11[%c0_36, %c0_37] : memref<8x64xf32, #tpu.memory_space<vmem>>, vector<8x32xf32>
    %c0_38 = arith.constant 0 : index
    %c0_39 = arith.constant 0 : index
    %83 = vector.load %arg2[%c0_38, %c0_39] : memref<32x128xf32, #tpu.memory_space<vmem>>, vector<32x128xf32>
    %cst_40 = arith.constant dense<0.000000e+00> : vector<8x128xf32>
    %84 = tpu.matmul %82, %83, %cst_40 {dimension_numbers = #tpu.dot_dimension_numbers<[1], [0], [0], [1], [0, 0, 1, 1], [], []>} : vector<8x32xf32>, vector<32x128xf32>, vector<8x128xf32> -> vector<8x128xf32>
    %85 = arith.addf %81, %84 : vector<8x128xf32>
    %86 = vector.extract_strided_slice %85 {offsets = [0, 0], sizes = [8, 32], strides = [1, 1]} : vector<8x128xf32> to vector<8x32xf32>
    %87 = arith.negf %86 : vector<8x32xf32>
    %88 = math.exp %87 : vector<8x32xf32>
    %cst_41 = arith.constant 1.000000e+00 : f32
    %89 = vector.broadcast %cst_41 : f32 to vector<8x32xf32>
    %90 = arith.addf %89, %88 : vector<8x32xf32>
    %91 = arith.divf %89, %90 : vector<8x32xf32>
    %92 = vector.extract_strided_slice %85 {offsets = [0, 32], sizes = [8, 32], strides = [1, 1]} : vector<8x128xf32> to vector<8x32xf32>
    %93 = arith.negf %92 : vector<8x32xf32>
    %94 = math.exp %93 : vector<8x32xf32>
    %cst_42 = arith.constant 1.000000e+00 : f32
    %95 = vector.broadcast %cst_42 : f32 to vector<8x32xf32>
    %96 = arith.addf %95, %94 : vector<8x32xf32>
    %97 = arith.divf %95, %96 : vector<8x32xf32>
    %98 = vector.extract_strided_slice %85 {offsets = [0, 64], sizes = [8, 32], strides = [1, 1]} : vector<8x128xf32> to vector<8x32xf32>
    %99 = math.tanh %98 : vector<8x32xf32>
    %100 = vector.extract_strided_slice %85 {offsets = [0, 96], sizes = [8, 32], strides = [1, 1]} : vector<8x128xf32> to vector<8x32xf32>
    %101 = arith.negf %100 : vector<8x32xf32>
    %102 = math.exp %101 : vector<8x32xf32>
    %cst_43 = arith.constant 1.000000e+00 : f32
    %103 = vector.broadcast %cst_43 : f32 to vector<8x32xf32>
    %104 = arith.addf %103, %102 : vector<8x32xf32>
    %105 = arith.divf %103, %104 : vector<8x32xf32>
    %106 = arith.mulf %97, %40 : vector<8x32xf32>
    %107 = arith.mulf %91, %99 : vector<8x32xf32>
    %108 = arith.addf %106, %107 : vector<8x32xf32>
    %109 = math.tanh %108 : vector<8x32xf32>
    %110 = arith.mulf %105, %109 : vector<8x32xf32>
    %c0_44 = arith.constant 0 : index
    %c0_45 = arith.constant 0 : index
    %111 = vector.load %arg11[%c0_44, %c0_45] : memref<8x64xf32, #tpu.memory_space<vmem>>, vector<8x32xf32>
    tpu.vector_store %arg11[%c0_44, %c0_45], %110 {strides = array<i32>} : memref<8x64xf32, #tpu.memory_space<vmem>>, vector<8x32xf32>,
    %c0_46 = arith.constant 0 : index
    %c0_47 = arith.constant 0 : index
    %112 = vector.load %arg11[%c0_46, %c0_47] : memref<8x64xf32, #tpu.memory_space<vmem>>, vector<8x64xf32>
    %c0_48 = arith.constant 0 : index
    %c0_49 = arith.constant 0 : index
    %113 = vector.load %arg4[%c0_48, %c0_49] : memref<64x128xf32, #tpu.memory_space<vmem>>, vector<64x128xf32>
    %cst_50 = arith.constant dense<0.000000e+00> : vector<8x128xf32>
    %114 = tpu.matmul %112, %113, %cst_50 {dimension_numbers = #tpu.dot_dimension_numbers<[1], [0], [0], [1], [0, 0, 1, 1], [], []>} : vector<8x64xf32>, vector<64x128xf32>, vector<8x128xf32> -> vector<8x128xf32>
    %c0_51 = arith.constant 0 : index
    %c0_52 = arith.constant 0 : index
    %115 = vector.load %arg5[%c0_51, %c0_52] : memref<1x128xf32, #tpu.memory_space<vmem>>, vector<1x128xf32>
    %116 = vector.broadcast %115 : vector<1x128xf32> to vector<8x128xf32>
    %117 = arith.addf %114, %116 : vector<8x128xf32>
    %118 = vector.extract_strided_slice %117 {offsets = [0, 0], sizes = [8, 32], strides = [1, 1]} : vector<8x128xf32> to vector<8x32xf32>
    %119 = arith.negf %118 : vector<8x32xf32>
    %120 = math.exp %119 : vector<8x32xf32>
    %cst_53 = arith.constant 1.000000e+00 : f32
    %121 = vector.broadcast %cst_53 : f32 to vector<8x32xf32>
    %122 = arith.addf %121, %120 : vector<8x32xf32>
    %123 = arith.divf %121, %122 : vector<8x32xf32>
    %124 = vector.extract_strided_slice %117 {offsets = [0, 32], sizes = [8, 32], strides = [1, 1]} : vector<8x128xf32> to vector<8x32xf32>
    %125 = arith.negf %124 : vector<8x32xf32>
    %126 = math.exp %125 : vector<8x32xf32>
    %cst_54 = arith.constant 1.000000e+00 : f32
    %127 = vector.broadcast %cst_54 : f32 to vector<8x32xf32>
    %128 = arith.addf %127, %126 : vector<8x32xf32>
    %129 = arith.divf %127, %128 : vector<8x32xf32>
    %130 = vector.extract_strided_slice %117 {offsets = [0, 64], sizes = [8, 32], strides = [1, 1]} : vector<8x128xf32> to vector<8x32xf32>
    %131 = math.tanh %130 : vector<8x32xf32>
    %132 = vector.extract_strided_slice %117 {offsets = [0, 96], sizes = [8, 32], strides = [1, 1]} : vector<8x128xf32> to vector<8x32xf32>
    %133 = arith.negf %132 : vector<8x32xf32>
    %134 = math.exp %133 : vector<8x32xf32>
    %cst_55 = arith.constant 1.000000e+00 : f32
    %135 = vector.broadcast %cst_55 : f32 to vector<8x32xf32>
    %136 = arith.addf %135, %134 : vector<8x32xf32>
    %137 = arith.divf %135, %136 : vector<8x32xf32>
    %138 = arith.mulf %129, %72 : vector<8x32xf32>
    %139 = arith.mulf %123, %131 : vector<8x32xf32>
    %140 = arith.addf %138, %139 : vector<8x32xf32>
    %141 = math.tanh %140 : vector<8x32xf32>
    %142 = arith.mulf %137, %141 : vector<8x32xf32>
    %c0_56 = arith.constant 0 : index
    %c32_57 = arith.constant 32 : index
    %143 = vector.load %arg11[%c0_56, %c32_57] : memref<8x64xf32, #tpu.memory_space<vmem>>, vector<8x32xf32>
    tpu.vector_store %arg11[%c0_56, %c32_57], %142 {strides = array<i32>} : memref<8x64xf32, #tpu.memory_space<vmem>>, vector<8x32xf32>,
    %144 = arith.index_cast %79 : i32 to index
    %c0_58 = arith.constant 0 : index
    %145 = vector.load %arg10[%144, %c0_58] : memref<64x32xf32, #tpu.memory_space<vmem>>, vector<8x32xf32>
    tpu.vector_store %arg10[%144, %c0_58], %142 {strides = array<i32>} : memref<64x32xf32, #tpu.memory_space<vmem>>, vector<8x32xf32>,
    %c2_i32 = arith.constant 2 : i32
    %c8_i32_59 = arith.constant 8 : i32
    %146 = arith.muli %c2_i32, %c8_i32_59 : i32
    %147 = tpu.assume_multiple %146, 8 : i32
    %148 = arith.index_cast %147 : i32 to index
    %c0_60 = arith.constant 0 : index
    %149 = vector.load %arg9[%148, %c0_60] : memref<64x128xf32, #tpu.memory_space<vmem>>, vector<8x128xf32>
    %c0_61 = arith.constant 0 : index
    %c0_62 = arith.constant 0 : index
    %150 = vector.load %arg11[%c0_61, %c0_62] : memref<8x64xf32, #tpu.memory_space<vmem>>, vector<8x32xf32>
    %c0_63 = arith.constant 0 : index
    %c0_64 = arith.constant 0 : index
    %151 = vector.load %arg2[%c0_63, %c0_64] : memref<32x128xf32, #tpu.memory_space<vmem>>, vector<32x128xf32>
    %cst_65 = arith.constant dense<0.000000e+00> : vector<8x128xf32>
    %152 = tpu.matmul %150, %151, %cst_65 {dimension_numbers = #tpu.dot_dimension_numbers<[1], [0], [0], [1], [0, 0, 1, 1], [], []>} : vector<8x32xf32>, vector<32x128xf32>, vector<8x128xf32> -> vector<8x128xf32>
    %153 = arith.addf %149, %152 : vector<8x128xf32>
    %154 = vector.extract_strided_slice %153 {offsets = [0, 0], sizes = [8, 32], strides = [1, 1]} : vector<8x128xf32> to vector<8x32xf32>
    %155 = arith.negf %154 : vector<8x32xf32>
    %156 = math.exp %155 : vector<8x32xf32>
    %cst_66 = arith.constant 1.000000e+00 : f32
    %157 = vector.broadcast %cst_66 : f32 to vector<8x32xf32>
    %158 = arith.addf %157, %156 : vector<8x32xf32>
    %159 = arith.divf %157, %158 : vector<8x32xf32>
    %160 = vector.extract_strided_slice %153 {offsets = [0, 32], sizes = [8, 32], strides = [1, 1]} : vector<8x128xf32> to vector<8x32xf32>
    %161 = arith.negf %160 : vector<8x32xf32>
    %162 = math.exp %161 : vector<8x32xf32>
    %cst_67 = arith.constant 1.000000e+00 : f32
    %163 = vector.broadcast %cst_67 : f32 to vector<8x32xf32>
    %164 = arith.addf %163, %162 : vector<8x32xf32>
    %165 = arith.divf %163, %164 : vector<8x32xf32>
    %166 = vector.extract_strided_slice %153 {offsets = [0, 64], sizes = [8, 32], strides = [1, 1]} : vector<8x128xf32> to vector<8x32xf32>
    %167 = math.tanh %166 : vector<8x32xf32>
    %168 = vector.extract_strided_slice %153 {offsets = [0, 96], sizes = [8, 32], strides = [1, 1]} : vector<8x128xf32> to vector<8x32xf32>
    %169 = arith.negf %168 : vector<8x32xf32>
    %170 = math.exp %169 : vector<8x32xf32>
    %cst_68 = arith.constant 1.000000e+00 : f32
    %171 = vector.broadcast %cst_68 : f32 to vector<8x32xf32>
    %172 = arith.addf %171, %170 : vector<8x32xf32>
    %173 = arith.divf %171, %172 : vector<8x32xf32>
    %174 = arith.mulf %165, %108 : vector<8x32xf32>
    %175 = arith.mulf %159, %167 : vector<8x32xf32>
    %176 = arith.addf %174, %175 : vector<8x32xf32>
    %177 = math.tanh %176 : vector<8x32xf32>
    %178 = arith.mulf %173, %177 : vector<8x32xf32>
    %c0_69 = arith.constant 0 : index
    %c0_70 = arith.constant 0 : index
    %179 = vector.load %arg11[%c0_69, %c0_70] : memref<8x64xf32, #tpu.memory_space<vmem>>, vector<8x32xf32>
    tpu.vector_store %arg11[%c0_69, %c0_70], %178 {strides = array<i32>} : memref<8x64xf32, #tpu.memory_space<vmem>>, vector<8x32xf32>,
    %c0_71 = arith.constant 0 : index
    %c0_72 = arith.constant 0 : index
    %180 = vector.load %arg11[%c0_71, %c0_72] : memref<8x64xf32, #tpu.memory_space<vmem>>, vector<8x64xf32>
    %c0_73 = arith.constant 0 : index
    %c0_74 = arith.constant 0 : index
    %181 = vector.load %arg4[%c0_73, %c0_74] : memref<64x128xf32, #tpu.memory_space<vmem>>, vector<64x128xf32>
    %cst_75 = arith.constant dense<0.000000e+00> : vector<8x128xf32>
    %182 = tpu.matmul %180, %181, %cst_75 {dimension_numbers = #tpu.dot_dimension_numbers<[1], [0], [0], [1], [0, 0, 1, 1], [], []>} : vector<8x64xf32>, vector<64x128xf32>, vector<8x128xf32> -> vector<8x128xf32>
    %c0_76 = arith.constant 0 : index
    %c0_77 = arith.constant 0 : index
    %183 = vector.load %arg5[%c0_76, %c0_77] : memref<1x128xf32, #tpu.memory_space<vmem>>, vector<1x128xf32>
    %184 = vector.broadcast %183 : vector<1x128xf32> to vector<8x128xf32>
    %185 = arith.addf %182, %184 : vector<8x128xf32>
    %186 = vector.extract_strided_slice %185 {offsets = [0, 0], sizes = [8, 32], strides = [1, 1]} : vector<8x128xf32> to vector<8x32xf32>
    %187 = arith.negf %186 : vector<8x32xf32>
    %188 = math.exp %187 : vector<8x32xf32>
    %cst_78 = arith.constant 1.000000e+00 : f32
    %189 = vector.broadcast %cst_78 : f32 to vector<8x32xf32>
    %190 = arith.addf %189, %188 : vector<8x32xf32>
    %191 = arith.divf %189, %190 : vector<8x32xf32>
    %192 = vector.extract_strided_slice %185 {offsets = [0, 32], sizes = [8, 32], strides = [1, 1]} : vector<8x128xf32> to vector<8x32xf32>
    %193 = arith.negf %192 : vector<8x32xf32>
    %194 = math.exp %193 : vector<8x32xf32>
    %cst_79 = arith.constant 1.000000e+00 : f32
    %195 = vector.broadcast %cst_79 : f32 to vector<8x32xf32>
    %196 = arith.addf %195, %194 : vector<8x32xf32>
    %197 = arith.divf %195, %196 : vector<8x32xf32>
    %198 = vector.extract_strided_slice %185 {offsets = [0, 64], sizes = [8, 32], strides = [1, 1]} : vector<8x128xf32> to vector<8x32xf32>
    %199 = math.tanh %198 : vector<8x32xf32>
    %200 = vector.extract_strided_slice %185 {offsets = [0, 96], sizes = [8, 32], strides = [1, 1]} : vector<8x128xf32> to vector<8x32xf32>
    %201 = arith.negf %200 : vector<8x32xf32>
    %202 = math.exp %201 : vector<8x32xf32>
    %cst_80 = arith.constant 1.000000e+00 : f32
    %203 = vector.broadcast %cst_80 : f32 to vector<8x32xf32>
    %204 = arith.addf %203, %202 : vector<8x32xf32>
    %205 = arith.divf %203, %204 : vector<8x32xf32>
    %206 = arith.mulf %197, %140 : vector<8x32xf32>
    %207 = arith.mulf %191, %199 : vector<8x32xf32>
    %208 = arith.addf %206, %207 : vector<8x32xf32>
    %209 = math.tanh %208 : vector<8x32xf32>
    %210 = arith.mulf %205, %209 : vector<8x32xf32>
    %c0_81 = arith.constant 0 : index
    %c32_82 = arith.constant 32 : index
    %211 = vector.load %arg11[%c0_81, %c32_82] : memref<8x64xf32, #tpu.memory_space<vmem>>, vector<8x32xf32>
    tpu.vector_store %arg11[%c0_81, %c32_82], %210 {strides = array<i32>} : memref<8x64xf32, #tpu.memory_space<vmem>>, vector<8x32xf32>,
    %212 = arith.index_cast %147 : i32 to index
    %c0_83 = arith.constant 0 : index
    %213 = vector.load %arg10[%212, %c0_83] : memref<64x32xf32, #tpu.memory_space<vmem>>, vector<8x32xf32>
    tpu.vector_store %arg10[%212, %c0_83], %210 {strides = array<i32>} : memref<64x32xf32, #tpu.memory_space<vmem>>, vector<8x32xf32>,
    %c3_i32 = arith.constant 3 : i32
    %c8_i32_84 = arith.constant 8 : i32
    %214 = arith.muli %c3_i32, %c8_i32_84 : i32
    %215 = tpu.assume_multiple %214, 8 : i32
    %216 = arith.index_cast %215 : i32 to index
    %c0_85 = arith.constant 0 : index
    %217 = vector.load %arg9[%216, %c0_85] : memref<64x128xf32, #tpu.memory_space<vmem>>, vector<8x128xf32>
    %c0_86 = arith.constant 0 : index
    %c0_87 = arith.constant 0 : index
    %218 = vector.load %arg11[%c0_86, %c0_87] : memref<8x64xf32, #tpu.memory_space<vmem>>, vector<8x32xf32>
    %c0_88 = arith.constant 0 : index
    %c0_89 = arith.constant 0 : index
    %219 = vector.load %arg2[%c0_88, %c0_89] : memref<32x128xf32, #tpu.memory_space<vmem>>, vector<32x128xf32>
    %cst_90 = arith.constant dense<0.000000e+00> : vector<8x128xf32>
    %220 = tpu.matmul %218, %219, %cst_90 {dimension_numbers = #tpu.dot_dimension_numbers<[1], [0], [0], [1], [0, 0, 1, 1], [], []>} : vector<8x32xf32>, vector<32x128xf32>, vector<8x128xf32> -> vector<8x128xf32>
    %221 = arith.addf %217, %220 : vector<8x128xf32>
    %222 = vector.extract_strided_slice %221 {offsets = [0, 0], sizes = [8, 32], strides = [1, 1]} : vector<8x128xf32> to vector<8x32xf32>
    %223 = arith.negf %222 : vector<8x32xf32>
    %224 = math.exp %223 : vector<8x32xf32>
    %cst_91 = arith.constant 1.000000e+00 : f32
    %225 = vector.broadcast %cst_91 : f32 to vector<8x32xf32>
    %226 = arith.addf %225, %224 : vector<8x32xf32>
    %227 = arith.divf %225, %226 : vector<8x32xf32>
    %228 = vector.extract_strided_slice %221 {offsets = [0, 32], sizes = [8, 32], strides = [1, 1]} : vector<8x128xf32> to vector<8x32xf32>
    %229 = arith.negf %228 : vector<8x32xf32>
    %230 = math.exp %229 : vector<8x32xf32>
    %cst_92 = arith.constant 1.000000e+00 : f32
    %231 = vector.broadcast %cst_92 : f32 to vector<8x32xf32>
    %232 = arith.addf %231, %230 : vector<8x32xf32>
    %233 = arith.divf %231, %232 : vector<8x32xf32>
    %234 = vector.extract_strided_slice %221 {offsets = [0, 64], sizes = [8, 32], strides = [1, 1]} : vector<8x128xf32> to vector<8x32xf32>
    %235 = math.tanh %234 : vector<8x32xf32>
    %236 = vector.extract_strided_slice %221 {offsets = [0, 96], sizes = [8, 32], strides = [1, 1]} : vector<8x128xf32> to vector<8x32xf32>
    %237 = arith.negf %236 : vector<8x32xf32>
    %238 = math.exp %237 : vector<8x32xf32>
    %cst_93 = arith.constant 1.000000e+00 : f32
    %239 = vector.broadcast %cst_93 : f32 to vector<8x32xf32>
    %240 = arith.addf %239, %238 : vector<8x32xf32>
    %241 = arith.divf %239, %240 : vector<8x32xf32>
    %242 = arith.mulf %233, %176 : vector<8x32xf32>
    %243 = arith.mulf %227, %235 : vector<8x32xf32>
    %244 = arith.addf %242, %243 : vector<8x32xf32>
    %245 = math.tanh %244 : vector<8x32xf32>
    %246 = arith.mulf %241, %245 : vector<8x32xf32>
    %c0_94 = arith.constant 0 : index
    %c0_95 = arith.constant 0 : index
    %247 = vector.load %arg11[%c0_94, %c0_95] : memref<8x64xf32, #tpu.memory_space<vmem>>, vector<8x32xf32>
    tpu.vector_store %arg11[%c0_94, %c0_95], %246 {strides = array<i32>} : memref<8x64xf32, #tpu.memory_space<vmem>>, vector<8x32xf32>,
    %c0_96 = arith.constant 0 : index
    %c0_97 = arith.constant 0 : index
    %248 = vector.load %arg11[%c0_96, %c0_97] : memref<8x64xf32, #tpu.memory_space<vmem>>, vector<8x64xf32>
    %c0_98 = arith.constant 0 : index
    %c0_99 = arith.constant 0 : index
    %249 = vector.load %arg4[%c0_98, %c0_99] : memref<64x128xf32, #tpu.memory_space<vmem>>, vector<64x128xf32>
    %cst_100 = arith.constant dense<0.000000e+00> : vector<8x128xf32>
    %250 = tpu.matmul %248, %249, %cst_100 {dimension_numbers = #tpu.dot_dimension_numbers<[1], [0], [0], [1], [0, 0, 1, 1], [], []>} : vector<8x64xf32>, vector<64x128xf32>, vector<8x128xf32> -> vector<8x128xf32>
    %c0_101 = arith.constant 0 : index
    %c0_102 = arith.constant 0 : index
    %251 = vector.load %arg5[%c0_101, %c0_102] : memref<1x128xf32, #tpu.memory_space<vmem>>, vector<1x128xf32>
    %252 = vector.broadcast %251 : vector<1x128xf32> to vector<8x128xf32>
    %253 = arith.addf %250, %252 : vector<8x128xf32>
    %254 = vector.extract_strided_slice %253 {offsets = [0, 0], sizes = [8, 32], strides = [1, 1]} : vector<8x128xf32> to vector<8x32xf32>
    %255 = arith.negf %254 : vector<8x32xf32>
    %256 = math.exp %255 : vector<8x32xf32>
    %cst_103 = arith.constant 1.000000e+00 : f32
    %257 = vector.broadcast %cst_103 : f32 to vector<8x32xf32>
    %258 = arith.addf %257, %256 : vector<8x32xf32>
    %259 = arith.divf %257, %258 : vector<8x32xf32>
    %260 = vector.extract_strided_slice %253 {offsets = [0, 32], sizes = [8, 32], strides = [1, 1]} : vector<8x128xf32> to vector<8x32xf32>
    %261 = arith.negf %260 : vector<8x32xf32>
    %262 = math.exp %261 : vector<8x32xf32>
    %cst_104 = arith.constant 1.000000e+00 : f32
    %263 = vector.broadcast %cst_104 : f32 to vector<8x32xf32>
    %264 = arith.addf %263, %262 : vector<8x32xf32>
    %265 = arith.divf %263, %264 : vector<8x32xf32>
    %266 = vector.extract_strided_slice %253 {offsets = [0, 64], sizes = [8, 32], strides = [1, 1]} : vector<8x128xf32> to vector<8x32xf32>
    %267 = math.tanh %266 : vector<8x32xf32>
    %268 = vector.extract_strided_slice %253 {offsets = [0, 96], sizes = [8, 32], strides = [1, 1]} : vector<8x128xf32> to vector<8x32xf32>
    %269 = arith.negf %268 : vector<8x32xf32>
    %270 = math.exp %269 : vector<8x32xf32>
    %cst_105 = arith.constant 1.000000e+00 : f32
    %271 = vector.broadcast %cst_105 : f32 to vector<8x32xf32>
    %272 = arith.addf %271, %270 : vector<8x32xf32>
    %273 = arith.divf %271, %272 : vector<8x32xf32>
    %274 = arith.mulf %265, %208 : vector<8x32xf32>
    %275 = arith.mulf %259, %267 : vector<8x32xf32>
    %276 = arith.addf %274, %275 : vector<8x32xf32>
    %277 = math.tanh %276 : vector<8x32xf32>
    %278 = arith.mulf %273, %277 : vector<8x32xf32>
    %c0_106 = arith.constant 0 : index
    %c32_107 = arith.constant 32 : index
    %279 = vector.load %arg11[%c0_106, %c32_107] : memref<8x64xf32, #tpu.memory_space<vmem>>, vector<8x32xf32>
    tpu.vector_store %arg11[%c0_106, %c32_107], %278 {strides = array<i32>} : memref<8x64xf32, #tpu.memory_space<vmem>>, vector<8x32xf32>,
    %280 = arith.index_cast %215 : i32 to index
    %c0_108 = arith.constant 0 : index
    %281 = vector.load %arg10[%280, %c0_108] : memref<64x32xf32, #tpu.memory_space<vmem>>, vector<8x32xf32>
    tpu.vector_store %arg10[%280, %c0_108], %278 {strides = array<i32>} : memref<64x32xf32, #tpu.memory_space<vmem>>, vector<8x32xf32>,
    %c4_i32 = arith.constant 4 : i32
    %c8_i32_109 = arith.constant 8 : i32
    %282 = arith.muli %c4_i32, %c8_i32_109 : i32
    %283 = tpu.assume_multiple %282, 8 : i32
    %284 = arith.index_cast %283 : i32 to index
    %c0_110 = arith.constant 0 : index
    %285 = vector.load %arg9[%284, %c0_110] : memref<64x128xf32, #tpu.memory_space<vmem>>, vector<8x128xf32>
    %c0_111 = arith.constant 0 : index
    %c0_112 = arith.constant 0 : index
    %286 = vector.load %arg11[%c0_111, %c0_112] : memref<8x64xf32, #tpu.memory_space<vmem>>, vector<8x32xf32>
    %c0_113 = arith.constant 0 : index
    %c0_114 = arith.constant 0 : index
    %287 = vector.load %arg2[%c0_113, %c0_114] : memref<32x128xf32, #tpu.memory_space<vmem>>, vector<32x128xf32>
    %cst_115 = arith.constant dense<0.000000e+00> : vector<8x128xf32>
    %288 = tpu.matmul %286, %287, %cst_115 {dimension_numbers = #tpu.dot_dimension_numbers<[1], [0], [0], [1], [0, 0, 1, 1], [], []>} : vector<8x32xf32>, vector<32x128xf32>, vector<8x128xf32> -> vector<8x128xf32>
    %289 = arith.addf %285, %288 : vector<8x128xf32>
    %290 = vector.extract_strided_slice %289 {offsets = [0, 0], sizes = [8, 32], strides = [1, 1]} : vector<8x128xf32> to vector<8x32xf32>
    %291 = arith.negf %290 : vector<8x32xf32>
    %292 = math.exp %291 : vector<8x32xf32>
    %cst_116 = arith.constant 1.000000e+00 : f32
    %293 = vector.broadcast %cst_116 : f32 to vector<8x32xf32>
    %294 = arith.addf %293, %292 : vector<8x32xf32>
    %295 = arith.divf %293, %294 : vector<8x32xf32>
    %296 = vector.extract_strided_slice %289 {offsets = [0, 32], sizes = [8, 32], strides = [1, 1]} : vector<8x128xf32> to vector<8x32xf32>
    %297 = arith.negf %296 : vector<8x32xf32>
    %298 = math.exp %297 : vector<8x32xf32>
    %cst_117 = arith.constant 1.000000e+00 : f32
    %299 = vector.broadcast %cst_117 : f32 to vector<8x32xf32>
    %300 = arith.addf %299, %298 : vector<8x32xf32>
    %301 = arith.divf %299, %300 : vector<8x32xf32>
    %302 = vector.extract_strided_slice %289 {offsets = [0, 64], sizes = [8, 32], strides = [1, 1]} : vector<8x128xf32> to vector<8x32xf32>
    %303 = math.tanh %302 : vector<8x32xf32>
    %304 = vector.extract_strided_slice %289 {offsets = [0, 96], sizes = [8, 32], strides = [1, 1]} : vector<8x128xf32> to vector<8x32xf32>
    %305 = arith.negf %304 : vector<8x32xf32>
    %306 = math.exp %305 : vector<8x32xf32>
    %cst_118 = arith.constant 1.000000e+00 : f32
    %307 = vector.broadcast %cst_118 : f32 to vector<8x32xf32>
    %308 = arith.addf %307, %306 : vector<8x32xf32>
    %309 = arith.divf %307, %308 : vector<8x32xf32>
    %310 = arith.mulf %301, %244 : vector<8x32xf32>
    %311 = arith.mulf %295, %303 : vector<8x32xf32>
    %312 = arith.addf %310, %311 : vector<8x32xf32>
    %313 = math.tanh %312 : vector<8x32xf32>
    %314 = arith.mulf %309, %313 : vector<8x32xf32>
    %c0_119 = arith.constant 0 : index
    %c0_120 = arith.constant 0 : index
    %315 = vector.load %arg11[%c0_119, %c0_120] : memref<8x64xf32, #tpu.memory_space<vmem>>, vector<8x32xf32>
    tpu.vector_store %arg11[%c0_119, %c0_120], %314 {strides = array<i32>} : memref<8x64xf32, #tpu.memory_space<vmem>>, vector<8x32xf32>,
    %c0_121 = arith.constant 0 : index
    %c0_122 = arith.constant 0 : index
    %316 = vector.load %arg11[%c0_121, %c0_122] : memref<8x64xf32, #tpu.memory_space<vmem>>, vector<8x64xf32>
    %c0_123 = arith.constant 0 : index
    %c0_124 = arith.constant 0 : index
    %317 = vector.load %arg4[%c0_123, %c0_124] : memref<64x128xf32, #tpu.memory_space<vmem>>, vector<64x128xf32>
    %cst_125 = arith.constant dense<0.000000e+00> : vector<8x128xf32>
    %318 = tpu.matmul %316, %317, %cst_125 {dimension_numbers = #tpu.dot_dimension_numbers<[1], [0], [0], [1], [0, 0, 1, 1], [], []>} : vector<8x64xf32>, vector<64x128xf32>, vector<8x128xf32> -> vector<8x128xf32>
    %c0_126 = arith.constant 0 : index
    %c0_127 = arith.constant 0 : index
    %319 = vector.load %arg5[%c0_126, %c0_127] : memref<1x128xf32, #tpu.memory_space<vmem>>, vector<1x128xf32>
    %320 = vector.broadcast %319 : vector<1x128xf32> to vector<8x128xf32>
    %321 = arith.addf %318, %320 : vector<8x128xf32>
    %322 = vector.extract_strided_slice %321 {offsets = [0, 0], sizes = [8, 32], strides = [1, 1]} : vector<8x128xf32> to vector<8x32xf32>
    %323 = arith.negf %322 : vector<8x32xf32>
    %324 = math.exp %323 : vector<8x32xf32>
    %cst_128 = arith.constant 1.000000e+00 : f32
    %325 = vector.broadcast %cst_128 : f32 to vector<8x32xf32>
    %326 = arith.addf %325, %324 : vector<8x32xf32>
    %327 = arith.divf %325, %326 : vector<8x32xf32>
    %328 = vector.extract_strided_slice %321 {offsets = [0, 32], sizes = [8, 32], strides = [1, 1]} : vector<8x128xf32> to vector<8x32xf32>
    %329 = arith.negf %328 : vector<8x32xf32>
    %330 = math.exp %329 : vector<8x32xf32>
    %cst_129 = arith.constant 1.000000e+00 : f32
    %331 = vector.broadcast %cst_129 : f32 to vector<8x32xf32>
    %332 = arith.addf %331, %330 : vector<8x32xf32>
    %333 = arith.divf %331, %332 : vector<8x32xf32>
    %334 = vector.extract_strided_slice %321 {offsets = [0, 64], sizes = [8, 32], strides = [1, 1]} : vector<8x128xf32> to vector<8x32xf32>
    %335 = math.tanh %334 : vector<8x32xf32>
    %336 = vector.extract_strided_slice %321 {offsets = [0, 96], sizes = [8, 32], strides = [1, 1]} : vector<8x128xf32> to vector<8x32xf32>
    %337 = arith.negf %336 : vector<8x32xf32>
    %338 = math.exp %337 : vector<8x32xf32>
    %cst_130 = arith.constant 1.000000e+00 : f32
    %339 = vector.broadcast %cst_130 : f32 to vector<8x32xf32>
    %340 = arith.addf %339, %338 : vector<8x32xf32>
    %341 = arith.divf %339, %340 : vector<8x32xf32>
    %342 = arith.mulf %333, %276 : vector<8x32xf32>
    %343 = arith.mulf %327, %335 : vector<8x32xf32>
    %344 = arith.addf %342, %343 : vector<8x32xf32>
    %345 = math.tanh %344 : vector<8x32xf32>
    %346 = arith.mulf %341, %345 : vector<8x32xf32>
    %c0_131 = arith.constant 0 : index
    %c32_132 = arith.constant 32 : index
    %347 = vector.load %arg11[%c0_131, %c32_132] : memref<8x64xf32, #tpu.memory_space<vmem>>, vector<8x32xf32>
    tpu.vector_store %arg11[%c0_131, %c32_132], %346 {strides = array<i32>} : memref<8x64xf32, #tpu.memory_space<vmem>>, vector<8x32xf32>,
    %348 = arith.index_cast %283 : i32 to index
    %c0_133 = arith.constant 0 : index
    %349 = vector.load %arg10[%348, %c0_133] : memref<64x32xf32, #tpu.memory_space<vmem>>, vector<8x32xf32>
    tpu.vector_store %arg10[%348, %c0_133], %346 {strides = array<i32>} : memref<64x32xf32, #tpu.memory_space<vmem>>, vector<8x32xf32>,
    %c5_i32 = arith.constant 5 : i32
    %c8_i32_134 = arith.constant 8 : i32
    %350 = arith.muli %c5_i32, %c8_i32_134 : i32
    %351 = tpu.assume_multiple %350, 8 : i32
    %352 = arith.index_cast %351 : i32 to index
    %c0_135 = arith.constant 0 : index
    %353 = vector.load %arg9[%352, %c0_135] : memref<64x128xf32, #tpu.memory_space<vmem>>, vector<8x128xf32>
    %c0_136 = arith.constant 0 : index
    %c0_137 = arith.constant 0 : index
    %354 = vector.load %arg11[%c0_136, %c0_137] : memref<8x64xf32, #tpu.memory_space<vmem>>, vector<8x32xf32>
    %c0_138 = arith.constant 0 : index
    %c0_139 = arith.constant 0 : index
    %355 = vector.load %arg2[%c0_138, %c0_139] : memref<32x128xf32, #tpu.memory_space<vmem>>, vector<32x128xf32>
    %cst_140 = arith.constant dense<0.000000e+00> : vector<8x128xf32>
    %356 = tpu.matmul %354, %355, %cst_140 {dimension_numbers = #tpu.dot_dimension_numbers<[1], [0], [0], [1], [0, 0, 1, 1], [], []>} : vector<8x32xf32>, vector<32x128xf32>, vector<8x128xf32> -> vector<8x128xf32>
    %357 = arith.addf %353, %356 : vector<8x128xf32>
    %358 = vector.extract_strided_slice %357 {offsets = [0, 0], sizes = [8, 32], strides = [1, 1]} : vector<8x128xf32> to vector<8x32xf32>
    %359 = arith.negf %358 : vector<8x32xf32>
    %360 = math.exp %359 : vector<8x32xf32>
    %cst_141 = arith.constant 1.000000e+00 : f32
    %361 = vector.broadcast %cst_141 : f32 to vector<8x32xf32>
    %362 = arith.addf %361, %360 : vector<8x32xf32>
    %363 = arith.divf %361, %362 : vector<8x32xf32>
    %364 = vector.extract_strided_slice %357 {offsets = [0, 32], sizes = [8, 32], strides = [1, 1]} : vector<8x128xf32> to vector<8x32xf32>
    %365 = arith.negf %364 : vector<8x32xf32>
    %366 = math.exp %365 : vector<8x32xf32>
    %cst_142 = arith.constant 1.000000e+00 : f32
    %367 = vector.broadcast %cst_142 : f32 to vector<8x32xf32>
    %368 = arith.addf %367, %366 : vector<8x32xf32>
    %369 = arith.divf %367, %368 : vector<8x32xf32>
    %370 = vector.extract_strided_slice %357 {offsets = [0, 64], sizes = [8, 32], strides = [1, 1]} : vector<8x128xf32> to vector<8x32xf32>
    %371 = math.tanh %370 : vector<8x32xf32>
    %372 = vector.extract_strided_slice %357 {offsets = [0, 96], sizes = [8, 32], strides = [1, 1]} : vector<8x128xf32> to vector<8x32xf32>
    %373 = arith.negf %372 : vector<8x32xf32>
    %374 = math.exp %373 : vector<8x32xf32>
    %cst_143 = arith.constant 1.000000e+00 : f32
    %375 = vector.broadcast %cst_143 : f32 to vector<8x32xf32>
    %376 = arith.addf %375, %374 : vector<8x32xf32>
    %377 = arith.divf %375, %376 : vector<8x32xf32>
    %378 = arith.mulf %369, %312 : vector<8x32xf32>
    %379 = arith.mulf %363, %371 : vector<8x32xf32>
    %380 = arith.addf %378, %379 : vector<8x32xf32>
    %381 = math.tanh %380 : vector<8x32xf32>
    %382 = arith.mulf %377, %381 : vector<8x32xf32>
    %c0_144 = arith.constant 0 : index
    %c0_145 = arith.constant 0 : index
    %383 = vector.load %arg11[%c0_144, %c0_145] : memref<8x64xf32, #tpu.memory_space<vmem>>, vector<8x32xf32>
    tpu.vector_store %arg11[%c0_144, %c0_145], %382 {strides = array<i32>} : memref<8x64xf32, #tpu.memory_space<vmem>>, vector<8x32xf32>,
    %c0_146 = arith.constant 0 : index
    %c0_147 = arith.constant 0 : index
    %384 = vector.load %arg11[%c0_146, %c0_147] : memref<8x64xf32, #tpu.memory_space<vmem>>, vector<8x64xf32>
    %c0_148 = arith.constant 0 : index
    %c0_149 = arith.constant 0 : index
    %385 = vector.load %arg4[%c0_148, %c0_149] : memref<64x128xf32, #tpu.memory_space<vmem>>, vector<64x128xf32>
    %cst_150 = arith.constant dense<0.000000e+00> : vector<8x128xf32>
    %386 = tpu.matmul %384, %385, %cst_150 {dimension_numbers = #tpu.dot_dimension_numbers<[1], [0], [0], [1], [0, 0, 1, 1], [], []>} : vector<8x64xf32>, vector<64x128xf32>, vector<8x128xf32> -> vector<8x128xf32>
    %c0_151 = arith.constant 0 : index
    %c0_152 = arith.constant 0 : index
    %387 = vector.load %arg5[%c0_151, %c0_152] : memref<1x128xf32, #tpu.memory_space<vmem>>, vector<1x128xf32>
    %388 = vector.broadcast %387 : vector<1x128xf32> to vector<8x128xf32>
    %389 = arith.addf %386, %388 : vector<8x128xf32>
    %390 = vector.extract_strided_slice %389 {offsets = [0, 0], sizes = [8, 32], strides = [1, 1]} : vector<8x128xf32> to vector<8x32xf32>
    %391 = arith.negf %390 : vector<8x32xf32>
    %392 = math.exp %391 : vector<8x32xf32>
    %cst_153 = arith.constant 1.000000e+00 : f32
    %393 = vector.broadcast %cst_153 : f32 to vector<8x32xf32>
    %394 = arith.addf %393, %392 : vector<8x32xf32>
    %395 = arith.divf %393, %394 : vector<8x32xf32>
    %396 = vector.extract_strided_slice %389 {offsets = [0, 32], sizes = [8, 32], strides = [1, 1]} : vector<8x128xf32> to vector<8x32xf32>
    %397 = arith.negf %396 : vector<8x32xf32>
    %398 = math.exp %397 : vector<8x32xf32>
    %cst_154 = arith.constant 1.000000e+00 : f32
    %399 = vector.broadcast %cst_154 : f32 to vector<8x32xf32>
    %400 = arith.addf %399, %398 : vector<8x32xf32>
    %401 = arith.divf %399, %400 : vector<8x32xf32>
    %402 = vector.extract_strided_slice %389 {offsets = [0, 64], sizes = [8, 32], strides = [1, 1]} : vector<8x128xf32> to vector<8x32xf32>
    %403 = math.tanh %402 : vector<8x32xf32>
    %404 = vector.extract_strided_slice %389 {offsets = [0, 96], sizes = [8, 32], strides = [1, 1]} : vector<8x128xf32> to vector<8x32xf32>
    %405 = arith.negf %404 : vector<8x32xf32>
    %406 = math.exp %405 : vector<8x32xf32>
    %cst_155 = arith.constant 1.000000e+00 : f32
    %407 = vector.broadcast %cst_155 : f32 to vector<8x32xf32>
    %408 = arith.addf %407, %406 : vector<8x32xf32>
    %409 = arith.divf %407, %408 : vector<8x32xf32>
    %410 = arith.mulf %401, %344 : vector<8x32xf32>
    %411 = arith.mulf %395, %403 : vector<8x32xf32>
    %412 = arith.addf %410, %411 : vector<8x32xf32>
    %413 = math.tanh %412 : vector<8x32xf32>
    %414 = arith.mulf %409, %413 : vector<8x32xf32>
    %c0_156 = arith.constant 0 : index
    %c32_157 = arith.constant 32 : index
    %415 = vector.load %arg11[%c0_156, %c32_157] : memref<8x64xf32, #tpu.memory_space<vmem>>, vector<8x32xf32>
    tpu.vector_store %arg11[%c0_156, %c32_157], %414 {strides = array<i32>} : memref<8x64xf32, #tpu.memory_space<vmem>>, vector<8x32xf32>,
    %416 = arith.index_cast %351 : i32 to index
    %c0_158 = arith.constant 0 : index
    %417 = vector.load %arg10[%416, %c0_158] : memref<64x32xf32, #tpu.memory_space<vmem>>, vector<8x32xf32>
    tpu.vector_store %arg10[%416, %c0_158], %414 {strides = array<i32>} : memref<64x32xf32, #tpu.memory_space<vmem>>, vector<8x32xf32>,
    %c6_i32 = arith.constant 6 : i32
    %c8_i32_159 = arith.constant 8 : i32
    %418 = arith.muli %c6_i32, %c8_i32_159 : i32
    %419 = tpu.assume_multiple %418, 8 : i32
    %420 = arith.index_cast %419 : i32 to index
    %c0_160 = arith.constant 0 : index
    %421 = vector.load %arg9[%420, %c0_160] : memref<64x128xf32, #tpu.memory_space<vmem>>, vector<8x128xf32>
    %c0_161 = arith.constant 0 : index
    %c0_162 = arith.constant 0 : index
    %422 = vector.load %arg11[%c0_161, %c0_162] : memref<8x64xf32, #tpu.memory_space<vmem>>, vector<8x32xf32>
    %c0_163 = arith.constant 0 : index
    %c0_164 = arith.constant 0 : index
    %423 = vector.load %arg2[%c0_163, %c0_164] : memref<32x128xf32, #tpu.memory_space<vmem>>, vector<32x128xf32>
    %cst_165 = arith.constant dense<0.000000e+00> : vector<8x128xf32>
    %424 = tpu.matmul %422, %423, %cst_165 {dimension_numbers = #tpu.dot_dimension_numbers<[1], [0], [0], [1], [0, 0, 1, 1], [], []>} : vector<8x32xf32>, vector<32x128xf32>, vector<8x128xf32> -> vector<8x128xf32>
    %425 = arith.addf %421, %424 : vector<8x128xf32>
    %426 = vector.extract_strided_slice %425 {offsets = [0, 0], sizes = [8, 32], strides = [1, 1]} : vector<8x128xf32> to vector<8x32xf32>
    %427 = arith.negf %426 : vector<8x32xf32>
    %428 = math.exp %427 : vector<8x32xf32>
    %cst_166 = arith.constant 1.000000e+00 : f32
    %429 = vector.broadcast %cst_166 : f32 to vector<8x32xf32>
    %430 = arith.addf %429, %428 : vector<8x32xf32>
    %431 = arith.divf %429, %430 : vector<8x32xf32>
    %432 = vector.extract_strided_slice %425 {offsets = [0, 32], sizes = [8, 32], strides = [1, 1]} : vector<8x128xf32> to vector<8x32xf32>
    %433 = arith.negf %432 : vector<8x32xf32>
    %434 = math.exp %433 : vector<8x32xf32>
    %cst_167 = arith.constant 1.000000e+00 : f32
    %435 = vector.broadcast %cst_167 : f32 to vector<8x32xf32>
    %436 = arith.addf %435, %434 : vector<8x32xf32>
    %437 = arith.divf %435, %436 : vector<8x32xf32>
    %438 = vector.extract_strided_slice %425 {offsets = [0, 64], sizes = [8, 32], strides = [1, 1]} : vector<8x128xf32> to vector<8x32xf32>
    %439 = math.tanh %438 : vector<8x32xf32>
    %440 = vector.extract_strided_slice %425 {offsets = [0, 96], sizes = [8, 32], strides = [1, 1]} : vector<8x128xf32> to vector<8x32xf32>
    %441 = arith.negf %440 : vector<8x32xf32>
    %442 = math.exp %441 : vector<8x32xf32>
    %cst_168 = arith.constant 1.000000e+00 : f32
    %443 = vector.broadcast %cst_168 : f32 to vector<8x32xf32>
    %444 = arith.addf %443, %442 : vector<8x32xf32>
    %445 = arith.divf %443, %444 : vector<8x32xf32>
    %446 = arith.mulf %437, %380 : vector<8x32xf32>
    %447 = arith.mulf %431, %439 : vector<8x32xf32>
    %448 = arith.addf %446, %447 : vector<8x32xf32>
    %449 = math.tanh %448 : vector<8x32xf32>
    %450 = arith.mulf %445, %449 : vector<8x32xf32>
    %c0_169 = arith.constant 0 : index
    %c0_170 = arith.constant 0 : index
    %451 = vector.load %arg11[%c0_169, %c0_170] : memref<8x64xf32, #tpu.memory_space<vmem>>, vector<8x32xf32>
    tpu.vector_store %arg11[%c0_169, %c0_170], %450 {strides = array<i32>} : memref<8x64xf32, #tpu.memory_space<vmem>>, vector<8x32xf32>,
    %c0_171 = arith.constant 0 : index
    %c0_172 = arith.constant 0 : index
    %452 = vector.load %arg11[%c0_171, %c0_172] : memref<8x64xf32, #tpu.memory_space<vmem>>, vector<8x64xf32>
    %c0_173 = arith.constant 0 : index
    %c0_174 = arith.constant 0 : index
    %453 = vector.load %arg4[%c0_173, %c0_174] : memref<64x128xf32, #tpu.memory_space<vmem>>, vector<64x128xf32>
    %cst_175 = arith.constant dense<0.000000e+00> : vector<8x128xf32>
    %454 = tpu.matmul %452, %453, %cst_175 {dimension_numbers = #tpu.dot_dimension_numbers<[1], [0], [0], [1], [0, 0, 1, 1], [], []>} : vector<8x64xf32>, vector<64x128xf32>, vector<8x128xf32> -> vector<8x128xf32>
    %c0_176 = arith.constant 0 : index
    %c0_177 = arith.constant 0 : index
    %455 = vector.load %arg5[%c0_176, %c0_177] : memref<1x128xf32, #tpu.memory_space<vmem>>, vector<1x128xf32>
    %456 = vector.broadcast %455 : vector<1x128xf32> to vector<8x128xf32>
    %457 = arith.addf %454, %456 : vector<8x128xf32>
    %458 = vector.extract_strided_slice %457 {offsets = [0, 0], sizes = [8, 32], strides = [1, 1]} : vector<8x128xf32> to vector<8x32xf32>
    %459 = arith.negf %458 : vector<8x32xf32>
    %460 = math.exp %459 : vector<8x32xf32>
    %cst_178 = arith.constant 1.000000e+00 : f32
    %461 = vector.broadcast %cst_178 : f32 to vector<8x32xf32>
    %462 = arith.addf %461, %460 : vector<8x32xf32>
    %463 = arith.divf %461, %462 : vector<8x32xf32>
    %464 = vector.extract_strided_slice %457 {offsets = [0, 32], sizes = [8, 32], strides = [1, 1]} : vector<8x128xf32> to vector<8x32xf32>
    %465 = arith.negf %464 : vector<8x32xf32>
    %466 = math.exp %465 : vector<8x32xf32>
    %cst_179 = arith.constant 1.000000e+00 : f32
    %467 = vector.broadcast %cst_179 : f32 to vector<8x32xf32>
    %468 = arith.addf %467, %466 : vector<8x32xf32>
    %469 = arith.divf %467, %468 : vector<8x32xf32>
    %470 = vector.extract_strided_slice %457 {offsets = [0, 64], sizes = [8, 32], strides = [1, 1]} : vector<8x128xf32> to vector<8x32xf32>
    %471 = math.tanh %470 : vector<8x32xf32>
    %472 = vector.extract_strided_slice %457 {offsets = [0, 96], sizes = [8, 32], strides = [1, 1]} : vector<8x128xf32> to vector<8x32xf32>
    %473 = arith.negf %472 : vector<8x32xf32>
    %474 = math.exp %473 : vector<8x32xf32>
    %cst_180 = arith.constant 1.000000e+00 : f32
    %475 = vector.broadcast %cst_180 : f32 to vector<8x32xf32>
    %476 = arith.addf %475, %474 : vector<8x32xf32>
    %477 = arith.divf %475, %476 : vector<8x32xf32>
    %478 = arith.mulf %469, %412 : vector<8x32xf32>
    %479 = arith.mulf %463, %471 : vector<8x32xf32>
    %480 = arith.addf %478, %479 : vector<8x32xf32>
    %481 = math.tanh %480 : vector<8x32xf32>
    %482 = arith.mulf %477, %481 : vector<8x32xf32>
    %c0_181 = arith.constant 0 : index
    %c32_182 = arith.constant 32 : index
    %483 = vector.load %arg11[%c0_181, %c32_182] : memref<8x64xf32, #tpu.memory_space<vmem>>, vector<8x32xf32>
    tpu.vector_store %arg11[%c0_181, %c32_182], %482 {strides = array<i32>} : memref<8x64xf32, #tpu.memory_space<vmem>>, vector<8x32xf32>,
    %484 = arith.index_cast %419 : i32 to index
    %c0_183 = arith.constant 0 : index
    %485 = vector.load %arg10[%484, %c0_183] : memref<64x32xf32, #tpu.memory_space<vmem>>, vector<8x32xf32>
    tpu.vector_store %arg10[%484, %c0_183], %482 {strides = array<i32>} : memref<64x32xf32, #tpu.memory_space<vmem>>, vector<8x32xf32>,
    %c7_i32 = arith.constant 7 : i32
    %c8_i32_184 = arith.constant 8 : i32
    %486 = arith.muli %c7_i32, %c8_i32_184 : i32
    %487 = tpu.assume_multiple %486, 8 : i32
    %488 = arith.index_cast %487 : i32 to index
    %c0_185 = arith.constant 0 : index
    %489 = vector.load %arg9[%488, %c0_185] : memref<64x128xf32, #tpu.memory_space<vmem>>, vector<8x128xf32>
    %c0_186 = arith.constant 0 : index
    %c0_187 = arith.constant 0 : index
    %490 = vector.load %arg11[%c0_186, %c0_187] : memref<8x64xf32, #tpu.memory_space<vmem>>, vector<8x32xf32>
    %c0_188 = arith.constant 0 : index
    %c0_189 = arith.constant 0 : index
    %491 = vector.load %arg2[%c0_188, %c0_189] : memref<32x128xf32, #tpu.memory_space<vmem>>, vector<32x128xf32>
    %cst_190 = arith.constant dense<0.000000e+00> : vector<8x128xf32>
    %492 = tpu.matmul %490, %491, %cst_190 {dimension_numbers = #tpu.dot_dimension_numbers<[1], [0], [0], [1], [0, 0, 1, 1], [], []>} : vector<8x32xf32>, vector<32x128xf32>, vector<8x128xf32> -> vector<8x128xf32>
    %493 = arith.addf %489, %492 : vector<8x128xf32>
    %494 = vector.extract_strided_slice %493 {offsets = [0, 0], sizes = [8, 32], strides = [1, 1]} : vector<8x128xf32> to vector<8x32xf32>
    %495 = arith.negf %494 : vector<8x32xf32>
    %496 = math.exp %495 : vector<8x32xf32>
    %cst_191 = arith.constant 1.000000e+00 : f32
    %497 = vector.broadcast %cst_191 : f32 to vector<8x32xf32>
    %498 = arith.addf %497, %496 : vector<8x32xf32>
    %499 = arith.divf %497, %498 : vector<8x32xf32>
    %500 = vector.extract_strided_slice %493 {offsets = [0, 32], sizes = [8, 32], strides = [1, 1]} : vector<8x128xf32> to vector<8x32xf32>
    %501 = arith.negf %500 : vector<8x32xf32>
    %502 = math.exp %501 : vector<8x32xf32>
    %cst_192 = arith.constant 1.000000e+00 : f32
    %503 = vector.broadcast %cst_192 : f32 to vector<8x32xf32>
    %504 = arith.addf %503, %502 : vector<8x32xf32>
    %505 = arith.divf %503, %504 : vector<8x32xf32>
    %506 = vector.extract_strided_slice %493 {offsets = [0, 64], sizes = [8, 32], strides = [1, 1]} : vector<8x128xf32> to vector<8x32xf32>
    %507 = math.tanh %506 : vector<8x32xf32>
    %508 = vector.extract_strided_slice %493 {offsets = [0, 96], sizes = [8, 32], strides = [1, 1]} : vector<8x128xf32> to vector<8x32xf32>
    %509 = arith.negf %508 : vector<8x32xf32>
    %510 = math.exp %509 : vector<8x32xf32>
    %cst_193 = arith.constant 1.000000e+00 : f32
    %511 = vector.broadcast %cst_193 : f32 to vector<8x32xf32>
    %512 = arith.addf %511, %510 : vector<8x32xf32>
    %513 = arith.divf %511, %512 : vector<8x32xf32>
    %514 = arith.mulf %505, %448 : vector<8x32xf32>
    %515 = arith.mulf %499, %507 : vector<8x32xf32>
    %516 = arith.addf %514, %515 : vector<8x32xf32>
    %517 = math.tanh %516 : vector<8x32xf32>
    %518 = arith.mulf %513, %517 : vector<8x32xf32>
    %c0_194 = arith.constant 0 : index
    %c0_195 = arith.constant 0 : index
    %519 = vector.load %arg11[%c0_194, %c0_195] : memref<8x64xf32, #tpu.memory_space<vmem>>, vector<8x32xf32>
    tpu.vector_store %arg11[%c0_194, %c0_195], %518 {strides = array<i32>} : memref<8x64xf32, #tpu.memory_space<vmem>>, vector<8x32xf32>,
    %c0_196 = arith.constant 0 : index
    %c0_197 = arith.constant 0 : index
    %520 = vector.load %arg11[%c0_196, %c0_197] : memref<8x64xf32, #tpu.memory_space<vmem>>, vector<8x64xf32>
    %c0_198 = arith.constant 0 : index
    %c0_199 = arith.constant 0 : index
    %521 = vector.load %arg4[%c0_198, %c0_199] : memref<64x128xf32, #tpu.memory_space<vmem>>, vector<64x128xf32>
    %cst_200 = arith.constant dense<0.000000e+00> : vector<8x128xf32>
    %522 = tpu.matmul %520, %521, %cst_200 {dimension_numbers = #tpu.dot_dimension_numbers<[1], [0], [0], [1], [0, 0, 1, 1], [], []>} : vector<8x64xf32>, vector<64x128xf32>, vector<8x128xf32> -> vector<8x128xf32>
    %c0_201 = arith.constant 0 : index
    %c0_202 = arith.constant 0 : index
    %523 = vector.load %arg5[%c0_201, %c0_202] : memref<1x128xf32, #tpu.memory_space<vmem>>, vector<1x128xf32>
    %524 = vector.broadcast %523 : vector<1x128xf32> to vector<8x128xf32>
    %525 = arith.addf %522, %524 : vector<8x128xf32>
    %526 = vector.extract_strided_slice %525 {offsets = [0, 0], sizes = [8, 32], strides = [1, 1]} : vector<8x128xf32> to vector<8x32xf32>
    %527 = arith.negf %526 : vector<8x32xf32>
    %528 = math.exp %527 : vector<8x32xf32>
    %cst_203 = arith.constant 1.000000e+00 : f32
    %529 = vector.broadcast %cst_203 : f32 to vector<8x32xf32>
    %530 = arith.addf %529, %528 : vector<8x32xf32>
    %531 = arith.divf %529, %530 : vector<8x32xf32>
    %532 = vector.extract_strided_slice %525 {offsets = [0, 32], sizes = [8, 32], strides = [1, 1]} : vector<8x128xf32> to vector<8x32xf32>
    %533 = arith.negf %532 : vector<8x32xf32>
    %534 = math.exp %533 : vector<8x32xf32>
    %cst_204 = arith.constant 1.000000e+00 : f32
    %535 = vector.broadcast %cst_204 : f32 to vector<8x32xf32>
    %536 = arith.addf %535, %534 : vector<8x32xf32>
    %537 = arith.divf %535, %536 : vector<8x32xf32>
    %538 = vector.extract_strided_slice %525 {offsets = [0, 64], sizes = [8, 32], strides = [1, 1]} : vector<8x128xf32> to vector<8x32xf32>
    %539 = math.tanh %538 : vector<8x32xf32>
    %540 = vector.extract_strided_slice %525 {offsets = [0, 96], sizes = [8, 32], strides = [1, 1]} : vector<8x128xf32> to vector<8x32xf32>
    %541 = arith.negf %540 : vector<8x32xf32>
    %542 = math.exp %541 : vector<8x32xf32>
    %cst_205 = arith.constant 1.000000e+00 : f32
    %543 = vector.broadcast %cst_205 : f32 to vector<8x32xf32>
    %544 = arith.addf %543, %542 : vector<8x32xf32>
    %545 = arith.divf %543, %544 : vector<8x32xf32>
    %546 = arith.mulf %537, %480 : vector<8x32xf32>
    %547 = arith.mulf %531, %539 : vector<8x32xf32>
    %548 = arith.addf %546, %547 : vector<8x32xf32>
    %549 = math.tanh %548 : vector<8x32xf32>
    %550 = arith.mulf %545, %549 : vector<8x32xf32>
    %c0_206 = arith.constant 0 : index
    %c32_207 = arith.constant 32 : index
    %551 = vector.load %arg11[%c0_206, %c32_207] : memref<8x64xf32, #tpu.memory_space<vmem>>, vector<8x32xf32>
    tpu.vector_store %arg11[%c0_206, %c32_207], %550 {strides = array<i32>} : memref<8x64xf32, #tpu.memory_space<vmem>>, vector<8x32xf32>,
    %552 = arith.index_cast %487 : i32 to index
    %c0_208 = arith.constant 0 : index
    %553 = vector.load %arg10[%552, %c0_208] : memref<64x32xf32, #tpu.memory_space<vmem>>, vector<8x32xf32>
    tpu.vector_store %arg10[%552, %c0_208], %550 {strides = array<i32>} : memref<64x32xf32, #tpu.memory_space<vmem>>, vector<8x32xf32>,
    %c8_i32_209 = arith.constant 8 : i32
    %c0_210 = arith.constant 0 : index
    %c0_211 = arith.constant 0 : index
    %554 = vector.load %arg10[%c0_210, %c0_211] : memref<64x32xf32, #tpu.memory_space<vmem>>, vector<64x32xf32>
    %c0_212 = arith.constant 0 : index
    %c0_213 = arith.constant 0 : index
    %555 = vector.load %arg6[%c0_212, %c0_213] : memref<32x128xf32, #tpu.memory_space<vmem>>, vector<32x128xf32>
    %cst_214 = arith.constant dense<0.000000e+00> : vector<64x128xf32>
    %556 = tpu.matmul %554, %555, %cst_214 {dimension_numbers = #tpu.dot_dimension_numbers<[1], [0], [0], [1], [0, 0, 1, 1], [], []>} : vector<64x32xf32>, vector<32x128xf32>, vector<64x128xf32> -> vector<64x128xf32>
    %c0_215 = arith.constant 0 : index
    %c0_216 = arith.constant 0 : index
    %557 = vector.load %arg7[%c0_215, %c0_216] : memref<1x128xf32, #tpu.memory_space<vmem>>, vector<1x128xf32>
    %558 = vector.broadcast %557 : vector<1x128xf32> to vector<64x128xf32>
    %559 = arith.addf %556, %558 : vector<64x128xf32>
    %c0_217 = arith.constant 0 : index
    %c0_218 = arith.constant 0 : index
    %560 = vector.load %arg8[%c0_217, %c0_218] : memref<64x128xf32, #tpu.memory_space<vmem>>, vector<64x128xf32>
    tpu.vector_store %arg8[%c0_217, %c0_218], %559 {strides = array<i32>} : memref<64x128xf32, #tpu.memory_space<vmem>>, vector<64x128xf32>,
    return
  }
}

</mosaic_0001>

<llo_original>
// kernel: lstm_forward_pallas.1
$region0: #{lstm_forward_pallas.1}
  #allocation0 [shape = 'u32[]', space=smem, size = 0x4, offset = 0x4, fixed_abs, tag = 'smem constant byte address 0x4 - core index']
  #allocation1 [shape = 'u32[144,128]{1,0:T(1,128)}', space=vmem, size = 0x12000, scoped, tag = 'internal scratch']
  #allocation2 [shape = 'f32[64,128]{1,0:T(8,128)}', space=vmem, size = 0x8000, scoped, tag = 'scratch operand']
  #allocation3 [shape = 'f32[64,32]{1,0:T(8,128)}', space=vmem, size = 0x8000, scoped, tag = 'scratch operand']
  #allocation4 [shape = 'f32[8,64]{1,0:T(8,128)}', space=vmem, size = 0x1000, scoped, tag = 'scratch operand']
  %s0 = inlined_call_operand.vmem [shape: f32[64,4], index: 0, kind: input, shape index: {}]
  %s1 = inlined_call_operand.vmem [shape: f32[4,128], index: 1, kind: input, shape index: {}]
  %s2 = inlined_call_operand.vmem [shape: f32[32,128], index: 2, kind: input, shape index: {}]
  %s3 = inlined_call_operand.vmem [shape: f32[1,128], index: 3, kind: input, shape index: {}]
  %s4 = inlined_call_operand.vmem [shape: f32[64,128], index: 4, kind: input, shape index: {}]
  %s5 = inlined_call_operand.vmem [shape: f32[1,128], index: 5, kind: input, shape index: {}]
  %s6 = inlined_call_operand.vmem [shape: f32[32,128], index: 6, kind: input, shape index: {}]
  %s7 = inlined_call_operand.vmem [shape: f32[1,128], index: 7, kind: input, shape index: {}]
  %s8 = inlined_call_operand.vmem [shape: f32[64,128], index: 8, kind: output, shape index: {}]
  %s9 = sld [smem:[#allocation0]]
  $region42: #{lstm_forward_pallas.1} parent=0
    _
  %s11 = ssub.s32 1, %s9
  %s12 = scalar_select 0, %s11, %s9
  // Predicated region
  $region2: #{lstm_forward_pallas.1} parent=0 // pred_check
    _
  $region3: #{lstm_forward_pallas.1} parent=0 // pred_check_branch
    %14 = sbr.rel (0) target = $region5
  $region4: #{lstm_forward_pallas.1} parent=0 // pred_region
    _
  $region5: #{lstm_forward_pallas.1} parent=0 // pred_fallthru
    _
  // Predicated region
  $region6: #{lstm_forward_pallas.1} parent=0 // pred_check
    _
  $region7: #{lstm_forward_pallas.1} parent=0 // pred_check_branch
    %16 = sbr.rel (0) target = $region9
  $region8: #{lstm_forward_pallas.1} parent=0 // pred_region
    _
  $region9: #{lstm_forward_pallas.1} parent=0 // pred_fallthru
    _
  // Predicated region
  $region10: #{lstm_forward_pallas.1} parent=0 // pred_check
    _
  $region11: #{lstm_forward_pallas.1} parent=0 // pred_check_branch
    %18 = sbr.rel (0) target = $region13
  $region12: #{lstm_forward_pallas.1} parent=0 // pred_region
    _
  $region13: #{lstm_forward_pallas.1} parent=0 // pred_fallthru
    _
  // Predicated region
  $region14: #{lstm_forward_pallas.1} parent=0 // pred_check
    _
  $region15: #{lstm_forward_pallas.1} parent=0 // pred_check_branch
    %20 = sbr.rel (0) target = $region17
  $region16: #{lstm_forward_pallas.1} parent=0 // pred_region
    _
  $region17: #{lstm_forward_pallas.1} parent=0 // pred_fallthru
    _
  // Predicated region
  $region18: #{lstm_forward_pallas.1} parent=0 // pred_check
    _
  $region19: #{lstm_forward_pallas.1} parent=0 // pred_check_branch
    %22 = sbr.rel (0) target = $region21
  $region20: #{lstm_forward_pallas.1} parent=0 // pred_region
    _
  $region21: #{lstm_forward_pallas.1} parent=0 // pred_fallthru
    _
  // Predicated region
  $region22: #{lstm_forward_pallas.1} parent=0 // pred_check
    _
  $region23: #{lstm_forward_pallas.1} parent=0 // pred_check_branch
    %24 = sbr.rel (0) target = $region25
  $region24: #{lstm_forward_pallas.1} parent=0 // pred_region
    _
  $region25: #{lstm_forward_pallas.1} parent=0 // pred_fallthru
    _
  // Predicated region
  $region26: #{lstm_forward_pallas.1} parent=0 // pred_check
    _
  $region27: #{lstm_forward_pallas.1} parent=0 // pred_check_branch
    %26 = sbr.rel (0) target = $region29
  $region28: #{lstm_forward_pallas.1} parent=0 // pred_region
    _
  $region29: #{lstm_forward_pallas.1} parent=0 // pred_fallthru
    _
  // Predicated region
  $region30: #{lstm_forward_pallas.1} parent=0 // pred_check
    _
  $region31: #{lstm_forward_pallas.1} parent=0 // pred_check_branch
    %28 = sbr.rel (0) target = $region33
  $region32: #{lstm_forward_pallas.1} parent=0 // pred_region
    _
  $region33: #{lstm_forward_pallas.1} parent=0 // pred_fallthru
    _
  %v29 = vld [vmem:[%s0] sm:$0xff]
  %v30 = vld [vmem:[%s0 + $0x8] sm:$0xff]
  %v31 = vld [vmem:[%s0 + $0x10] sm:$0xff]
  %v32 = vld [vmem:[%s0 + $0x18] sm:$0xff]
  %v33 = vld [vmem:[%s0 + $0x20] sm:$0xff]
  %v34 = vld [vmem:[%s0 + $0x28] sm:$0xff]
  %v35 = vld [vmem:[%s0 + $0x30] sm:$0xff]
  %v36 = vld [vmem:[%s0 + $0x38] sm:$0xff]
  %v37 = vld [vmem:[%s1] sm:$0xf]
  %v38 = vld [vmem:[%s3] sm:$0x1]
  %v40 = vlaneseq
  %v41 = vshrl.u32 %v40, 7
  %v42 = vsub.s32 0, %v41
  %v43 = vrot.slane %v38, %v42
  %vm45 = vcmask 31744
  %v47 = vsel %vm45, %v29, 0
  %v50 = vsel %vm45, %v30, 0
  %v53 = vsel %vm45, %v31, 0
  %v56 = vsel %vm45, %v32, 0
  %v59 = vsel %vm45, %v33, 0
  %v62 = vsel %vm45, %v34, 0
  %v65 = vsel %vm45, %v35, 0
  %v68 = vsel %vm45, %v36, 0
  %vm70 = vcmask 1043456
  %v72 = vsel %vm70, %v37, 0
  %74 = vmatprep.subr.mxu0 0.0
  %75 = vmatpush1.msra.mxu0 %v72
  %76 = vmatprep.subr.mxu0 0.0
  %77 = vmatpush1.msra.mxu0 0.0
  %78 = vmatprep.subr.mxu0 0.0
  %79 = vmatpush1.msra.mxu0 0.0
  %80 = vmatprep.subr.mxu0 0.0
  %81 = vmatpush1.msra.mxu0 0.0
  %82 = vmatprep.subr.mxu0 0.0
  %83 = vmatpush1.msra.mxu0 0.0
  %84 = vmatprep.subr.mxu0 0.0
  %85 = vmatpush1.msra.mxu0 0.0
  %86 = vmatprep.subr.mxu0 0.0
  %87 = vmatpush1.msra.mxu0 0.0
  %88 = vmatprep.subr.mxu0 0.0
  %89 = vmatpush1.msra.mxu0 0.0
  %90 = vmatprep.subr.mxu0 0.0
  %91 = vmatpush1.msra.mxu0 0.0
  %92 = vmatprep.subr.mxu0 0.0
  %93 = vmatpush1.msra.mxu0 0.0
  %94 = vmatprep.subr.mxu0 0.0
  %95 = vmatpush1.msra.mxu0 0.0
  %96 = vmatprep.subr.mxu0 0.0
  %97 = vmatpush1.msra.mxu0 0.0
  %98 = vmatprep.subr.mxu0 0.0
  %99 = vmatpush1.msra.mxu0 0.0
  %100 = vmatprep.subr.mxu0 0.0
  %101 = vmatpush1.msra.mxu0 0.0
  %102 = vmatprep.subr.mxu0 0.0
  %103 = vmatpush1.msra.mxu0 0.0
  %104 = vmatprep.subr.mxu0 0.0
  %105 = vmatpush1.msra.mxu0 0.0
  %106 = vmatprep.subr.mxu0 0.0
  %107 = vmatpush1.msra.mxu0 0.0
  %108 = vmatprep.subr.mxu0 0.0
  %109 = vmatpush1.msra.mxu0 0.0
  %110 = vmatprep.subr.mxu0 0.0
  %111 = vmatpush1.msra.mxu0 0.0
  %112 = vmatprep.subr.mxu0 0.0
  %113 = vmatpush1.msra.mxu0 0.0
  %114 = vmatprep.subr.mxu0 0.0
  %115 = vmatpush1.msra.mxu0 0.0
  %116 = vmatprep.subr.mxu0 0.0
  %117 = vmatpush1.msra.mxu0 0.0
  %118 = vmatprep.subr.mxu0 0.0
  %119 = vmatpush1.msra.mxu0 0.0
  %120 = vmatprep.subr.mxu0 0.0
  %121 = vmatpush1.msra.mxu0 0.0
  %122 = vmatprep.subr.mxu0 0.0
  %123 = vmatpush1.msra.mxu0 0.0
  %124 = vmatprep.subr.mxu0 0.0
  %125 = vmatpush1.msra.mxu0 0.0
  %126 = vmatprep.subr.mxu0 0.0
  %127 = vmatpush1.msra.mxu0 0.0
  %128 = vmatprep.subr.mxu0 0.0
  %129 = vmatpush1.msra.mxu0 0.0
  %130 = vmatprep.subr.mxu0 0.0
  %131 = vmatpush1.msra.mxu0 0.0
  %132 = vmatprep.subr.mxu0 0.0
  %133 = vmatpush1.msra.mxu0 0.0
  %134 = vmatprep.subr.mxu0 0.0
  %135 = vmatpush1.msra.mxu0 0.0
  %136 = vmatprep.subr.mxu0 0.0
  %137 = vmatpush1.msra.mxu0 0.0
  %138 = vmatprep.mubr.f32.mxu0 0.0
  %139 = vmatmul.mubr.f32.gmra.mrb[0].mxu0 %v47
  %v140 = vpop.f32.mrb[0].mxu0
  %v141 = vadd.f32 %v43, %v140
  %v142 = vpop.f32.mrb[0].mxu0
  %143 = vmatprep.mubr.f32.mxu0 0.0
  %144 = vmatmul.mubr.f32.gmra.mrb[0].mxu0 %v50
  %v145 = vpop.f32.mrb[0].mxu0
  %v146 = vadd.f32 %v43, %v145
  %v147 = vpop.f32.mrb[0].mxu0
  %148 = vmatprep.mubr.f32.mxu0 0.0
  %149 = vmatmul.mubr.f32.gmra.mrb[0].mxu0 %v53
  %v150 = vpop.f32.mrb[0].mxu0
  %v151 = vadd.f32 %v43, %v150
  %v152 = vpop.f32.mrb[0].mxu0
  %153 = vmatprep.mubr.f32.mxu0 0.0
  %154 = vmatmul.mubr.f32.gmra.mrb[0].mxu0 %v56
  %v155 = vpop.f32.mrb[0].mxu0
  %v156 = vadd.f32 %v43, %v155
  %v157 = vpop.f32.mrb[0].mxu0
  %158 = vmatprep.mubr.f32.mxu0 0.0
  %159 = vmatmul.mubr.f32.gmra.mrb[0].mxu0 %v59
  %v160 = vpop.f32.mrb[0].mxu0
  %v161 = vadd.f32 %v43, %v160
  %v162 = vpop.f32.mrb[0].mxu0
  %163 = vmatprep.mubr.f32.mxu0 0.0
  %164 = vmatmul.mubr.f32.gmra.mrb[0].mxu0 %v62
  %v165 = vpop.f32.mrb[0].mxu0
  %v166 = vadd.f32 %v43, %v165
  %v167 = vpop.f32.mrb[0].mxu0
  %168 = vmatprep.mubr.f32.mxu0 0.0
  %169 = vmatmul.mubr.f32.gmra.mrb[0].mxu0 %v65
  %v170 = vpop.f32.mrb[0].mxu0
  %v171 = vadd.f32 %v43, %v170
  %v172 = vpop.f32.mrb[0].mxu0
  %173 = vmatprep.mubr.f32.mxu0 0.0
  %174 = vmatmul.mubr.f32.gmra.mrb[0].mxu0 %v68
  %v175 = vpop.f32.mrb[0].mxu0
  %v176 = vadd.f32 %v43, %v175
  %v177 = vpop.f32.mrb[0].mxu0
  %178 = vdwg.mxu0
  %179 = vst [vmem:[#allocation2] sm:$0xff] %v141
  %180 = vst [vmem:[#allocation2 + $0x8] sm:$0xff] %v146
  %181 = vst [vmem:[#allocation2 + $0x10] sm:$0xff] %v151
  %182 = vst [vmem:[#allocation2 + $0x18] sm:$0xff] %v156
  %183 = vst [vmem:[#allocation2 + $0x20] sm:$0xff] %v161
  %184 = vst [vmem:[#allocation2 + $0x28] sm:$0xff] %v166
  %185 = vst [vmem:[#allocation2 + $0x30] sm:$0xff] %v171
  %186 = vst [vmem:[#allocation2 + $0x38] sm:$0xff] %v176
  %vm187 = vcmask 523264
  %188 = vst.msk [vmem:[#allocation4] sm:$0xff] %vm187, 0.0
  %v189 = vld [vmem:[#allocation2] sm:$0xff]
  %v190 = vld [vmem:[#allocation4] sm:$0xff]
  %v191 = vld [vmem:[%s2] sm:$0xff]
  %v192 = vld [vmem:[%s2 + $0x8] sm:$0xff]
  %v193 = vld [vmem:[%s2 + $0x10] sm:$0xff]
  %v194 = vld [vmem:[%s2 + $0x18] sm:$0xff]
  %vm195 = vcmask 261120
  %v197 = vsel %vm195, %v190, 0
  %199 = vmatprep.subr.mxu0 0.0
  %200 = vmatpush1.msra.mxu0 %v191
  %201 = vmatprep.subr.mxu0 0.0
  %202 = vmatpush1.msra.mxu0 %v192
  %203 = vmatprep.subr.mxu0 0.0
  %204 = vmatpush1.msra.mxu0 %v193
  %205 = vmatprep.subr.mxu0 0.0
  %206 = vmatpush1.msra.mxu0 %v194
  %207 = vmatprep.subr.mxu0 0.0
  %208 = vmatpush1.msra.mxu0 0.0
  %209 = vmatprep.subr.mxu0 0.0
  %210 = vmatpush1.msra.mxu0 0.0
  %211 = vmatprep.subr.mxu0 0.0
  %212 = vmatpush1.msra.mxu0 0.0
  %213 = vmatprep.subr.mxu0 0.0
  %214 = vmatpush1.msra.mxu0 0.0
  %215 = vmatprep.subr.mxu0 0.0
  %216 = vmatpush1.msra.mxu0 0.0
  %217 = vmatprep.subr.mxu0 0.0
  %218 = vmatpush1.msra.mxu0 0.0
  %219 = vmatprep.subr.mxu0 0.0
  %220 = vmatpush1.msra.mxu0 0.0
  %221 = vmatprep.subr.mxu0 0.0
  %222 = vmatpush1.msra.mxu0 0.0
  %223 = vmatprep.subr.mxu0 0.0
  %224 = vmatpush1.msra.mxu0 0.0
  %225 = vmatprep.subr.mxu0 0.0
  %226 = vmatpush1.msra.mxu0 0.0
  %227 = vmatprep.subr.mxu0 0.0
  %228 = vmatpush1.msra.mxu0 0.0
  %229 = vmatprep.subr.mxu0 0.0
  %230 = vmatpush1.msra.mxu0 0.0
  %231 = vmatprep.subr.mxu0 0.0
  %232 = vmatpush1.msra.mxu0 0.0
  %233 = vmatprep.subr.mxu0 0.0
  %234 = vmatpush1.msra.mxu0 0.0
  %235 = vmatprep.subr.mxu0 0.0
  %236 = vmatpush1.msra.mxu0 0.0
  %237 = vmatprep.subr.mxu0 0.0
  %238 = vmatpush1.msra.mxu0 0.0
  %239 = vmatprep.subr.mxu0 0.0
  %240 = vmatpush1.msra.mxu0 0.0
  %241 = vmatprep.subr.mxu0 0.0
  %242 = vmatpush1.msra.mxu0 0.0
  %243 = vmatprep.subr.mxu0 0.0
  %244 = vmatpush1.msra.mxu0 0.0
  %245 = vmatprep.subr.mxu0 0.0
  %246 = vmatpush1.msra.mxu0 0.0
  %247 = vmatprep.subr.mxu0 0.0
  %248 = vmatpush1.msra.mxu0 0.0
  %249 = vmatprep.subr.mxu0 0.0
  %250 = vmatpush1.msra.mxu0 0.0
  %251 = vmatprep.subr.mxu0 0.0
  %252 = vmatpush1.msra.mxu0 0.0
  %253 = vmatprep.subr.mxu0 0.0
  %254 = vmatpush1.msra.mxu0 0.0
  %255 = vmatprep.subr.mxu0 0.0
  %256 = vmatpush1.msra.mxu0 0.0
  %257 = vmatprep.subr.mxu0 0.0
  %258 = vmatpush1.msra.mxu0 0.0
  %259 = vmatprep.subr.mxu0 0.0
  %260 = vmatpush1.msra.mxu0 0.0
  %261 = vmatprep.subr.mxu0 0.0
  %262 = vmatpush1.msra.mxu0 0.0
  %263 = vmatprep.mubr.f32.mxu0 0.0
  %264 = vmatmul.mubr.f32.gmra.mrb[0].mxu0 %v197
  %v265 = vpop.f32.mrb[0].mxu0
  %v266 = vadd.f32 0.0, %v265
  %v267 = vpop.f32.mrb[0].mxu0
  %268 = vdwg.mxu0
  %v269 = vadd.f32 %v189, %v266
  %v270 = vxor.u32 %v269, 2147483648
  %v271 = vmul.f32 %v270, 1.442695
  %v272 = vpow.pop %v271
  %v273 = vadd.f32 %v272, 1.0
  %v274 = vrcp.pop %v273
  %v275 = vmul.f32 1.0, %v274
  %v276 = vtanh.pop %v269
  %v277 = vmul.f32 %v275, 0.0
  %279 = vrot.lane.b32.xlu0 %v276, 64
  %v280 = vpop.permute.xlu0 %279
  %v282 = vmul.f32 %v275, %v280
  %284 = vrot.lane.b32.xlu0 %v282, 32
  %v285 = vpop.permute.xlu0 %284
  %v287 = vadd.f32 %v277, %v285
  %v288 = vtanh.pop %v287
  %290 = vrot.lane.b32.xlu0 %v288, 64
  %v291 = vpop.permute.xlu0 %290
  %v293 = vmul.f32 %v275, %v291
  %295 = vrot.lane.b32.xlu0 %v293, 32
  %v296 = vpop.permute.xlu0 %295
  %298 = vst.msk [vmem:[#allocation4] sm:$0xff] %vm195, %v296
  %v299 = vld [vmem:[#allocation4] sm:$0xff]
  %v300 = vld [vmem:[%s4] sm:$0xff]
  %v301 = vld [vmem:[%s4 + $0x8] sm:$0xff]
  %v302 = vld [vmem:[%s4 + $0x10] sm:$0xff]
  %v303 = vld [vmem:[%s4 + $0x18] sm:$0xff]
  %v304 = vld [vmem:[%s4 + $0x20] sm:$0xff]
  %v305 = vld [vmem:[%s4 + $0x28] sm:$0xff]
  %v306 = vld [vmem:[%s4 + $0x30] sm:$0xff]
  %v307 = vld [vmem:[%s4 + $0x38] sm:$0xff]
  %v308 = vld [vmem:[%s5] sm:$0x1]
  %v310 = vlaneseq
  %v311 = vshrl.u32 %v310, 7
  %v312 = vsub.s32 0, %v311
  %v313 = vrot.slane %v308, %v312
  %v316 = vsel %vm187, %v299, 0
  %318 = vmatprep.subr.mxu0 0.0
  %319 = vmatpush1.msra.mxu0 %v300
  %320 = vmatprep.subr.mxu0 0.0
  %321 = vmatpush1.msra.mxu0 %v301
  %322 = vmatprep.subr.mxu0 0.0
  %323 = vmatpush1.msra.mxu0 %v302
  %324 = vmatprep.subr.mxu0 0.0
  %325 = vmatpush1.msra.mxu0 %v303
  %326 = vmatprep.subr.mxu0 0.0
  %327 = vmatpush1.msra.mxu0 %v304
  %328 = vmatprep.subr.mxu0 0.0
  %329 = vmatpush1.msra.mxu0 %v305
  %330 = vmatprep.subr.mxu0 0.0
  %331 = vmatpush1.msra.mxu0 %v306
  %332 = vmatprep.subr.mxu0 0.0
  %333 = vmatpush1.msra.mxu0 %v307
  %334 = vmatprep.subr.mxu0 0.0
  %335 = vmatpush1.msra.mxu0 0.0
  %336 = vmatprep.subr.mxu0 0.0
  %337 = vmatpush1.msra.mxu0 0.0
  %338 = vmatprep.subr.mxu0 0.0
  %339 = vmatpush1.msra.mxu0 0.0
  %340 = vmatprep.subr.mxu0 0.0
  %341 = vmatpush1.msra.mxu0 0.0
  %342 = vmatprep.subr.mxu0 0.0
  %343 = vmatpush1.msra.mxu0 0.0
  %344 = vmatprep.subr.mxu0 0.0
  %345 = vmatpush1.msra.mxu0 0.0
  %346 = vmatprep.subr.mxu0 0.0
  %347 = vmatpush1.msra.mxu0 0.0
  %348 = vmatprep.subr.mxu0 0.0
  %349 = vmatpush1.msra.mxu0 0.0
  %350 = vmatprep.subr.mxu0 0.0
  %351 = vmatpush1.msra.mxu0 0.0
  %352 = vmatprep.subr.mxu0 0.0
  %353 = vmatpush1.msra.mxu0 0.0
  %354 = vmatprep.subr.mxu0 0.0
  %355 = vmatpush1.msra.mxu0 0.0
  %356 = vmatprep.subr.mxu0 0.0
  %357 = vmatpush1.msra.mxu0 0.0
  %358 = vmatprep.subr.mxu0 0.0
  %359 = vmatpush1.msra.mxu0 0.0
  %360 = vmatprep.subr.mxu0 0.0
  %361 = vmatpush1.msra.mxu0 0.0
  %362 = vmatprep.subr.mxu0 0.0
  %363 = vmatpush1.msra.mxu0 0.0
  %364 = vmatprep.subr.mxu0 0.0
  %365 = vmatpush1.msra.mxu0 0.0
  %366 = vmatprep.subr.mxu0 0.0
  %367 = vmatpush1.msra.mxu0 0.0
  %368 = vmatprep.subr.mxu0 0.0
  %369 = vmatpush1.msra.mxu0 0.0
  %370 = vmatprep.subr.mxu0 0.0
  %371 = vmatpush1.msra.mxu0 0.0
  %372 = vmatprep.subr.mxu0 0.0
  %373 = vmatpush1.msra.mxu0 0.0
  %374 = vmatprep.subr.mxu0 0.0
  %375 = vmatpush1.msra.mxu0 0.0
  %376 = vmatprep.subr.mxu0 0.0
  %377 = vmatpush1.msra.mxu0 0.0
  %378 = vmatprep.subr.mxu0 0.0
  %379 = vmatpush1.msra.mxu0 0.0
  %380 = vmatprep.subr.mxu0 0.0
  %381 = vmatpush1.msra.mxu0 0.0
  %382 = vmatprep.mubr.f32.mxu0 0.0
  %383 = vmatmul.mubr.f32.gmra.mrb[0].mxu0 %v316
  %v384 = vpop.f32.mrb[0].mxu0
  %v385 = vadd.f32 %v313, %v384
  %v386 = vpop.f32.mrb[0].mxu0
  %387 = vdwg.mxu0
  %v388 = vxor.u32 %v385, 2147483648
  %v389 = vmul.f32 %v388, 1.442695
  %v390 = vpow.pop %v389
  %v391 = vadd.f32 %v390, 1.0
  %v392 = vrcp.pop %v391
  %v393 = vmul.f32 1.0, %v392
  %v394 = vtanh.pop %v385
  %v395 = vmul.f32 %v393, 0.0
  %397 = vrot.lane.b32.xlu0 %v394, 64
  %v398 = vpop.permute.xlu0 %397
  %v400 = vmul.f32 %v393, %v398
  %402 = vrot.lane.b32.xlu0 %v400, 32
  %v403 = vpop.permute.xlu0 %402
  %v405 = vadd.f32 %v395, %v403
  %v406 = vtanh.pop %v405
  %408 = vrot.lane.b32.xlu0 %v406, 64
  %v409 = vpop.permute.xlu0 %408
  %v411 = vmul.f32 %v393, %v409
  %413 = vrot.lane.b32.xlu0 %v411, 64
  %v414 = vpop.permute.xlu0 %413
  %vm416 = vcmask 523520
  %417 = vst.msk [vmem:[#allocation4] sm:$0xff] %vm416, %v414
  %418 = vrot.lane.b32.xlu0 %v411, 32
  %v419 = vpop.permute.xlu0 %418
  %421 = vst.msk [vmem:[#allocation3] sm:$0xff] %vm195, %v419
  %s422 = scalar_lea.vmem [#allocation2], 8
  %v423 = vld [vmem:[%s422] sm:$0xff]
  %v424 = vld [vmem:[#allocation4] sm:$0xff]
  %v425 = vld [vmem:[%s2] sm:$0xff]
  %v426 = vld [vmem:[%s2 + $0x8] sm:$0xff]
  %v427 = vld [vmem:[%s2 + $0x10] sm:$0xff]
  %v428 = vld [vmem:[%s2 + $0x18] sm:$0xff]
  %v430 = vsel %vm195, %v424, 0
  %432 = vmatprep.subr.mxu0 0.0
  %433 = vmatpush1.msra.mxu0 %v425
  %434 = vmatprep.subr.mxu0 0.0
  %435 = vmatpush1.msra.mxu0 %v426
  %436 = vmatprep.subr.mxu0 0.0
  %437 = vmatpush1.msra.mxu0 %v427
  %438 = vmatprep.subr.mxu0 0.0
  %439 = vmatpush1.msra.mxu0 %v428
  %440 = vmatprep.subr.mxu0 0.0
  %441 = vmatpush1.msra.mxu0 0.0
  %442 = vmatprep.subr.mxu0 0.0
  %443 = vmatpush1.msra.mxu0 0.0
  %444 = vmatprep.subr.mxu0 0.0
  %445 = vmatpush1.msra.mxu0 0.0
  %446 = vmatprep.subr.mxu0 0.0
  %447 = vmatpush1.msra.mxu0 0.0
  %448 = vmatprep.subr.mxu0 0.0
  %449 = vmatpush1.msra.mxu0 0.0
  %450 = vmatprep.subr.mxu0 0.0
  %451 = vmatpush1.msra.mxu0 0.0
  %452 = vmatprep.subr.mxu0 0.0
  %453 = vmatpush1.msra.mxu0 0.0
  %454 = vmatprep.subr.mxu0 0.0
  %455 = vmatpush1.msra.mxu0 0.0
  %456 = vmatprep.subr.mxu0 0.0
  %457 = vmatpush1.msra.mxu0 0.0
  %458 = vmatprep.subr.mxu0 0.0
  %459 = vmatpush1.msra.mxu0 0.0
  %460 = vmatprep.subr.mxu0 0.0
  %461 = vmatpush1.msra.mxu0 0.0
  %462 = vmatprep.subr.mxu0 0.0
  %463 = vmatpush1.msra.mxu0 0.0
  %464 = vmatprep.subr.mxu0 0.0
  %465 = vmatpush1.msra.mxu0 0.0
  %466 = vmatprep.subr.mxu0 0.0
  %467 = vmatpush1.msra.mxu0 0.0
  %468 = vmatprep.subr.mxu0 0.0
  %469 = vmatpush1.msra.mxu0 0.0
  %470 = vmatprep.subr.mxu0 0.0
  %471 = vmatpush1.msra.mxu0 0.0
  %472 = vmatprep.subr.mxu0 0.0
  %473 = vmatpush1.msra.mxu0 0.0
  %474 = vmatprep.subr.mxu0 0.0
  %475 = vmatpush1.msra.mxu0 0.0
  %476 = vmatprep.subr.mxu0 0.0
  %477 = vmatpush1.msra.mxu0 0.0
  %478 = vmatprep.subr.mxu0 0.0
  %479 = vmatpush1.msra.mxu0 0.0
  %480 = vmatprep.subr.mxu0 0.0
  %481 = vmatpush1.msra.mxu0 0.0
  %482 = vmatprep.subr.mxu0 0.0
  %483 = vmatpush1.msra.mxu0 0.0
  %484 = vmatprep.subr.mxu0 0.0
  %485 = vmatpush1.msra.mxu0 0.0
  %486 = vmatprep.subr.mxu0 0.0
  %487 = vmatpush1.msra.mxu0 0.0
  %488 = vmatprep.subr.mxu0 0.0
  %489 = vmatpush1.msra.mxu0 0.0
  %490 = vmatprep.subr.mxu0 0.0
  %491 = vmatpush1.msra.mxu0 0.0
  %492 = vmatprep.subr.mxu0 0.0
  %493 = vmatpush1.msra.mxu0 0.0
  %494 = vmatprep.subr.mxu0 0.0
  %495 = vmatpush1.msra.mxu0 0.0
  %496 = vmatprep.mubr.f32.mxu0 0.0
  %497 = vmatmul.mubr.f32.gmra.mrb[0].mxu0 %v430
  %v498 = vpop.f32.mrb[0].mxu0
  %v499 = vadd.f32 0.0, %v498
  %v500 = vpop.f32.mrb[0].mxu0
  %501 = vdwg.mxu0
  %v502 = vadd.f32 %v423, %v499
  %v503 = vxor.u32 %v502, 2147483648
  %v504 = vmul.f32 %v503, 1.442695
  %v505 = vpow.pop %v504
  %v506 = vadd.f32 %v505, 1.0
  %v507 = vrcp.pop %v506
  %v508 = vmul.f32 1.0, %v507
  %v509 = vtanh.pop %v502
  %v510 = vmul.f32 %v508, %v287
  %512 = vrot.lane.b32.xlu0 %v509, 64
  %v513 = vpop.permute.xlu0 %512
  %v515 = vmul.f32 %v508, %v513
  %517 = vrot.lane.b32.xlu0 %v515, 32
  %v518 = vpop.permute.xlu0 %517
  %v520 = vadd.f32 %v510, %v518
  %v521 = vtanh.pop %v520
  %523 = vrot.lane.b32.xlu0 %v521, 64
  %v524 = vpop.permute.xlu0 %523
  %v526 = vmul.f32 %v508, %v524
  %528 = vrot.lane.b32.xlu0 %v526, 32
  %v529 = vpop.permute.xlu0 %528
  %531 = vst.msk [vmem:[#allocation4] sm:$0xff] %vm195, %v529
  %v532 = vld [vmem:[#allocation4] sm:$0xff]
  %v533 = vld [vmem:[%s4] sm:$0xff]
  %v534 = vld [vmem:[%s4 + $0x8] sm:$0xff]
  %v535 = vld [vmem:[%s4 + $0x10] sm:$0xff]
  %v536 = vld [vmem:[%s4 + $0x18] sm:$0xff]
  %v537 = vld [vmem:[%s4 + $0x20] sm:$0xff]
  %v538 = vld [vmem:[%s4 + $0x28] sm:$0xff]
  %v539 = vld [vmem:[%s4 + $0x30] sm:$0xff]
  %v540 = vld [vmem:[%s4 + $0x38] sm:$0xff]
  %v541 = vld [vmem:[%s5] sm:$0x1]
  %v543 = vlaneseq
  %v544 = vshrl.u32 %v543, 7
  %v545 = vsub.s32 0, %v544
  %v546 = vrot.slane %v541, %v545
  %v549 = vsel %vm187, %v532, 0
  %551 = vmatprep.subr.mxu0 0.0
  %552 = vmatpush1.msra.mxu0 %v533
  %553 = vmatprep.subr.mxu0 0.0
  %554 = vmatpush1.msra.mxu0 %v534
  %555 = vmatprep.subr.mxu0 0.0
  %556 = vmatpush1.msra.mxu0 %v535
  %557 = vmatprep.subr.mxu0 0.0
  %558 = vmatpush1.msra.mxu0 %v536
  %559 = vmatprep.subr.mxu0 0.0
  %560 = vmatpush1.msra.mxu0 %v537
  %561 = vmatprep.subr.mxu0 0.0
  %562 = vmatpush1.msra.mxu0 %v538
  %563 = vmatprep.subr.mxu0 0.0
  %564 = vmatpush1.msra.mxu0 %v539
  %565 = vmatprep.subr.mxu0 0.0
  %566 = vmatpush1.msra.mxu0 %v540
  %567 = vmatprep.subr.mxu0 0.0
  %568 = vmatpush1.msra.mxu0 0.0
  %569 = vmatprep.subr.mxu0 0.0
  %570 = vmatpush1.msra.mxu0 0.0
  %571 = vmatprep.subr.mxu0 0.0
  %572 = vmatpush1.msra.mxu0 0.0
  %573 = vmatprep.subr.mxu0 0.0
  %574 = vmatpush1.msra.mxu0 0.0
  %575 = vmatprep.subr.mxu0 0.0
  %576 = vmatpush1.msra.mxu0 0.0
  %577 = vmatprep.subr.mxu0 0.0
  %578 = vmatpush1.msra.mxu0 0.0
  %579 = vmatprep.subr.mxu0 0.0
  %580 = vmatpush1.msra.mxu0 0.0
  %581 = vmatprep.subr.mxu0 0.0
  %582 = vmatpush1.msra.mxu0 0.0
  %583 = vmatprep.subr.mxu0 0.0
  %584 = vmatpush1.msra.mxu0 0.0
  %585 = vmatprep.subr.mxu0 0.0
  %586 = vmatpush1.msra.mxu0 0.0
  %587 = vmatprep.subr.mxu0 0.0
  %588 = vmatpush1.msra.mxu0 0.0
  %589 = vmatprep.subr.mxu0 0.0
  %590 = vmatpush1.msra.mxu0 0.0
  %591 = vmatprep.subr.mxu0 0.0
  %592 = vmatpush1.msra.mxu0 0.0
  %593 = vmatprep.subr.mxu0 0.0
  %594 = vmatpush1.msra.mxu0 0.0
  %595 = vmatprep.subr.mxu0 0.0
  %596 = vmatpush1.msra.mxu0 0.0
  %597 = vmatprep.subr.mxu0 0.0
  %598 = vmatpush1.msra.mxu0 0.0
  %599 = vmatprep.subr.mxu0 0.0
  %600 = vmatpush1.msra.mxu0 0.0
  %601 = vmatprep.subr.mxu0 0.0
  %602 = vmatpush1.msra.mxu0 0.0
  %603 = vmatprep.subr.mxu0 0.0
  %604 = vmatpush1.msra.mxu0 0.0
  %605 = vmatprep.subr.mxu0 0.0
  %606 = vmatpush1.msra.mxu0 0.0
  %607 = vmatprep.subr.mxu0 0.0
  %608 = vmatpush1.msra.mxu0 0.0
  %609 = vmatprep.subr.mxu0 0.0
  %610 = vmatpush1.msra.mxu0 0.0
  %611 = vmatprep.subr.mxu0 0.0
  %612 = vmatpush1.msra.mxu0 0.0
  %613 = vmatprep.subr.mxu0 0.0
  %614 = vmatpush1.msra.mxu0 0.0
  %615 = vmatprep.mubr.f32.mxu0 0.0
  %616 = vmatmul.mubr.f32.gmra.mrb[0].mxu0 %v549
  %v617 = vpop.f32.mrb[0].mxu0
  %v618 = vadd.f32 %v546, %v617
  %v619 = vpop.f32.mrb[0].mxu0
  %620 = vdwg.mxu0
  %v621 = vxor.u32 %v618, 2147483648
  %v622 = vmul.f32 %v621, 1.442695
  %v623 = vpow.pop %v622
  %v624 = vadd.f32 %v623, 1.0
  %v625 = vrcp.pop %v624
  %v626 = vmul.f32 1.0, %v625
  %v627 = vtanh.pop %v618
  %v628 = vmul.f32 %v626, %v405
  %630 = vrot.lane.b32.xlu0 %v627, 64
  %v631 = vpop.permute.xlu0 %630
  %v633 = vmul.f32 %v626, %v631
  %635 = vrot.lane.b32.xlu0 %v633, 32
  %v636 = vpop.permute.xlu0 %635
  %v638 = vadd.f32 %v628, %v636
  %v639 = vtanh.pop %v638
  %641 = vrot.lane.b32.xlu0 %v639, 64
  %v642 = vpop.permute.xlu0 %641
  %v644 = vmul.f32 %v626, %v642
  %646 = vrot.lane.b32.xlu0 %v644, 64
  %v647 = vpop.permute.xlu0 %646
  %649 = vst.msk [vmem:[#allocation4] sm:$0xff] %vm416, %v647
  %650 = vrot.lane.b32.xlu0 %v644, 32
  %v651 = vpop.permute.xlu0 %650
  %s653 = scalar_lea.vmem [#allocation3], 8
  %654 = vst.msk [vmem:[%s653] sm:$0xff] %vm195, %v651
  %s655 = scalar_lea.vmem [#allocation2], 16
  %v656 = vld [vmem:[%s655] sm:$0xff]
  %v657 = vld [vmem:[#allocation4] sm:$0xff]
  %v658 = vld [vmem:[%s2] sm:$0xff]
  %v659 = vld [vmem:[%s2 + $0x8] sm:$0xff]
  %v660 = vld [vmem:[%s2 + $0x10] sm:$0xff]
  %v661 = vld [vmem:[%s2 + $0x18] sm:$0xff]
  %v663 = vsel %vm195, %v657, 0
  %665 = vmatprep.subr.mxu0 0.0
  %666 = vmatpush1.msra.mxu0 %v658
  %667 = vmatprep.subr.mxu0 0.0
  %668 = vmatpush1.msra.mxu0 %v659
  %669 = vmatprep.subr.mxu0 0.0
  %670 = vmatpush1.msra.mxu0 %v660
  %671 = vmatprep.subr.mxu0 0.0
  %672 = vmatpush1.msra.mxu0 %v661
  %673 = vmatprep.subr.mxu0 0.0
  %674 = vmatpush1.msra.mxu0 0.0
  %675 = vmatprep.subr.mxu0 0.0
  %676 = vmatpush1.msra.mxu0 0.0
  %677 = vmatprep.subr.mxu0 0.0
  %678 = vmatpush1.msra.mxu0 0.0
  %679 = vmatprep.subr.mxu0 0.0
  %680 = vmatpush1.msra.mxu0 0.0
  %681 = vmatprep.subr.mxu0 0.0
  %682 = vmatpush1.msra.mxu0 0.0
  %683 = vmatprep.subr.mxu0 0.0
  %684 = vmatpush1.msra.mxu0 0.0
  %685 = vmatprep.subr.mxu0 0.0
  %686 = vmatpush1.msra.mxu0 0.0
  %687 = vmatprep.subr.mxu0 0.0
  %688 = vmatpush1.msra.mxu0 0.0
  %689 = vmatprep.subr.mxu0 0.0
  %690 = vmatpush1.msra.mxu0 0.0
  %691 = vmatprep.subr.mxu0 0.0
  %692 = vmatpush1.msra.mxu0 0.0
  %693 = vmatprep.subr.mxu0 0.0
  %694 = vmatpush1.msra.mxu0 0.0
  %695 = vmatprep.subr.mxu0 0.0
  %696 = vmatpush1.msra.mxu0 0.0
  %697 = vmatprep.subr.mxu0 0.0
  %698 = vmatpush1.msra.mxu0 0.0
  %699 = vmatprep.subr.mxu0 0.0
  %700 = vmatpush1.msra.mxu0 0.0
  %701 = vmatprep.subr.mxu0 0.0
  %702 = vmatpush1.msra.mxu0 0.0
  %703 = vmatprep.subr.mxu0 0.0
  %704 = vmatpush1.msra.mxu0 0.0
  %705 = vmatprep.subr.mxu0 0.0
  %706 = vmatpush1.msra.mxu0 0.0
  %707 = vmatprep.subr.mxu0 0.0
  %708 = vmatpush1.msra.mxu0 0.0
  %709 = vmatprep.subr.mxu0 0.0
  %710 = vmatpush1.msra.mxu0 0.0
  %711 = vmatprep.subr.mxu0 0.0
  %712 = vmatpush1.msra.mxu0 0.0
  %713 = vmatprep.subr.mxu0 0.0
  %714 = vmatpush1.msra.mxu0 0.0
  %715 = vmatprep.subr.mxu0 0.0
  %716 = vmatpush1.msra.mxu0 0.0
  %717 = vmatprep.subr.mxu0 0.0
  %718 = vmatpush1.msra.mxu0 0.0
  %719 = vmatprep.subr.mxu0 0.0
  %720 = vmatpush1.msra.mxu0 0.0
  %721 = vmatprep.subr.mxu0 0.0
  %722 = vmatpush1.msra.mxu0 0.0
  %723 = vmatprep.subr.mxu0 0.0
  %724 = vmatpush1.msra.mxu0 0.0
  %725 = vmatprep.subr.mxu0 0.0
  %726 = vmatpush1.msra.mxu0 0.0
  %727 = vmatprep.subr.mxu0 0.0
  %728 = vmatpush1.msra.mxu0 0.0
  %729 = vmatprep.mubr.f32.mxu0 0.0
  %730 = vmatmul.mubr.f32.gmra.mrb[0].mxu0 %v663
  %v731 = vpop.f32.mrb[0].mxu0
  %v732 = vadd.f32 0.0, %v731
  %v733 = vpop.f32.mrb[0].mxu0
  %734 = vdwg.mxu0
  %v735 = vadd.f32 %v656, %v732
  %v736 = vxor.u32 %v735, 2147483648
  %v737 = vmul.f32 %v736, 1.442695
  %v738 = vpow.pop %v737
  %v739 = vadd.f32 %v738, 1.0
  %v740 = vrcp.pop %v739
  %v741 = vmul.f32 1.0, %v740
  %v742 = vtanh.pop %v735
  %v743 = vmul.f32 %v741, %v520
  %745 = vrot.lane.b32.xlu0 %v742, 64
  %v746 = vpop.permute.xlu0 %745
  %v748 = vmul.f32 %v741, %v746
  %750 = vrot.lane.b32.xlu0 %v748, 32
  %v751 = vpop.permute.xlu0 %750
  %v753 = vadd.f32 %v743, %v751
  %v754 = vtanh.pop %v753
  %756 = vrot.lane.b32.xlu0 %v754, 64
  %v757 = vpop.permute.xlu0 %756
  %v759 = vmul.f32 %v741, %v757
  %761 = vrot.lane.b32.xlu0 %v759, 32
  %v762 = vpop.permute.xlu0 %761
  %764 = vst.msk [vmem:[#allocation4] sm:$0xff] %vm195, %v762
  %v765 = vld [vmem:[#allocation4] sm:$0xff]
  %v766 = vld [vmem:[%s4] sm:$0xff]
  %v767 = vld [vmem:[%s4 + $0x8] sm:$0xff]
  %v768 = vld [vmem:[%s4 + $0x10] sm:$0xff]
  %v769 = vld [vmem:[%s4 + $0x18] sm:$0xff]
  %v770 = vld [vmem:[%s4 + $0x20] sm:$0xff]
  %v771 = vld [vmem:[%s4 + $0x28] sm:$0xff]
  %v772 = vld [vmem:[%s4 + $0x30] sm:$0xff]
  %v773 = vld [vmem:[%s4 + $0x38] sm:$0xff]
  %v774 = vld [vmem:[%s5] sm:$0x1]
  %v776 = vlaneseq
  %v777 = vshrl.u32 %v776, 7
  %v778 = vsub.s32 0, %v777
  %v779 = vrot.slane %v774, %v778
  %v782 = vsel %vm187, %v765, 0
  %784 = vmatprep.subr.mxu0 0.0
  %785 = vmatpush1.msra.mxu0 %v766
  %786 = vmatprep.subr.mxu0 0.0
  %787 = vmatpush1.msra.mxu0 %v767
  %788 = vmatprep.subr.mxu0 0.0
  %789 = vmatpush1.msra.mxu0 %v768
  %790 = vmatprep.subr.mxu0 0.0
  %791 = vmatpush1.msra.mxu0 %v769
  %792 = vmatprep.subr.mxu0 0.0
  %793 = vmatpush1.msra.mxu0 %v770
  %794 = vmatprep.subr.mxu0 0.0
  %795 = vmatpush1.msra.mxu0 %v771
  %796 = vmatprep.subr.mxu0 0.0
  %797 = vmatpush1.msra.mxu0 %v772
  %798 = vmatprep.subr.mxu0 0.0
  %799 = vmatpush1.msra.mxu0 %v773
  %800 = vmatprep.subr.mxu0 0.0
  %801 = vmatpush1.msra.mxu0 0.0
  %802 = vmatprep.subr.mxu0 0.0
  %803 = vmatpush1.msra.mxu0 0.0
  %804 = vmatprep.subr.mxu0 0.0
  %805 = vmatpush1.msra.mxu0 0.0
  %806 = vmatprep.subr.mxu0 0.0
  %807 = vmatpush1.msra.mxu0 0.0
  %808 = vmatprep.subr.mxu0 0.0
  %809 = vmatpush1.msra.mxu0 0.0
  %810 = vmatprep.subr.mxu0 0.0
  %811 = vmatpush1.msra.mxu0 0.0
  %812 = vmatprep.subr.mxu0 0.0
  %813 = vmatpush1.msra.mxu0 0.0
  %814 = vmatprep.subr.mxu0 0.0
  %815 = vmatpush1.msra.mxu0 0.0
  %816 = vmatprep.subr.mxu0 0.0
  %817 = vmatpush1.msra.mxu0 0.0
  %818 = vmatprep.subr.mxu0 0.0
  %819 = vmatpush1.msra.mxu0 0.0
  %820 = vmatprep.subr.mxu0 0.0
  %821 = vmatpush1.msra.mxu0 0.0
  %822 = vmatprep.subr.mxu0 0.0
  %823 = vmatpush1.msra.mxu0 0.0
  %824 = vmatprep.subr.mxu0 0.0
  %825 = vmatpush1.msra.mxu0 0.0
  %826 = vmatprep.subr.mxu0 0.0
  %827 = vmatpush1.msra.mxu0 0.0
  %828 = vmatprep.subr.mxu0 0.0
  %829 = vmatpush1.msra.mxu0 0.0
  %830 = vmatprep.subr.mxu0 0.0
  %831 = vmatpush1.msra.mxu0 0.0
  %832 = vmatprep.subr.mxu0 0.0
  %833 = vmatpush1.msra.mxu0 0.0
  %834 = vmatprep.subr.mxu0 0.0
  %835 = vmatpush1.msra.mxu0 0.0
  %836 = vmatprep.subr.mxu0 0.0
  %837 = vmatpush1.msra.mxu0 0.0
  %838 = vmatprep.subr.mxu0 0.0
  %839 = vmatpush1.msra.mxu0 0.0
  %840 = vmatprep.subr.mxu0 0.0
  %841 = vmatpush1.msra.mxu0 0.0
  %842 = vmatprep.subr.mxu0 0.0
  %843 = vmatpush1.msra.mxu0 0.0
  %844 = vmatprep.subr.mxu0 0.0
  %845 = vmatpush1.msra.mxu0 0.0
  %846 = vmatprep.subr.mxu0 0.0
  %847 = vmatpush1.msra.mxu0 0.0
  %848 = vmatprep.mubr.f32.mxu0 0.0
  %849 = vmatmul.mubr.f32.gmra.mrb[0].mxu0 %v782
  %v850 = vpop.f32.mrb[0].mxu0
  %v851 = vadd.f32 %v779, %v850
  %v852 = vpop.f32.mrb[0].mxu0
  %853 = vdwg.mxu0
  %v854 = vxor.u32 %v851, 2147483648
  %v855 = vmul.f32 %v854, 1.442695
  %v856 = vpow.pop %v855
  %v857 = vadd.f32 %v856, 1.0
  %v858 = vrcp.pop %v857
  %v859 = vmul.f32 1.0, %v858
  %v860 = vtanh.pop %v851
  %v861 = vmul.f32 %v859, %v638
  %863 = vrot.lane.b32.xlu0 %v860, 64
  %v864 = vpop.permute.xlu0 %863
  %v866 = vmul.f32 %v859, %v864
  %868 = vrot.lane.b32.xlu0 %v866, 32
  %v869 = vpop.permute.xlu0 %868
  %v871 = vadd.f32 %v861, %v869
  %v872 = vtanh.pop %v871
  %874 = vrot.lane.b32.xlu0 %v872, 64
  %v875 = vpop.permute.xlu0 %874
  %v877 = vmul.f32 %v859, %v875
  %879 = vrot.lane.b32.xlu0 %v877, 64
  %v880 = vpop.permute.xlu0 %879
  %882 = vst.msk [vmem:[#allocation4] sm:$0xff] %vm416, %v880
  %883 = vrot.lane.b32.xlu0 %v877, 32
  %v884 = vpop.permute.xlu0 %883
  %s886 = scalar_lea.vmem [#allocation3], 16
  %887 = vst.msk [vmem:[%s886] sm:$0xff] %vm195, %v884
  %s888 = scalar_lea.vmem [#allocation2], 24
  %v889 = vld [vmem:[%s888] sm:$0xff]
  %v890 = vld [vmem:[#allocation4] sm:$0xff]
  %v891 = vld [vmem:[%s2] sm:$0xff]
  %v892 = vld [vmem:[%s2 + $0x8] sm:$0xff]
  %v893 = vld [vmem:[%s2 + $0x10] sm:$0xff]
  %v894 = vld [vmem:[%s2 + $0x18] sm:$0xff]
  %v896 = vsel %vm195, %v890, 0
  %898 = vmatprep.subr.mxu0 0.0
  %899 = vmatpush1.msra.mxu0 %v891
  %900 = vmatprep.subr.mxu0 0.0
  %901 = vmatpush1.msra.mxu0 %v892
  %902 = vmatprep.subr.mxu0 0.0
  %903 = vmatpush1.msra.mxu0 %v893
  %904 = vmatprep.subr.mxu0 0.0
  %905 = vmatpush1.msra.mxu0 %v894
  %906 = vmatprep.subr.mxu0 0.0
  %907 = vmatpush1.msra.mxu0 0.0
  %908 = vmatprep.subr.mxu0 0.0
  %909 = vmatpush1.msra.mxu0 0.0
  %910 = vmatprep.subr.mxu0 0.0
  %911 = vmatpush1.msra.mxu0 0.0
  %912 = vmatprep.subr.mxu0 0.0
  %913 = vmatpush1.msra.mxu0 0.0
  %914 = vmatprep.subr.mxu0 0.0
  %915 = vmatpush1.msra.mxu0 0.0
  %916 = vmatprep.subr.mxu0 0.0
  %917 = vmatpush1.msra.mxu0 0.0
  %918 = vmatprep.subr.mxu0 0.0
  %919 = vmatpush1.msra.mxu0 0.0
  %920 = vmatprep.subr.mxu0 0.0
  %921 = vmatpush1.msra.mxu0 0.0
  %922 = vmatprep.subr.mxu0 0.0
  %923 = vmatpush1.msra.mxu0 0.0
  %924 = vmatprep.subr.mxu0 0.0
  %925 = vmatpush1.msra.mxu0 0.0
  %926 = vmatprep.subr.mxu0 0.0
  %927 = vmatpush1.msra.mxu0 0.0
  %928 = vmatprep.subr.mxu0 0.0
  %929 = vmatpush1.msra.mxu0 0.0
  %930 = vmatprep.subr.mxu0 0.0
  %931 = vmatpush1.msra.mxu0 0.0
  %932 = vmatprep.subr.mxu0 0.0
  %933 = vmatpush1.msra.mxu0 0.0
  %934 = vmatprep.subr.mxu0 0.0
  %935 = vmatpush1.msra.mxu0 0.0
  %936 = vmatprep.subr.mxu0 0.0
  %937 = vmatpush1.msra.mxu0 0.0
  %938 = vmatprep.subr.mxu0 0.0
  %939 = vmatpush1.msra.mxu0 0.0
  %940 = vmatprep.subr.mxu0 0.0
  %941 = vmatpush1.msra.mxu0 0.0
  %942 = vmatprep.subr.mxu0 0.0
  %943 = vmatpush1.msra.mxu0 0.0
  %944 = vmatprep.subr.mxu0 0.0
  %945 = vmatpush1.msra.mxu0 0.0
  %946 = vmatprep.subr.mxu0 0.0
  %947 = vmatpush1.msra.mxu0 0.0
  %948 = vmatprep.subr.mxu0 0.0
  %949 = vmatpush1.msra.mxu0 0.0
  %950 = vmatprep.subr.mxu0 0.0
  %951 = vmatpush1.msra.mxu0 0.0
  %952 = vmatprep.subr.mxu0 0.0
  %953 = vmatpush1.msra.mxu0 0.0
  %954 = vmatprep.subr.mxu0 0.0
  %955 = vmatpush1.msra.mxu0 0.0
  %956 = vmatprep.subr.mxu0 0.0
  %957 = vmatpush1.msra.mxu0 0.0
  %958 = vmatprep.subr.mxu0 0.0
  %959 = vmatpush1.msra.mxu0 0.0
  %960 = vmatprep.subr.mxu0 0.0
  %961 = vmatpush1.msra.mxu0 0.0
  %962 = vmatprep.mubr.f32.mxu0 0.0
  %963 = vmatmul.mubr.f32.gmra.mrb[0].mxu0 %v896
  %v964 = vpop.f32.mrb[0].mxu0
  %v965 = vadd.f32 0.0, %v964
  %v966 = vpop.f32.mrb[0].mxu0
  %967 = vdwg.mxu0
  %v968 = vadd.f32 %v889, %v965
  %v969 = vxor.u32 %v968, 2147483648
  %v970 = vmul.f32 %v969, 1.442695
  %v971 = vpow.pop %v970
  %v972 = vadd.f32 %v971, 1.0
  %v973 = vrcp.pop %v972
  %v974 = vmul.f32 1.0, %v973
  %v975 = vtanh.pop %v968
  %v976 = vmul.f32 %v974, %v753
  %978 = vrot.lane.b32.xlu0 %v975, 64
  %v979 = vpop.permute.xlu0 %978
  %v981 = vmul.f32 %v974, %v979
  %983 = vrot.lane.b32.xlu0 %v981, 32
  %v984 = vpop.permute.xlu0 %983
  %v986 = vadd.f32 %v976, %v984
  %v987 = vtanh.pop %v986
  %989 = vrot.lane.b32.xlu0 %v987, 64
  %v990 = vpop.permute.xlu0 %989
  %v992 = vmul.f32 %v974, %v990
  %994 = vrot.lane.b32.xlu0 %v992, 32
  %v995 = vpop.permute.xlu0 %994
  %997 = vst.msk [vmem:[#allocation4] sm:$0xff] %vm195, %v995
  %v998 = vld [vmem:[#allocation4] sm:$0xff]
  %v999 = vld [vmem:[%s4] sm:$0xff]
  %v1000 = vld [vmem:[%s4 + $0x8] sm:$0xff]
  %v1001 = vld [vmem:[%s4 + $0x10] sm:$0xff]
  %v1002 = vld [vmem:[%s4 + $0x18] sm:$0xff]
  %v1003 = vld [vmem:[%s4 + $0x20] sm:$0xff]
  %v1004 = vld [vmem:[%s4 + $0x28] sm:$0xff]
  %v1005 = vld [vmem:[%s4 + $0x30] sm:$0xff]
  %v1006 = vld [vmem:[%s4 + $0x38] sm:$0xff]
  %v1007 = vld [vmem:[%s5] sm:$0x1]
  %v1009 = vlaneseq
  %v1010 = vshrl.u32 %v1009, 7
  %v1011 = vsub.s32 0, %v1010
  %v1012 = vrot.slane %v1007, %v1011
  %v1015 = vsel %vm187, %v998, 0
  %1017 = vmatprep.subr.mxu0 0.0
  %1018 = vmatpush1.msra.mxu0 %v999
  %1019 = vmatprep.subr.mxu0 0.0
  %1020 = vmatpush1.msra.mxu0 %v1000
  %1021 = vmatprep.subr.mxu0 0.0
  %1022 = vmatpush1.msra.mxu0 %v1001
  %1023 = vmatprep.subr.mxu0 0.0
  %1024 = vmatpush1.msra.mxu0 %v1002
  %1025 = vmatprep.subr.mxu0 0.0
  %1026 = vmatpush1.msra.mxu0 %v1003
  %1027 = vmatprep.subr.mxu0 0.0
  %1028 = vmatpush1.msra.mxu0 %v1004
  %1029 = vmatprep.subr.mxu0 0.0
  %1030 = vmatpush1.msra.mxu0 %v1005
  %1031 = vmatprep.subr.mxu0 0.0
  %1032 = vmatpush1.msra.mxu0 %v1006
  %1033 = vmatprep.subr.mxu0 0.0
  %1034 = vmatpush1.msra.mxu0 0.0
  %1035 = vmatprep.subr.mxu0 0.0
  %1036 = vmatpush1.msra.mxu0 0.0
  %1037 = vmatprep.subr.mxu0 0.0
  %1038 = vmatpush1.msra.mxu0 0.0
  %1039 = vmatprep.subr.mxu0 0.0
  %1040 = vmatpush1.msra.mxu0 0.0
  %1041 = vmatprep.subr.mxu0 0.0
  %1042 = vmatpush1.msra.mxu0 0.0
  %1043 = vmatprep.subr.mxu0 0.0
  %1044 = vmatpush1.msra.mxu0 0.0
  %1045 = vmatprep.subr.mxu0 0.0
  %1046 = vmatpush1.msra.mxu0 0.0
  %1047 = vmatprep.subr.mxu0 0.0
  %1048 = vmatpush1.msra.mxu0 0.0
  %1049 = vmatprep.subr.mxu0 0.0
  %1050 = vmatpush1.msra.mxu0 0.0
  %1051 = vmatprep.subr.mxu0 0.0
  %1052 = vmatpush1.msra.mxu0 0.0
  %1053 = vmatprep.subr.mxu0 0.0
  %1054 = vmatpush1.msra.mxu0 0.0
  %1055 = vmatprep.subr.mxu0 0.0
  %1056 = vmatpush1.msra.mxu0 0.0
  %1057 = vmatprep.subr.mxu0 0.0
  %1058 = vmatpush1.msra.mxu0 0.0
  %1059 = vmatprep.subr.mxu0 0.0
  %1060 = vmatpush1.msra.mxu0 0.0
  %1061 = vmatprep.subr.mxu0 0.0
  %1062 = vmatpush1.msra.mxu0 0.0
  %1063 = vmatprep.subr.mxu0 0.0
  %1064 = vmatpush1.msra.mxu0 0.0
  %1065 = vmatprep.subr.mxu0 0.0
  %1066 = vmatpush1.msra.mxu0 0.0
  %1067 = vmatprep.subr.mxu0 0.0
  %1068 = vmatpush1.msra.mxu0 0.0
  %1069 = vmatprep.subr.mxu0 0.0
  %1070 = vmatpush1.msra.mxu0 0.0
  %1071 = vmatprep.subr.mxu0 0.0
  %1072 = vmatpush1.msra.mxu0 0.0
  %1073 = vmatprep.subr.mxu0 0.0
  %1074 = vmatpush1.msra.mxu0 0.0
  %1075 = vmatprep.subr.mxu0 0.0
  %1076 = vmatpush1.msra.mxu0 0.0
  %1077 = vmatprep.subr.mxu0 0.0
  %1078 = vmatpush1.msra.mxu0 0.0
  %1079 = vmatprep.subr.mxu0 0.0
  %1080 = vmatpush1.msra.mxu0 0.0
  %1081 = vmatprep.mubr.f32.mxu0 0.0
  %1082 = vmatmul.mubr.f32.gmra.mrb[0].mxu0 %v1015
  %v1083 = vpop.f32.mrb[0].mxu0
  %v1084 = vadd.f32 %v1012, %v1083
  %v1085 = vpop.f32.mrb[0].mxu0
  %1086 = vdwg.mxu0
  %v1087 = vxor.u32 %v1084, 2147483648
  %v1088 = vmul.f32 %v1087, 1.442695
  %v1089 = vpow.pop %v1088
  %v1090 = vadd.f32 %v1089, 1.0
  %v1091 = vrcp.pop %v1090
  %v1092 = vmul.f32 1.0, %v1091
  %v1093 = vtanh.pop %v1084
  %v1094 = vmul.f32 %v1092, %v871
  %1096 = vrot.lane.b32.xlu0 %v1093, 64
  %v1097 = vpop.permute.xlu0 %1096
  %v1099 = vmul.f32 %v1092, %v1097
  %1101 = vrot.lane.b32.xlu0 %v1099, 32
  %v1102 = vpop.permute.xlu0 %1101
  %v1104 = vadd.f32 %v1094, %v1102
  %v1105 = vtanh.pop %v1104
  %1107 = vrot.lane.b32.xlu0 %v1105, 64
  %v1108 = vpop.permute.xlu0 %1107
  %v1110 = vmul.f32 %v1092, %v1108
  %1112 = vrot.lane.b32.xlu0 %v1110, 64
  %v1113 = vpop.permute.xlu0 %1112
  %1115 = vst.msk [vmem:[#allocation4] sm:$0xff] %vm416, %v1113
  %1116 = vrot.lane.b32.xlu0 %v1110, 32
  %v1117 = vpop.permute.xlu0 %1116
  %s1119 = scalar_lea.vmem [#allocation3], 24
  %1120 = vst.msk [vmem:[%s1119] sm:$0xff] %vm195, %v1117
  %s1121 = scalar_lea.vmem [#allocation2], 32
  %v1122 = vld [vmem:[%s1121] sm:$0xff]
  %v1123 = vld [vmem:[#allocation4] sm:$0xff]
  %v1124 = vld [vmem:[%s2] sm:$0xff]
  %v1125 = vld [vmem:[%s2 + $0x8] sm:$0xff]
  %v1126 = vld [vmem:[%s2 + $0x10] sm:$0xff]
  %v1127 = vld [vmem:[%s2 + $0x18] sm:$0xff]
  %v1129 = vsel %vm195, %v1123, 0
  %1131 = vmatprep.subr.mxu0 0.0
  %1132 = vmatpush1.msra.mxu0 %v1124
  %1133 = vmatprep.subr.mxu0 0.0
  %1134 = vmatpush1.msra.mxu0 %v1125
  %1135 = vmatprep.subr.mxu0 0.0
  %1136 = vmatpush1.msra.mxu0 %v1126
  %1137 = vmatprep.subr.mxu0 0.0
  %1138 = vmatpush1.msra.mxu0 %v1127
  %1139 = vmatprep.subr.mxu0 0.0
  %1140 = vmatpush1.msra.mxu0 0.0
  %1141 = vmatprep.subr.mxu0 0.0
  %1142 = vmatpush1.msra.mxu0 0.0
  %1143 = vmatprep.subr.mxu0 0.0
  %1144 = vmatpush1.msra.mxu0 0.0
  %1145 = vmatprep.subr.mxu0 0.0
  %1146 = vmatpush1.msra.mxu0 0.0
  %1147 = vmatprep.subr.mxu0 0.0
  %1148 = vmatpush1.msra.mxu0 0.0
  %1149 = vmatprep.subr.mxu0 0.0
  %1150 = vmatpush1.msra.mxu0 0.0
  %1151 = vmatprep.subr.mxu0 0.0
  %1152 = vmatpush1.msra.mxu0 0.0
  %1153 = vmatprep.subr.mxu0 0.0
  %1154 = vmatpush1.msra.mxu0 0.0
  %1155 = vmatprep.subr.mxu0 0.0
  %1156 = vmatpush1.msra.mxu0 0.0
  %1157 = vmatprep.subr.mxu0 0.0
  %1158 = vmatpush1.msra.mxu0 0.0
  %1159 = vmatprep.subr.mxu0 0.0
  %1160 = vmatpush1.msra.mxu0 0.0
  %1161 = vmatprep.subr.mxu0 0.0
  %1162 = vmatpush1.msra.mxu0 0.0
  %1163 = vmatprep.subr.mxu0 0.0
  %1164 = vmatpush1.msra.mxu0 0.0
  %1165 = vmatprep.subr.mxu0 0.0
  %1166 = vmatpush1.msra.mxu0 0.0
  %1167 = vmatprep.subr.mxu0 0.0
  %1168 = vmatpush1.msra.mxu0 0.0
  %1169 = vmatprep.subr.mxu0 0.0
  %1170 = vmatpush1.msra.mxu0 0.0
  %1171 = vmatprep.subr.mxu0 0.0
  %1172 = vmatpush1.msra.mxu0 0.0
  %1173 = vmatprep.subr.mxu0 0.0
  %1174 = vmatpush1.msra.mxu0 0.0
  %1175 = vmatprep.subr.mxu0 0.0
  %1176 = vmatpush1.msra.mxu0 0.0
  %1177 = vmatprep.subr.mxu0 0.0
  %1178 = vmatpush1.msra.mxu0 0.0
  %1179 = vmatprep.subr.mxu0 0.0
  %1180 = vmatpush1.msra.mxu0 0.0
  %1181 = vmatprep.subr.mxu0 0.0
  %1182 = vmatpush1.msra.mxu0 0.0
  %1183 = vmatprep.subr.mxu0 0.0
  %1184 = vmatpush1.msra.mxu0 0.0
  %1185 = vmatprep.subr.mxu0 0.0
  %1186 = vmatpush1.msra.mxu0 0.0
  %1187 = vmatprep.subr.mxu0 0.0
  %1188 = vmatpush1.msra.mxu0 0.0
  %1189 = vmatprep.subr.mxu0 0.0
  %1190 = vmatpush1.msra.mxu0 0.0
  %1191 = vmatprep.subr.mxu0 0.0
  %1192 = vmatpush1.msra.mxu0 0.0
  %1193 = vmatprep.subr.mxu0 0.0
  %1194 = vmatpush1.msra.mxu0 0.0
  %1195 = vmatprep.mubr.f32.mxu0 0.0
  %1196 = vmatmul.mubr.f32.gmra.mrb[0].mxu0 %v1129
  %v1197 = vpop.f32.mrb[0].mxu0
  %v1198 = vadd.f32 0.0, %v1197
  %v1199 = vpop.f32.mrb[0].mxu0
  %1200 = vdwg.mxu0
  %v1201 = vadd.f32 %v1122, %v1198
  %v1202 = vxor.u32 %v1201, 2147483648
  %v1203 = vmul.f32 %v1202, 1.442695
  %v1204 = vpow.pop %v1203
  %v1205 = vadd.f32 %v1204, 1.0
  %v1206 = vrcp.pop %v1205
  %v1207 = vmul.f32 1.0, %v1206
  %v1208 = vtanh.pop %v1201
  %v1209 = vmul.f32 %v1207, %v986
  %1211 = vrot.lane.b32.xlu0 %v1208, 64
  %v1212 = vpop.permute.xlu0 %1211
  %v1214 = vmul.f32 %v1207, %v1212
  %1216 = vrot.lane.b32.xlu0 %v1214, 32
  %v1217 = vpop.permute.xlu0 %1216
  %v1219 = vadd.f32 %v1209, %v1217
  %v1220 = vtanh.pop %v1219
  %1222 = vrot.lane.b32.xlu0 %v1220, 64
  %v1223 = vpop.permute.xlu0 %1222
  %v1225 = vmul.f32 %v1207, %v1223
  %1227 = vrot.lane.b32.xlu0 %v1225, 32
  %v1228 = vpop.permute.xlu0 %1227
  %1230 = vst.msk [vmem:[#allocation4] sm:$0xff] %vm195, %v1228
  %v1231 = vld [vmem:[#allocation4] sm:$0xff]
  %v1232 = vld [vmem:[%s4] sm:$0xff]
  %v1233 = vld [vmem:[%s4 + $0x8] sm:$0xff]
  %v1234 = vld [vmem:[%s4 + $0x10] sm:$0xff]
  %v1235 = vld [vmem:[%s4 + $0x18] sm:$0xff]
  %v1236 = vld [vmem:[%s4 + $0x20] sm:$0xff]
  %v1237 = vld [vmem:[%s4 + $0x28] sm:$0xff]
  %v1238 = vld [vmem:[%s4 + $0x30] sm:$0xff]
  %v1239 = vld [vmem:[%s4 + $0x38] sm:$0xff]
  %v1240 = vld [vmem:[%s5] sm:$0x1]
  %v1242 = vlaneseq
  %v1243 = vshrl.u32 %v1242, 7
  %v1244 = vsub.s32 0, %v1243
  %v1245 = vrot.slane %v1240, %v1244
  %v1248 = vsel %vm187, %v1231, 0
  %1250 = vmatprep.subr.mxu0 0.0
  %1251 = vmatpush1.msra.mxu0 %v1232
  %1252 = vmatprep.subr.mxu0 0.0
  %1253 = vmatpush1.msra.mxu0 %v1233
  %1254 = vmatprep.subr.mxu0 0.0
  %1255 = vmatpush1.msra.mxu0 %v1234
  %1256 = vmatprep.subr.mxu0 0.0
  %1257 = vmatpush1.msra.mxu0 %v1235
  %1258 = vmatprep.subr.mxu0 0.0
  %1259 = vmatpush1.msra.mxu0 %v1236
  %1260 = vmatprep.subr.mxu0 0.0
  %1261 = vmatpush1.msra.mxu0 %v1237
  %1262 = vmatprep.subr.mxu0 0.0
  %1263 = vmatpush1.msra.mxu0 %v1238
  %1264 = vmatprep.subr.mxu0 0.0
  %1265 = vmatpush1.msra.mxu0 %v1239
  %1266 = vmatprep.subr.mxu0 0.0
  %1267 = vmatpush1.msra.mxu0 0.0
  %1268 = vmatprep.subr.mxu0 0.0
  %1269 = vmatpush1.msra.mxu0 0.0
  %1270 = vmatprep.subr.mxu0 0.0
  %1271 = vmatpush1.msra.mxu0 0.0
  %1272 = vmatprep.subr.mxu0 0.0
  %1273 = vmatpush1.msra.mxu0 0.0
  %1274 = vmatprep.subr.mxu0 0.0
  %1275 = vmatpush1.msra.mxu0 0.0
  %1276 = vmatprep.subr.mxu0 0.0
  %1277 = vmatpush1.msra.mxu0 0.0
  %1278 = vmatprep.subr.mxu0 0.0
  %1279 = vmatpush1.msra.mxu0 0.0
  %1280 = vmatprep.subr.mxu0 0.0
  %1281 = vmatpush1.msra.mxu0 0.0
  %1282 = vmatprep.subr.mxu0 0.0
  %1283 = vmatpush1.msra.mxu0 0.0
  %1284 = vmatprep.subr.mxu0 0.0
  %1285 = vmatpush1.msra.mxu0 0.0
  %1286 = vmatprep.subr.mxu0 0.0
  %1287 = vmatpush1.msra.mxu0 0.0
  %1288 = vmatprep.subr.mxu0 0.0
  %1289 = vmatpush1.msra.mxu0 0.0
  %1290 = vmatprep.subr.mxu0 0.0
  %1291 = vmatpush1.msra.mxu0 0.0
  %1292 = vmatprep.subr.mxu0 0.0
  %1293 = vmatpush1.msra.mxu0 0.0
  %1294 = vmatprep.subr.mxu0 0.0
  %1295 = vmatpush1.msra.mxu0 0.0
  %1296 = vmatprep.subr.mxu0 0.0
  %1297 = vmatpush1.msra.mxu0 0.0
  %1298 = vmatprep.subr.mxu0 0.0
  %1299 = vmatpush1.msra.mxu0 0.0
  %1300 = vmatprep.subr.mxu0 0.0
  %1301 = vmatpush1.msra.mxu0 0.0
  %1302 = vmatprep.subr.mxu0 0.0
  %1303 = vmatpush1.msra.mxu0 0.0
  %1304 = vmatprep.subr.mxu0 0.0
  %1305 = vmatpush1.msra.mxu0 0.0
  %1306 = vmatprep.subr.mxu0 0.0
  %1307 = vmatpush1.msra.mxu0 0.0
  %1308 = vmatprep.subr.mxu0 0.0
  %1309 = vmatpush1.msra.mxu0 0.0
  %1310 = vmatprep.subr.mxu0 0.0
  %1311 = vmatpush1.msra.mxu0 0.0
  %1312 = vmatprep.subr.mxu0 0.0
  %1313 = vmatpush1.msra.mxu0 0.0
  %1314 = vmatprep.mubr.f32.mxu0 0.0
  %1315 = vmatmul.mubr.f32.gmra.mrb[0].mxu0 %v1248
  %v1316 = vpop.f32.mrb[0].mxu0
  %v1317 = vadd.f32 %v1245, %v1316
  %v1318 = vpop.f32.mrb[0].mxu0
  %1319 = vdwg.mxu0
  %v1320 = vxor.u32 %v1317, 2147483648
  %v1321 = vmul.f32 %v1320, 1.442695
  %v1322 = vpow.pop %v1321
  %v1323 = vadd.f32 %v1322, 1.0
  %v1324 = vrcp.pop %v1323
  %v1325 = vmul.f32 1.0, %v1324
  %v1326 = vtanh.pop %v1317
  %v1327 = vmul.f32 %v1325, %v1104
  %1329 = vrot.lane.b32.xlu0 %v1326, 64
  %v1330 = vpop.permute.xlu0 %1329
  %v1332 = vmul.f32 %v1325, %v1330
  %1334 = vrot.lane.b32.xlu0 %v1332, 32
  %v1335 = vpop.permute.xlu0 %1334
  %v1337 = vadd.f32 %v1327, %v1335
  %v1338 = vtanh.pop %v1337
  %1340 = vrot.lane.b32.xlu0 %v1338, 64
  %v1341 = vpop.permute.xlu0 %1340
  %v1343 = vmul.f32 %v1325, %v1341
  %1345 = vrot.lane.b32.xlu0 %v1343, 64
  %v1346 = vpop.permute.xlu0 %1345
  %1348 = vst.msk [vmem:[#allocation4] sm:$0xff] %vm416, %v1346
  %1349 = vrot.lane.b32.xlu0 %v1343, 32
  %v1350 = vpop.permute.xlu0 %1349
  %s1352 = scalar_lea.vmem [#allocation3], 32
  %1353 = vst.msk [vmem:[%s1352] sm:$0xff] %vm195, %v1350
  %s1354 = scalar_lea.vmem [#allocation2], 40
  %v1355 = vld [vmem:[%s1354] sm:$0xff]
  %v1356 = vld [vmem:[#allocation4] sm:$0xff]
  %v1357 = vld [vmem:[%s2] sm:$0xff]
  %v1358 = vld [vmem:[%s2 + $0x8] sm:$0xff]
  %v1359 = vld [vmem:[%s2 + $0x10] sm:$0xff]
  %v1360 = vld [vmem:[%s2 + $0x18] sm:$0xff]
  %v1362 = vsel %vm195, %v1356, 0
  %1364 = vmatprep.subr.mxu0 0.0
  %1365 = vmatpush1.msra.mxu0 %v1357
  %1366 = vmatprep.subr.mxu0 0.0
  %1367 = vmatpush1.msra.mxu0 %v1358
  %1368 = vmatprep.subr.mxu0 0.0
  %1369 = vmatpush1.msra.mxu0 %v1359
  %1370 = vmatprep.subr.mxu0 0.0
  %1371 = vmatpush1.msra.mxu0 %v1360
  %1372 = vmatprep.subr.mxu0 0.0
  %1373 = vmatpush1.msra.mxu0 0.0
  %1374 = vmatprep.subr.mxu0 0.0
  %1375 = vmatpush1.msra.mxu0 0.0
  %1376 = vmatprep.subr.mxu0 0.0
  %1377 = vmatpush1.msra.mxu0 0.0
  %1378 = vmatprep.subr.mxu0 0.0
  %1379 = vmatpush1.msra.mxu0 0.0
  %1380 = vmatprep.subr.mxu0 0.0
  %1381 = vmatpush1.msra.mxu0 0.0
  %1382 = vmatprep.subr.mxu0 0.0
  %1383 = vmatpush1.msra.mxu0 0.0
  %1384 = vmatprep.subr.mxu0 0.0
  %1385 = vmatpush1.msra.mxu0 0.0
  %1386 = vmatprep.subr.mxu0 0.0
  %1387 = vmatpush1.msra.mxu0 0.0
  %1388 = vmatprep.subr.mxu0 0.0
  %1389 = vmatpush1.msra.mxu0 0.0
  %1390 = vmatprep.subr.mxu0 0.0
  %1391 = vmatpush1.msra.mxu0 0.0
  %1392 = vmatprep.subr.mxu0 0.0
  %1393 = vmatpush1.msra.mxu0 0.0
  %1394 = vmatprep.subr.mxu0 0.0
  %1395 = vmatpush1.msra.mxu0 0.0
  %1396 = vmatprep.subr.mxu0 0.0
  %1397 = vmatpush1.msra.mxu0 0.0
  %1398 = vmatprep.subr.mxu0 0.0
  %1399 = vmatpush1.msra.mxu0 0.0
  %1400 = vmatprep.subr.mxu0 0.0
  %1401 = vmatpush1.msra.mxu0 0.0
  %1402 = vmatprep.subr.mxu0 0.0
  %1403 = vmatpush1.msra.mxu0 0.0
  %1404 = vmatprep.subr.mxu0 0.0
  %1405 = vmatpush1.msra.mxu0 0.0
  %1406 = vmatprep.subr.mxu0 0.0
  %1407 = vmatpush1.msra.mxu0 0.0
  %1408 = vmatprep.subr.mxu0 0.0
  %1409 = vmatpush1.msra.mxu0 0.0
  %1410 = vmatprep.subr.mxu0 0.0
  %1411 = vmatpush1.msra.mxu0 0.0
  %1412 = vmatprep.subr.mxu0 0.0
  %1413 = vmatpush1.msra.mxu0 0.0
  %1414 = vmatprep.subr.mxu0 0.0
  %1415 = vmatpush1.msra.mxu0 0.0
  %1416 = vmatprep.subr.mxu0 0.0
  %1417 = vmatpush1.msra.mxu0 0.0
  %1418 = vmatprep.subr.mxu0 0.0
  %1419 = vmatpush1.msra.mxu0 0.0
  %1420 = vmatprep.subr.mxu0 0.0
  %1421 = vmatpush1.msra.mxu0 0.0
  %1422 = vmatprep.subr.mxu0 0.0
  %1423 = vmatpush1.msra.mxu0 0.0
  %1424 = vmatprep.subr.mxu0 0.0
  %1425 = vmatpush1.msra.mxu0 0.0
  %1426 = vmatprep.subr.mxu0 0.0
  %1427 = vmatpush1.msra.mxu0 0.0
  %1428 = vmatprep.mubr.f32.mxu0 0.0
  %1429 = vmatmul.mubr.f32.gmra.mrb[0].mxu0 %v1362
  %v1430 = vpop.f32.mrb[0].mxu0
  %v1431 = vadd.f32 0.0, %v1430
  %v1432 = vpop.f32.mrb[0].mxu0
  %1433 = vdwg.mxu0
  %v1434 = vadd.f32 %v1355, %v1431
  %v1435 = vxor.u32 %v1434, 2147483648
  %v1436 = vmul.f32 %v1435, 1.442695
  %v1437 = vpow.pop %v1436
  %v1438 = vadd.f32 %v1437, 1.0
  %v1439 = vrcp.pop %v1438
  %v1440 = vmul.f32 1.0, %v1439
  %v1441 = vtanh.pop %v1434
  %v1442 = vmul.f32 %v1440, %v1219
  %1444 = vrot.lane.b32.xlu0 %v1441, 64
  %v1445 = vpop.permute.xlu0 %1444
  %v1447 = vmul.f32 %v1440, %v1445
  %1449 = vrot.lane.b32.xlu0 %v1447, 32
  %v1450 = vpop.permute.xlu0 %1449
  %v1452 = vadd.f32 %v1442, %v1450
  %v1453 = vtanh.pop %v1452
  %1455 = vrot.lane.b32.xlu0 %v1453, 64
  %v1456 = vpop.permute.xlu0 %1455
  %v1458 = vmul.f32 %v1440, %v1456
  %1460 = vrot.lane.b32.xlu0 %v1458, 32
  %v1461 = vpop.permute.xlu0 %1460
  %1463 = vst.msk [vmem:[#allocation4] sm:$0xff] %vm195, %v1461
  %v1464 = vld [vmem:[#allocation4] sm:$0xff]
  %v1465 = vld [vmem:[%s4] sm:$0xff]
  %v1466 = vld [vmem:[%s4 + $0x8] sm:$0xff]
  %v1467 = vld [vmem:[%s4 + $0x10] sm:$0xff]
  %v1468 = vld [vmem:[%s4 + $0x18] sm:$0xff]
  %v1469 = vld [vmem:[%s4 + $0x20] sm:$0xff]
  %v1470 = vld [vmem:[%s4 + $0x28] sm:$0xff]
  %v1471 = vld [vmem:[%s4 + $0x30] sm:$0xff]
  %v1472 = vld [vmem:[%s4 + $0x38] sm:$0xff]
  %v1473 = vld [vmem:[%s5] sm:$0x1]
  %v1475 = vlaneseq
  %v1476 = vshrl.u32 %v1475, 7
  %v1477 = vsub.s32 0, %v1476
  %v1478 = vrot.slane %v1473, %v1477
  %v1481 = vsel %vm187, %v1464, 0
  %1483 = vmatprep.subr.mxu0 0.0
  %1484 = vmatpush1.msra.mxu0 %v1465
  %1485 = vmatprep.subr.mxu0 0.0
  %1486 = vmatpush1.msra.mxu0 %v1466
  %1487 = vmatprep.subr.mxu0 0.0
  %1488 = vmatpush1.msra.mxu0 %v1467
  %1489 = vmatprep.subr.mxu0 0.0
  %1490 = vmatpush1.msra.mxu0 %v1468
  %1491 = vmatprep.subr.mxu0 0.0
  %1492 = vmatpush1.msra.mxu0 %v1469
  %1493 = vmatprep.subr.mxu0 0.0
  %1494 = vmatpush1.msra.mxu0 %v1470
  %1495 = vmatprep.subr.mxu0 0.0
  %1496 = vmatpush1.msra.mxu0 %v1471
  %1497 = vmatprep.subr.mxu0 0.0
  %1498 = vmatpush1.msra.mxu0 %v1472
  %1499 = vmatprep.subr.mxu0 0.0
  %1500 = vmatpush1.msra.mxu0 0.0
  %1501 = vmatprep.subr.mxu0 0.0
  %1502 = vmatpush1.msra.mxu0 0.0
  %1503 = vmatprep.subr.mxu0 0.0
  %1504 = vmatpush1.msra.mxu0 0.0
  %1505 = vmatprep.subr.mxu0 0.0
  %1506 = vmatpush1.msra.mxu0 0.0
  %1507 = vmatprep.subr.mxu0 0.0
  %1508 = vmatpush1.msra.mxu0 0.0
  %1509 = vmatprep.subr.mxu0 0.0
  %1510 = vmatpush1.msra.mxu0 0.0
  %1511 = vmatprep.subr.mxu0 0.0
  %1512 = vmatpush1.msra.mxu0 0.0
  %1513 = vmatprep.subr.mxu0 0.0
  %1514 = vmatpush1.msra.mxu0 0.0
  %1515 = vmatprep.subr.mxu0 0.0
  %1516 = vmatpush1.msra.mxu0 0.0
  %1517 = vmatprep.subr.mxu0 0.0
  %1518 = vmatpush1.msra.mxu0 0.0
  %1519 = vmatprep.subr.mxu0 0.0
  %1520 = vmatpush1.msra.mxu0 0.0
  %1521 = vmatprep.subr.mxu0 0.0
  %1522 = vmatpush1.msra.mxu0 0.0
  %1523 = vmatprep.subr.mxu0 0.0
  %1524 = vmatpush1.msra.mxu0 0.0
  %1525 = vmatprep.subr.mxu0 0.0
  %1526 = vmatpush1.msra.mxu0 0.0
  %1527 = vmatprep.subr.mxu0 0.0
  %1528 = vmatpush1.msra.mxu0 0.0
  %1529 = vmatprep.subr.mxu0 0.0
  %1530 = vmatpush1.msra.mxu0 0.0
  %1531 = vmatprep.subr.mxu0 0.0
  %1532 = vmatpush1.msra.mxu0 0.0
  %1533 = vmatprep.subr.mxu0 0.0
  %1534 = vmatpush1.msra.mxu0 0.0
  %1535 = vmatprep.subr.mxu0 0.0
  %1536 = vmatpush1.msra.mxu0 0.0
  %1537 = vmatprep.subr.mxu0 0.0
  %1538 = vmatpush1.msra.mxu0 0.0
  %1539 = vmatprep.subr.mxu0 0.0
  %1540 = vmatpush1.msra.mxu0 0.0
  %1541 = vmatprep.subr.mxu0 0.0
  %1542 = vmatpush1.msra.mxu0 0.0
  %1543 = vmatprep.subr.mxu0 0.0
  %1544 = vmatpush1.msra.mxu0 0.0
  %1545 = vmatprep.subr.mxu0 0.0
  %1546 = vmatpush1.msra.mxu0 0.0
  %1547 = vmatprep.mubr.f32.mxu0 0.0
  %1548 = vmatmul.mubr.f32.gmra.mrb[0].mxu0 %v1481
  %v1549 = vpop.f32.mrb[0].mxu0
  %v1550 = vadd.f32 %v1478, %v1549
  %v1551 = vpop.f32.mrb[0].mxu0
  %1552 = vdwg.mxu0
  %v1553 = vxor.u32 %v1550, 2147483648
  %v1554 = vmul.f32 %v1553, 1.442695
  %v1555 = vpow.pop %v1554
  %v1556 = vadd.f32 %v1555, 1.0
  %v1557 = vrcp.pop %v1556
  %v1558 = vmul.f32 1.0, %v1557
  %v1559 = vtanh.pop %v1550
  %v1560 = vmul.f32 %v1558, %v1337
  %1562 = vrot.lane.b32.xlu0 %v1559, 64
  %v1563 = vpop.permute.xlu0 %1562
  %v1565 = vmul.f32 %v1558, %v1563
  %1567 = vrot.lane.b32.xlu0 %v1565, 32
  %v1568 = vpop.permute.xlu0 %1567
  %v1570 = vadd.f32 %v1560, %v1568
  %v1571 = vtanh.pop %v1570
  %1573 = vrot.lane.b32.xlu0 %v1571, 64
  %v1574 = vpop.permute.xlu0 %1573
  %v1576 = vmul.f32 %v1558, %v1574
  %1578 = vrot.lane.b32.xlu0 %v1576, 64
  %v1579 = vpop.permute.xlu0 %1578
  %1581 = vst.msk [vmem:[#allocation4] sm:$0xff] %vm416, %v1579
  %1582 = vrot.lane.b32.xlu0 %v1576, 32
  %v1583 = vpop.permute.xlu0 %1582
  %s1585 = scalar_lea.vmem [#allocation3], 40
  %1586 = vst.msk [vmem:[%s1585] sm:$0xff] %vm195, %v1583
  %s1587 = scalar_lea.vmem [#allocation2], 48
  %v1588 = vld [vmem:[%s1587] sm:$0xff]
  %v1589 = vld [vmem:[#allocation4] sm:$0xff]
  %v1590 = vld [vmem:[%s2] sm:$0xff]
  %v1591 = vld [vmem:[%s2 + $0x8] sm:$0xff]
  %v1592 = vld [vmem:[%s2 + $0x10] sm:$0xff]
  %v1593 = vld [vmem:[%s2 + $0x18] sm:$0xff]
  %v1595 = vsel %vm195, %v1589, 0
  %1597 = vmatprep.subr.mxu0 0.0
  %1598 = vmatpush1.msra.mxu0 %v1590
  %1599 = vmatprep.subr.mxu0 0.0
  %1600 = vmatpush1.msra.mxu0 %v1591
  %1601 = vmatprep.subr.mxu0 0.0
  %1602 = vmatpush1.msra.mxu0 %v1592
  %1603 = vmatprep.subr.mxu0 0.0
  %1604 = vmatpush1.msra.mxu0 %v1593
  %1605 = vmatprep.subr.mxu0 0.0
  %1606 = vmatpush1.msra.mxu0 0.0
  %1607 = vmatprep.subr.mxu0 0.0
  %1608 = vmatpush1.msra.mxu0 0.0
  %1609 = vmatprep.subr.mxu0 0.0
  %1610 = vmatpush1.msra.mxu0 0.0
  %1611 = vmatprep.subr.mxu0 0.0
  %1612 = vmatpush1.msra.mxu0 0.0
  %1613 = vmatprep.subr.mxu0 0.0
  %1614 = vmatpush1.msra.mxu0 0.0
  %1615 = vmatprep.subr.mxu0 0.0
  %1616 = vmatpush1.msra.mxu0 0.0
  %1617 = vmatprep.subr.mxu0 0.0
  %1618 = vmatpush1.msra.mxu0 0.0
  %1619 = vmatprep.subr.mxu0 0.0
  %1620 = vmatpush1.msra.mxu0 0.0
  %1621 = vmatprep.subr.mxu0 0.0
  %1622 = vmatpush1.msra.mxu0 0.0
  %1623 = vmatprep.subr.mxu0 0.0
  %1624 = vmatpush1.msra.mxu0 0.0
  %1625 = vmatprep.subr.mxu0 0.0
  %1626 = vmatpush1.msra.mxu0 0.0
  %1627 = vmatprep.subr.mxu0 0.0
  %1628 = vmatpush1.msra.mxu0 0.0
  %1629 = vmatprep.subr.mxu0 0.0
  %1630 = vmatpush1.msra.mxu0 0.0
  %1631 = vmatprep.subr.mxu0 0.0
  %1632 = vmatpush1.msra.mxu0 0.0
  %1633 = vmatprep.subr.mxu0 0.0
  %1634 = vmatpush1.msra.mxu0 0.0
  %1635 = vmatprep.subr.mxu0 0.0
  %1636 = vmatpush1.msra.mxu0 0.0
  %1637 = vmatprep.subr.mxu0 0.0
  %1638 = vmatpush1.msra.mxu0 0.0
  %1639 = vmatprep.subr.mxu0 0.0
  %1640 = vmatpush1.msra.mxu0 0.0
  %1641 = vmatprep.subr.mxu0 0.0
  %1642 = vmatpush1.msra.mxu0 0.0
  %1643 = vmatprep.subr.mxu0 0.0
  %1644 = vmatpush1.msra.mxu0 0.0
  %1645 = vmatprep.subr.mxu0 0.0
  %1646 = vmatpush1.msra.mxu0 0.0
  %1647 = vmatprep.subr.mxu0 0.0
  %1648 = vmatpush1.msra.mxu0 0.0
  %1649 = vmatprep.subr.mxu0 0.0
  %1650 = vmatpush1.msra.mxu0 0.0
  %1651 = vmatprep.subr.mxu0 0.0
  %1652 = vmatpush1.msra.mxu0 0.0
  %1653 = vmatprep.subr.mxu0 0.0
  %1654 = vmatpush1.msra.mxu0 0.0
  %1655 = vmatprep.subr.mxu0 0.0
  %1656 = vmatpush1.msra.mxu0 0.0
  %1657 = vmatprep.subr.mxu0 0.0
  %1658 = vmatpush1.msra.mxu0 0.0
  %1659 = vmatprep.subr.mxu0 0.0
  %1660 = vmatpush1.msra.mxu0 0.0
  %1661 = vmatprep.mubr.f32.mxu0 0.0
  %1662 = vmatmul.mubr.f32.gmra.mrb[0].mxu0 %v1595
  %v1663 = vpop.f32.mrb[0].mxu0
  %v1664 = vadd.f32 0.0, %v1663
  %v1665 = vpop.f32.mrb[0].mxu0
  %1666 = vdwg.mxu0
  %v1667 = vadd.f32 %v1588, %v1664
  %v1668 = vxor.u32 %v1667, 2147483648
  %v1669 = vmul.f32 %v1668, 1.442695
  %v1670 = vpow.pop %v1669
  %v1671 = vadd.f32 %v1670, 1.0
  %v1672 = vrcp.pop %v1671
  %v1673 = vmul.f32 1.0, %v1672
  %v1674 = vtanh.pop %v1667
  %v1675 = vmul.f32 %v1673, %v1452
  %1677 = vrot.lane.b32.xlu0 %v1674, 64
  %v1678 = vpop.permute.xlu0 %1677
  %v1680 = vmul.f32 %v1673, %v1678
  %1682 = vrot.lane.b32.xlu0 %v1680, 32
  %v1683 = vpop.permute.xlu0 %1682
  %v1685 = vadd.f32 %v1675, %v1683
  %v1686 = vtanh.pop %v1685
  %1688 = vrot.lane.b32.xlu0 %v1686, 64
  %v1689 = vpop.permute.xlu0 %1688
  %v1691 = vmul.f32 %v1673, %v1689
  %1693 = vrot.lane.b32.xlu0 %v1691, 32
  %v1694 = vpop.permute.xlu0 %1693
  %1696 = vst.msk [vmem:[#allocation4] sm:$0xff] %vm195, %v1694
  %v1697 = vld [vmem:[#allocation4] sm:$0xff]
  %v1698 = vld [vmem:[%s4] sm:$0xff]
  %v1699 = vld [vmem:[%s4 + $0x8] sm:$0xff]
  %v1700 = vld [vmem:[%s4 + $0x10] sm:$0xff]
  %v1701 = vld [vmem:[%s4 + $0x18] sm:$0xff]
  %v1702 = vld [vmem:[%s4 + $0x20] sm:$0xff]
  %v1703 = vld [vmem:[%s4 + $0x28] sm:$0xff]
  %v1704 = vld [vmem:[%s4 + $0x30] sm:$0xff]
  %v1705 = vld [vmem:[%s4 + $0x38] sm:$0xff]
  %v1706 = vld [vmem:[%s5] sm:$0x1]
  %v1708 = vlaneseq
  %v1709 = vshrl.u32 %v1708, 7
  %v1710 = vsub.s32 0, %v1709
  %v1711 = vrot.slane %v1706, %v1710
  %v1714 = vsel %vm187, %v1697, 0
  %1716 = vmatprep.subr.mxu0 0.0
  %1717 = vmatpush1.msra.mxu0 %v1698
  %1718 = vmatprep.subr.mxu0 0.0
  %1719 = vmatpush1.msra.mxu0 %v1699
  %1720 = vmatprep.subr.mxu0 0.0
  %1721 = vmatpush1.msra.mxu0 %v1700
  %1722 = vmatprep.subr.mxu0 0.0
  %1723 = vmatpush1.msra.mxu0 %v1701
  %1724 = vmatprep.subr.mxu0 0.0
  %1725 = vmatpush1.msra.mxu0 %v1702
  %1726 = vmatprep.subr.mxu0 0.0
  %1727 = vmatpush1.msra.mxu0 %v1703
  %1728 = vmatprep.subr.mxu0 0.0
  %1729 = vmatpush1.msra.mxu0 %v1704
  %1730 = vmatprep.subr.mxu0 0.0
  %1731 = vmatpush1.msra.mxu0 %v1705
  %1732 = vmatprep.subr.mxu0 0.0
  %1733 = vmatpush1.msra.mxu0 0.0
  %1734 = vmatprep.subr.mxu0 0.0
  %1735 = vmatpush1.msra.mxu0 0.0
  %1736 = vmatprep.subr.mxu0 0.0
  %1737 = vmatpush1.msra.mxu0 0.0
  %1738 = vmatprep.subr.mxu0 0.0
  %1739 = vmatpush1.msra.mxu0 0.0
  %1740 = vmatprep.subr.mxu0 0.0
  %1741 = vmatpush1.msra.mxu0 0.0
  %1742 = vmatprep.subr.mxu0 0.0
  %1743 = vmatpush1.msra.mxu0 0.0
  %1744 = vmatprep.subr.mxu0 0.0
  %1745 = vmatpush1.msra.mxu0 0.0
  %1746 = vmatprep.subr.mxu0 0.0
  %1747 = vmatpush1.msra.mxu0 0.0
  %1748 = vmatprep.subr.mxu0 0.0
  %1749 = vmatpush1.msra.mxu0 0.0
  %1750 = vmatprep.subr.mxu0 0.0
  %1751 = vmatpush1.msra.mxu0 0.0
  %1752 = vmatprep.subr.mxu0 0.0
  %1753 = vmatpush1.msra.mxu0 0.0
  %1754 = vmatprep.subr.mxu0 0.0
  %1755 = vmatpush1.msra.mxu0 0.0
  %1756 = vmatprep.subr.mxu0 0.0
  %1757 = vmatpush1.msra.mxu0 0.0
  %1758 = vmatprep.subr.mxu0 0.0
  %1759 = vmatpush1.msra.mxu0 0.0
  %1760 = vmatprep.subr.mxu0 0.0
  %1761 = vmatpush1.msra.mxu0 0.0
  %1762 = vmatprep.subr.mxu0 0.0
  %1763 = vmatpush1.msra.mxu0 0.0
  %1764 = vmatprep.subr.mxu0 0.0
  %1765 = vmatpush1.msra.mxu0 0.0
  %1766 = vmatprep.subr.mxu0 0.0
  %1767 = vmatpush1.msra.mxu0 0.0
  %1768 = vmatprep.subr.mxu0 0.0
  %1769 = vmatpush1.msra.mxu0 0.0
  %1770 = vmatprep.subr.mxu0 0.0
  %1771 = vmatpush1.msra.mxu0 0.0
  %1772 = vmatprep.subr.mxu0 0.0
  %1773 = vmatpush1.msra.mxu0 0.0
  %1774 = vmatprep.subr.mxu0 0.0
  %1775 = vmatpush1.msra.mxu0 0.0
  %1776 = vmatprep.subr.mxu0 0.0
  %1777 = vmatpush1.msra.mxu0 0.0
  %1778 = vmatprep.subr.mxu0 0.0
  %1779 = vmatpush1.msra.mxu0 0.0
  %1780 = vmatprep.mubr.f32.mxu0 0.0
  %1781 = vmatmul.mubr.f32.gmra.mrb[0].mxu0 %v1714
  %v1782 = vpop.f32.mrb[0].mxu0
  %v1783 = vadd.f32 %v1711, %v1782
  %v1784 = vpop.f32.mrb[0].mxu0
  %1785 = vdwg.mxu0
  %v1786 = vxor.u32 %v1783, 2147483648
  %v1787 = vmul.f32 %v1786, 1.442695
  %v1788 = vpow.pop %v1787
  %v1789 = vadd.f32 %v1788, 1.0
  %v1790 = vrcp.pop %v1789
  %v1791 = vmul.f32 1.0, %v1790
  %v1792 = vtanh.pop %v1783
  %v1793 = vmul.f32 %v1791, %v1570
  %1795 = vrot.lane.b32.xlu0 %v1792, 64
  %v1796 = vpop.permute.xlu0 %1795
  %v1798 = vmul.f32 %v1791, %v1796
  %1800 = vrot.lane.b32.xlu0 %v1798, 32
  %v1801 = vpop.permute.xlu0 %1800
  %v1803 = vadd.f32 %v1793, %v1801
  %v1804 = vtanh.pop %v1803
  %1806 = vrot.lane.b32.xlu0 %v1804, 64
  %v1807 = vpop.permute.xlu0 %1806
  %v1809 = vmul.f32 %v1791, %v1807
  %1811 = vrot.lane.b32.xlu0 %v1809, 64
  %v1812 = vpop.permute.xlu0 %1811
  %1814 = vst.msk [vmem:[#allocation4] sm:$0xff] %vm416, %v1812
  %1815 = vrot.lane.b32.xlu0 %v1809, 32
  %v1816 = vpop.permute.xlu0 %1815
  %s1818 = scalar_lea.vmem [#allocation3], 48
  %1819 = vst.msk [vmem:[%s1818] sm:$0xff] %vm195, %v1816
  %s1820 = scalar_lea.vmem [#allocation2], 56
  %v1821 = vld [vmem:[%s1820] sm:$0xff]
  %v1822 = vld [vmem:[#allocation4] sm:$0xff]
  %v1823 = vld [vmem:[%s2] sm:$0xff]
  %v1824 = vld [vmem:[%s2 + $0x8] sm:$0xff]
  %v1825 = vld [vmem:[%s2 + $0x10] sm:$0xff]
  %v1826 = vld [vmem:[%s2 + $0x18] sm:$0xff]
  %v1828 = vsel %vm195, %v1822, 0
  %1830 = vmatprep.subr.mxu0 0.0
  %1831 = vmatpush1.msra.mxu0 %v1823
  %1832 = vmatprep.subr.mxu0 0.0
  %1833 = vmatpush1.msra.mxu0 %v1824
  %1834 = vmatprep.subr.mxu0 0.0
  %1835 = vmatpush1.msra.mxu0 %v1825
  %1836 = vmatprep.subr.mxu0 0.0
  %1837 = vmatpush1.msra.mxu0 %v1826
  %1838 = vmatprep.subr.mxu0 0.0
  %1839 = vmatpush1.msra.mxu0 0.0
  %1840 = vmatprep.subr.mxu0 0.0
  %1841 = vmatpush1.msra.mxu0 0.0
  %1842 = vmatprep.subr.mxu0 0.0
  %1843 = vmatpush1.msra.mxu0 0.0
  %1844 = vmatprep.subr.mxu0 0.0
  %1845 = vmatpush1.msra.mxu0 0.0
  %1846 = vmatprep.subr.mxu0 0.0
  %1847 = vmatpush1.msra.mxu0 0.0
  %1848 = vmatprep.subr.mxu0 0.0
  %1849 = vmatpush1.msra.mxu0 0.0
  %1850 = vmatprep.subr.mxu0 0.0
  %1851 = vmatpush1.msra.mxu0 0.0
  %1852 = vmatprep.subr.mxu0 0.0
  %1853 = vmatpush1.msra.mxu0 0.0
  %1854 = vmatprep.subr.mxu0 0.0
  %1855 = vmatpush1.msra.mxu0 0.0
  %1856 = vmatprep.subr.mxu0 0.0
  %1857 = vmatpush1.msra.mxu0 0.0
  %1858 = vmatprep.subr.mxu0 0.0
  %1859 = vmatpush1.msra.mxu0 0.0
  %1860 = vmatprep.subr.mxu0 0.0
  %1861 = vmatpush1.msra.mxu0 0.0
  %1862 = vmatprep.subr.mxu0 0.0
  %1863 = vmatpush1.msra.mxu0 0.0
  %1864 = vmatprep.subr.mxu0 0.0
  %1865 = vmatpush1.msra.mxu0 0.0
  %1866 = vmatprep.subr.mxu0 0.0
  %1867 = vmatpush1.msra.mxu0 0.0
  %1868 = vmatprep.subr.mxu0 0.0
  %1869 = vmatpush1.msra.mxu0 0.0
  %1870 = vmatprep.subr.mxu0 0.0
  %1871 = vmatpush1.msra.mxu0 0.0
  %1872 = vmatprep.subr.mxu0 0.0
  %1873 = vmatpush1.msra.mxu0 0.0
  %1874 = vmatprep.subr.mxu0 0.0
  %1875 = vmatpush1.msra.mxu0 0.0
  %1876 = vmatprep.subr.mxu0 0.0
  %1877 = vmatpush1.msra.mxu0 0.0
  %1878 = vmatprep.subr.mxu0 0.0
  %1879 = vmatpush1.msra.mxu0 0.0
  %1880 = vmatprep.subr.mxu0 0.0
  %1881 = vmatpush1.msra.mxu0 0.0
  %1882 = vmatprep.subr.mxu0 0.0
  %1883 = vmatpush1.msra.mxu0 0.0
  %1884 = vmatprep.subr.mxu0 0.0
  %1885 = vmatpush1.msra.mxu0 0.0
  %1886 = vmatprep.subr.mxu0 0.0
  %1887 = vmatpush1.msra.mxu0 0.0
  %1888 = vmatprep.subr.mxu0 0.0
  %1889 = vmatpush1.msra.mxu0 0.0
  %1890 = vmatprep.subr.mxu0 0.0
  %1891 = vmatpush1.msra.mxu0 0.0
  %1892 = vmatprep.subr.mxu0 0.0
  %1893 = vmatpush1.msra.mxu0 0.0
  %1894 = vmatprep.mubr.f32.mxu0 0.0
  %1895 = vmatmul.mubr.f32.gmra.mrb[0].mxu0 %v1828
  %v1896 = vpop.f32.mrb[0].mxu0
  %v1897 = vadd.f32 0.0, %v1896
  %v1898 = vpop.f32.mrb[0].mxu0
  %1899 = vdwg.mxu0
  %v1900 = vadd.f32 %v1821, %v1897
  %v1901 = vxor.u32 %v1900, 2147483648
  %v1902 = vmul.f32 %v1901, 1.442695
  %v1903 = vpow.pop %v1902
  %v1904 = vadd.f32 %v1903, 1.0
  %v1905 = vrcp.pop %v1904
  %v1906 = vmul.f32 1.0, %v1905
  %v1907 = vtanh.pop %v1900
  %v1908 = vmul.f32 %v1906, %v1685
  %1910 = vrot.lane.b32.xlu0 %v1907, 64
  %v1911 = vpop.permute.xlu0 %1910
  %v1913 = vmul.f32 %v1906, %v1911
  %1915 = vrot.lane.b32.xlu0 %v1913, 32
  %v1916 = vpop.permute.xlu0 %1915
  %v1918 = vadd.f32 %v1908, %v1916
  %v1919 = vtanh.pop %v1918
  %1921 = vrot.lane.b32.xlu0 %v1919, 64
  %v1922 = vpop.permute.xlu0 %1921
  %v1924 = vmul.f32 %v1906, %v1922
  %1926 = vrot.lane.b32.xlu0 %v1924, 32
  %v1927 = vpop.permute.xlu0 %1926
  %1929 = vst.msk [vmem:[#allocation4] sm:$0xff] %vm195, %v1927
  %v1930 = vld [vmem:[#allocation4] sm:$0xff]
  %v1931 = vld [vmem:[%s4] sm:$0xff]
  %v1932 = vld [vmem:[%s4 + $0x8] sm:$0xff]
  %v1933 = vld [vmem:[%s4 + $0x10] sm:$0xff]
  %v1934 = vld [vmem:[%s4 + $0x18] sm:$0xff]
  %v1935 = vld [vmem:[%s4 + $0x20] sm:$0xff]
  %v1936 = vld [vmem:[%s4 + $0x28] sm:$0xff]
  %v1937 = vld [vmem:[%s4 + $0x30] sm:$0xff]
  %v1938 = vld [vmem:[%s4 + $0x38] sm:$0xff]
  %v1939 = vld [vmem:[%s5] sm:$0x1]
  %v1941 = vlaneseq
  %v1942 = vshrl.u32 %v1941, 7
  %v1943 = vsub.s32 0, %v1942
  %v1944 = vrot.slane %v1939, %v1943
  %v1947 = vsel %vm187, %v1930, 0
  %1949 = vmatprep.subr.mxu0 0.0
  %1950 = vmatpush1.msra.mxu0 %v1931
  %1951 = vmatprep.subr.mxu0 0.0
  %1952 = vmatpush1.msra.mxu0 %v1932
  %1953 = vmatprep.subr.mxu0 0.0
  %1954 = vmatpush1.msra.mxu0 %v1933
  %1955 = vmatprep.subr.mxu0 0.0
  %1956 = vmatpush1.msra.mxu0 %v1934
  %1957 = vmatprep.subr.mxu0 0.0
  %1958 = vmatpush1.msra.mxu0 %v1935
  %1959 = vmatprep.subr.mxu0 0.0
  %1960 = vmatpush1.msra.mxu0 %v1936
  %1961 = vmatprep.subr.mxu0 0.0
  %1962 = vmatpush1.msra.mxu0 %v1937
  %1963 = vmatprep.subr.mxu0 0.0
  %1964 = vmatpush1.msra.mxu0 %v1938
  %1965 = vmatprep.subr.mxu0 0.0
  %1966 = vmatpush1.msra.mxu0 0.0
  %1967 = vmatprep.subr.mxu0 0.0
  %1968 = vmatpush1.msra.mxu0 0.0
  %1969 = vmatprep.subr.mxu0 0.0
  %1970 = vmatpush1.msra.mxu0 0.0
  %1971 = vmatprep.subr.mxu0 0.0
  %1972 = vmatpush1.msra.mxu0 0.0
  %1973 = vmatprep.subr.mxu0 0.0
  %1974 = vmatpush1.msra.mxu0 0.0
  %1975 = vmatprep.subr.mxu0 0.0
  %1976 = vmatpush1.msra.mxu0 0.0
  %1977 = vmatprep.subr.mxu0 0.0
  %1978 = vmatpush1.msra.mxu0 0.0
  %1979 = vmatprep.subr.mxu0 0.0
  %1980 = vmatpush1.msra.mxu0 0.0
  %1981 = vmatprep.subr.mxu0 0.0
  %1982 = vmatpush1.msra.mxu0 0.0
  %1983 = vmatprep.subr.mxu0 0.0
  %1984 = vmatpush1.msra.mxu0 0.0
  %1985 = vmatprep.subr.mxu0 0.0
  %1986 = vmatpush1.msra.mxu0 0.0
  %1987 = vmatprep.subr.mxu0 0.0
  %1988 = vmatpush1.msra.mxu0 0.0
  %1989 = vmatprep.subr.mxu0 0.0
  %1990 = vmatpush1.msra.mxu0 0.0
  %1991 = vmatprep.subr.mxu0 0.0
  %1992 = vmatpush1.msra.mxu0 0.0
  %1993 = vmatprep.subr.mxu0 0.0
  %1994 = vmatpush1.msra.mxu0 0.0
  %1995 = vmatprep.subr.mxu0 0.0
  %1996 = vmatpush1.msra.mxu0 0.0
  %1997 = vmatprep.subr.mxu0 0.0
  %1998 = vmatpush1.msra.mxu0 0.0
  %1999 = vmatprep.subr.mxu0 0.0
  %2000 = vmatpush1.msra.mxu0 0.0
  %2001 = vmatprep.subr.mxu0 0.0
  %2002 = vmatpush1.msra.mxu0 0.0
  %2003 = vmatprep.subr.mxu0 0.0
  %2004 = vmatpush1.msra.mxu0 0.0
  %2005 = vmatprep.subr.mxu0 0.0
  %2006 = vmatpush1.msra.mxu0 0.0
  %2007 = vmatprep.subr.mxu0 0.0
  %2008 = vmatpush1.msra.mxu0 0.0
  %2009 = vmatprep.subr.mxu0 0.0
  %2010 = vmatpush1.msra.mxu0 0.0
  %2011 = vmatprep.subr.mxu0 0.0
  %2012 = vmatpush1.msra.mxu0 0.0
  %2013 = vmatprep.mubr.f32.mxu0 0.0
  %2014 = vmatmul.mubr.f32.gmra.mrb[0].mxu0 %v1947
  %v2015 = vpop.f32.mrb[0].mxu0
  %v2016 = vadd.f32 %v1944, %v2015
  %v2017 = vpop.f32.mrb[0].mxu0
  %2018 = vdwg.mxu0
  %v2019 = vxor.u32 %v2016, 2147483648
  %v2020 = vmul.f32 %v2019, 1.442695
  %v2021 = vpow.pop %v2020
  %v2022 = vadd.f32 %v2021, 1.0
  %v2023 = vrcp.pop %v2022
  %v2024 = vmul.f32 1.0, %v2023
  %v2025 = vtanh.pop %v2016
  %v2026 = vmul.f32 %v2024, %v1803
  %2028 = vrot.lane.b32.xlu0 %v2025, 64
  %v2029 = vpop.permute.xlu0 %2028
  %v2031 = vmul.f32 %v2024, %v2029
  %2033 = vrot.lane.b32.xlu0 %v2031, 32
  %v2034 = vpop.permute.xlu0 %2033
  %v2036 = vadd.f32 %v2026, %v2034
  %v2037 = vtanh.pop %v2036
  %2039 = vrot.lane.b32.xlu0 %v2037, 64
  %v2040 = vpop.permute.xlu0 %2039
  %v2042 = vmul.f32 %v2024, %v2040
  %2044 = vrot.lane.b32.xlu0 %v2042, 64
  %v2045 = vpop.permute.xlu0 %2044
  %2047 = vst.msk [vmem:[#allocation4] sm:$0xff] %vm416, %v2045
  %2048 = vrot.lane.b32.xlu0 %v2042, 32
  %v2049 = vpop.permute.xlu0 %2048
  %s2051 = scalar_lea.vmem [#allocation3], 56
  %2052 = vst.msk [vmem:[%s2051] sm:$0xff] %vm195, %v2049
  %v2053 = vld [vmem:[#allocation3] sm:$0xff]
  %v2054 = vld [vmem:[#allocation3 + $0x8] sm:$0xff]
  %v2055 = vld [vmem:[#allocation3 + $0x10] sm:$0xff]
  %v2056 = vld [vmem:[#allocation3 + $0x18] sm:$0xff]
  %v2057 = vld [vmem:[#allocation3 + $0x20] sm:$0xff]
  %v2058 = vld [vmem:[#allocation3 + $0x28] sm:$0xff]
  %v2059 = vld [vmem:[#allocation3 + $0x30] sm:$0xff]
  %v2060 = vld [vmem:[#allocation3 + $0x38] sm:$0xff]
  %v2061 = vld [vmem:[%s6] sm:$0xff]
  %v2062 = vld [vmem:[%s6 + $0x8] sm:$0xff]
  %v2063 = vld [vmem:[%s6 + $0x10] sm:$0xff]
  %v2064 = vld [vmem:[%s6 + $0x18] sm:$0xff]
  %v2065 = vld [vmem:[%s7] sm:$0x1]
  %v2067 = vlaneseq
  %v2068 = vshrl.u32 %v2067, 7
  %v2069 = vsub.s32 0, %v2068
  %v2070 = vrot.slane %v2065, %v2069
  %v2073 = vsel %vm195, %v2053, 0
  %v2076 = vsel %vm195, %v2054, 0
  %v2079 = vsel %vm195, %v2055, 0
  %v2082 = vsel %vm195, %v2056, 0
  %v2085 = vsel %vm195, %v2057, 0
  %v2088 = vsel %vm195, %v2058, 0
  %v2091 = vsel %vm195, %v2059, 0
  %v2094 = vsel %vm195, %v2060, 0
  %2096 = vmatprep.subr.mxu0 0.0
  %2097 = vmatpush1.msra.mxu0 %v2061
  %2098 = vmatprep.subr.mxu0 0.0
  %2099 = vmatpush1.msra.mxu0 %v2062
  %2100 = vmatprep.subr.mxu0 0.0
  %2101 = vmatpush1.msra.mxu0 %v2063
  %2102 = vmatprep.subr.mxu0 0.0
  %2103 = vmatpush1.msra.mxu0 %v2064
  %2104 = vmatprep.subr.mxu0 0.0
  %2105 = vmatpush1.msra.mxu0 0.0
  %2106 = vmatprep.subr.mxu0 0.0
  %2107 = vmatpush1.msra.mxu0 0.0
  %2108 = vmatprep.subr.mxu0 0.0
  %2109 = vmatpush1.msra.mxu0 0.0
  %2110 = vmatprep.subr.mxu0 0.0
  %2111 = vmatpush1.msra.mxu0 0.0
  %2112 = vmatprep.subr.mxu0 0.0
  %2113 = vmatpush1.msra.mxu0 0.0
  %2114 = vmatprep.subr.mxu0 0.0
  %2115 = vmatpush1.msra.mxu0 0.0
  %2116 = vmatprep.subr.mxu0 0.0
  %2117 = vmatpush1.msra.mxu0 0.0
  %2118 = vmatprep.subr.mxu0 0.0
  %2119 = vmatpush1.msra.mxu0 0.0
  %2120 = vmatprep.subr.mxu0 0.0
  %2121 = vmatpush1.msra.mxu0 0.0
  %2122 = vmatprep.subr.mxu0 0.0
  %2123 = vmatpush1.msra.mxu0 0.0
  %2124 = vmatprep.subr.mxu0 0.0
  %2125 = vmatpush1.msra.mxu0 0.0
  %2126 = vmatprep.subr.mxu0 0.0
  %2127 = vmatpush1.msra.mxu0 0.0
  %2128 = vmatprep.subr.mxu0 0.0
  %2129 = vmatpush1.msra.mxu0 0.0
  %2130 = vmatprep.subr.mxu0 0.0
  %2131 = vmatpush1.msra.mxu0 0.0
  %2132 = vmatprep.subr.mxu0 0.0
  %2133 = vmatpush1.msra.mxu0 0.0
  %2134 = vmatprep.subr.mxu0 0.0
  %2135 = vmatpush1.msra.mxu0 0.0
  %2136 = vmatprep.subr.mxu0 0.0
  %2137 = vmatpush1.msra.mxu0 0.0
  %2138 = vmatprep.subr.mxu0 0.0
  %2139 = vmatpush1.msra.mxu0 0.0
  %2140 = vmatprep.subr.mxu0 0.0
  %2141 = vmatpush1.msra.mxu0 0.0
  %2142 = vmatprep.subr.mxu0 0.0
  %2143 = vmatpush1.msra.mxu0 0.0
  %2144 = vmatprep.subr.mxu0 0.0
  %2145 = vmatpush1.msra.mxu0 0.0
  %2146 = vmatprep.subr.mxu0 0.0
  %2147 = vmatpush1.msra.mxu0 0.0
  %2148 = vmatprep.subr.mxu0 0.0
  %2149 = vmatpush1.msra.mxu0 0.0
  %2150 = vmatprep.subr.mxu0 0.0
  %2151 = vmatpush1.msra.mxu0 0.0
  %2152 = vmatprep.subr.mxu0 0.0
  %2153 = vmatpush1.msra.mxu0 0.0
  %2154 = vmatprep.subr.mxu0 0.0
  %2155 = vmatpush1.msra.mxu0 0.0
  %2156 = vmatprep.subr.mxu0 0.0
  %2157 = vmatpush1.msra.mxu0 0.0
  %2158 = vmatprep.subr.mxu0 0.0
  %2159 = vmatpush1.msra.mxu0 0.0
  %2160 = vmatprep.mubr.f32.mxu0 0.0
  %2161 = vmatmul.mubr.f32.gmra.mrb[0].mxu0 %v2073
  %v2162 = vpop.f32.mrb[0].mxu0
  %v2163 = vadd.f32 %v2070, %v2162
  %v2164 = vpop.f32.mrb[0].mxu0
  %2165 = vmatprep.mubr.f32.mxu0 0.0
  %2166 = vmatmul.mubr.f32.gmra.mrb[0].mxu0 %v2076
  %v2167 = vpop.f32.mrb[0].mxu0
  %v2168 = vadd.f32 %v2070, %v2167
  %v2169 = vpop.f32.mrb[0].mxu0
  %2170 = vmatprep.mubr.f32.mxu0 0.0
  %2171 = vmatmul.mubr.f32.gmra.mrb[0].mxu0 %v2079
  %v2172 = vpop.f32.mrb[0].mxu0
  %v2173 = vadd.f32 %v2070, %v2172
  %v2174 = vpop.f32.mrb[0].mxu0
  %2175 = vmatprep.mubr.f32.mxu0 0.0
  %2176 = vmatmul.mubr.f32.gmra.mrb[0].mxu0 %v2082
  %v2177 = vpop.f32.mrb[0].mxu0
  %v2178 = vadd.f32 %v2070, %v2177
  %v2179 = vpop.f32.mrb[0].mxu0
  %2180 = vmatprep.mubr.f32.mxu0 0.0
  %2181 = vmatmul.mubr.f32.gmra.mrb[0].mxu0 %v2085
  %v2182 = vpop.f32.mrb[0].mxu0
  %v2183 = vadd.f32 %v2070, %v2182
  %v2184 = vpop.f32.mrb[0].mxu0
  %2185 = vmatprep.mubr.f32.mxu0 0.0
  %2186 = vmatmul.mubr.f32.gmra.mrb[0].mxu0 %v2088
  %v2187 = vpop.f32.mrb[0].mxu0
  %v2188 = vadd.f32 %v2070, %v2187
  %v2189 = vpop.f32.mrb[0].mxu0
  %2190 = vmatprep.mubr.f32.mxu0 0.0
  %2191 = vmatmul.mubr.f32.gmra.mrb[0].mxu0 %v2091
  %v2192 = vpop.f32.mrb[0].mxu0
  %v2193 = vadd.f32 %v2070, %v2192
  %v2194 = vpop.f32.mrb[0].mxu0
  %2195 = vmatprep.mubr.f32.mxu0 0.0
  %2196 = vmatmul.mubr.f32.gmra.mrb[0].mxu0 %v2094
  %v2197 = vpop.f32.mrb[0].mxu0
  %v2198 = vadd.f32 %v2070, %v2197
  %v2199 = vpop.f32.mrb[0].mxu0
  %2200 = vdwg.mxu0
  %2201 = vst [vmem:[%s8] sm:$0xff] %v2163
  %2202 = vst [vmem:[%s8 + $0x8] sm:$0xff] %v2168
  %2203 = vst [vmem:[%s8 + $0x10] sm:$0xff] %v2173
  %2204 = vst [vmem:[%s8 + $0x18] sm:$0xff] %v2178
  %2205 = vst [vmem:[%s8 + $0x20] sm:$0xff] %v2183
  %2206 = vst [vmem:[%s8 + $0x28] sm:$0xff] %v2188
  %2207 = vst [vmem:[%s8 + $0x30] sm:$0xff] %v2193
  %2208 = vst [vmem:[%s8 + $0x38] sm:$0xff] %v2198
  // Predicated region
  $region34: #{lstm_forward_pallas.1} parent=0 // pred_check
    _
  $region35: #{lstm_forward_pallas.1} parent=0 // pred_check_branch
    %2210 = sbr.rel (0) target = $region37
  $region36: #{lstm_forward_pallas.1} parent=0 // pred_region
    _
  $region37: #{lstm_forward_pallas.1} parent=0 // pred_fallthru
    _
  // Predicated region
  $region38: #{lstm_forward_pallas.1} parent=0 // pred_check
    _
  $region39: #{lstm_forward_pallas.1} parent=0 // pred_check_branch
    %2212 = sbr.rel (0) target = $region41
  $region40: #{lstm_forward_pallas.1} parent=0 // pred_region
    _
  $region41: #{lstm_forward_pallas.1} parent=0 // pred_fallthru
    _

</llo_original>
